<compile_context>
chip_gen: v7x
topology: tpu7x:2x2x1
jax: 0.10.0
libtpu: 0.0.40
codegen_flags: <defaults>
</compile_context>

<pallas_src>
import math

import jax
import jax.numpy as jnp
from jax.experimental import pallas as pl
from jax.experimental.pallas import tpu as pltpu

BN_EPS = 1e-5


# ----------------------------------------------------------------------------
# Fused ResCell kernel (built per static shape)
# ----------------------------------------------------------------------------
def _make_cell_kernel(N, H, W, C):
    """C = planes of the cell output; the cell input has 2*C channels."""
    NH = N * H

    def kernel(x_ref, wb1_ref, wd_ref, wb2_ref, wb3_ref, wb4_ref,
               pmat_ref, w1_ref, b1_ref, w2_ref, b2_ref,
               rout_ref, logits_ref, pad8, pad4):
        pmat = pmat_ref[...]                                  # (W*C, W*C) f32

        def batchnorm(acc):
            # acc: (N*H, W*C) f32, column layout w*C + c.
            # Training-mode BN per channel (biased variance), gamma=1, beta=0.
            # acc @ pmat averages over w within each channel; the sublane mean
            # then gives the per-channel mean broadcast back to full width.
            mean = jnp.mean(jnp.dot(acc, pmat, preferred_element_type=jnp.float32),
                            axis=0, keepdims=True)            # (1, W*C)
            xc = acc - mean
            var = jnp.mean(jnp.dot(xc * xc, pmat, preferred_element_type=jnp.float32),
                           axis=0, keepdims=True)             # (1, W*C)
            return xc * jax.lax.rsqrt(var + BN_EPS)

        def conv3x3_bn(pad_ref, xin, cin, wb_ref, residual=None):
            # 3x3 pad-1 conv + BN (+residual) + ReLU.
            # xin: (N*H, W*cin); wb_ref: (3, W*cin, W*C) banded bf16 weights
            # (one band per vertical tap dy; W-padding folded into the bands).
            pad_ref[:, 1:1 + H, :] = xin.reshape(N, H, W * cin)
            acc = None
            for dy in range(3):
                band = pad_ref[:, dy:dy + H, :].reshape(NH, W * cin)
                part = jnp.dot(band.astype(jnp.bfloat16), wb_ref[dy],
                               preferred_element_type=jnp.float32)
                acc = part if acc is None else acc + part
            y = batchnorm(acc)
            if residual is not None:
                y = y + residual
            return jnp.maximum(y, 0.0)

        x2 = x_ref[...]                                       # (N*H, W*2C) f32

        # Zero the H-halo scratch once; interiors are fully rewritten per conv.
        pad8[...] = jnp.zeros_like(pad8)
        pad4[...] = jnp.zeros_like(pad4)

        # ---- BasicBlock 1 (2C -> C, 1x1-conv + BN downsample shortcut) ----
        ds = batchnorm(jnp.dot(x2.astype(jnp.bfloat16), wd_ref[...],
                               preferred_element_type=jnp.float32))
        h1 = conv3x3_bn(pad8, x2, 2 * C, wb1_ref)
        y1 = conv3x3_bn(pad4, h1, C, wb2_ref, residual=ds)

        # ---- BasicBlock 2 (C -> C, identity shortcut) ----
        h2 = conv3x3_bn(pad4, y1, C, wb3_ref)
        y2 = conv3x3_bn(pad4, h2, C, wb4_ref, residual=y1)

        # rout in NHWC layout (N, H, W*C); the wrapper converts to NCHW.
        y3 = y2.reshape(N, H, W * C)
        rout_ref[...] = y3

        # ---- MLP head: Linear -> ReLU -> Linear ----
        # fc1 weights were permuted to NHWC order and split per image row, so
        # the 1024-wide contraction is a sum of H lane-dim matmuls.
        acc_fc = None
        for hh in range(H):
            part = jnp.dot(y3[:, hh, :].astype(jnp.bfloat16), w1_ref[hh],
                           preferred_element_type=jnp.float32)
            acc_fc = part if acc_fc is None else acc_fc + part
        hfc = jnp.maximum(acc_fc + b1_ref[...], 0.0)
        logits = jnp.dot(hfc.astype(jnp.bfloat16), w2_ref[...],
                         preferred_element_type=jnp.float32) + b2_ref[...]
        logits_ref[...] = logits

    return kernel


# ----------------------------------------------------------------------------
# One-time weight preparation (banded conv weights, BN averaging matrix, ...)
# ----------------------------------------------------------------------------
def _band3x3(wt, W):
    """(3,3,Cin,Cout) conv weight -> (3, W*Cin, W*Cout) block-banded matrices.

    Band dy maps an activation row-slab (N*H, W*Cin) (input image row h+dy-1)
    to the output slab (N*H, W*Cout). Horizontal zero-padding is realized by
    truncating the band at the image edges:
      WB[dy][j*Cin+ci, w*Cout+co] = wt[dy, dx, ci, co] with j = w + dx - 1.
    """
    bands = []
    for dy in range(3):
        wb = None
        for dx in range(3):
            term = jnp.kron(jnp.eye(W, W, k=1 - dx, dtype=wt.dtype), wt[dy, dx])
            wb = term if wb is None else wb + term
        bands.append(wb)
    return jnp.stack(bands, axis=0).astype(jnp.bfloat16)


def _band1x1(wt, W):
    """(1,1,Cin,Cout) -> block-diagonal (W*Cin, W*Cout)."""
    return jnp.kron(jnp.eye(W, dtype=wt.dtype), wt[0, 0]).astype(jnp.bfloat16)


def prepare_kernel_params(params, c, h, w):
    C, W = c, w
    return {
        "wb1": _band3x3(params["b1_conv1"], W),     # (3, W*2C, W*C)
        "wd":  _band1x1(params["b1_down"], W),      # (W*2C, W*C)
        "wb2": _band3x3(params["b1_conv2"], W),     # (3, W*C, W*C)
        "wb3": _band3x3(params["b2_conv1"], W),
        "wb4": _band3x3(params["b2_conv2"], W),
        # (acc @ pmat)[:, w*C+c] = mean over w' of acc[:, w'*C+c]  (BN stats).
        "pmat": jnp.kron(jnp.ones((W, W), jnp.float32) / W,
                         jnp.eye(C, dtype=jnp.float32)),
        # fc1 rows permuted NCHW-flat -> NHWC-flat and split per image row.
        "w1": params["fc1_w"].reshape(C, h, W, -1).transpose(1, 2, 0, 3)
                             .reshape(h, W * C, -1).astype(jnp.bfloat16),
        "b1": params["fc1_b"],
        "w2": params["fc2_w"].astype(jnp.bfloat16),
        "b2": params["fc2_b"],
    }


# ----------------------------------------------------------------------------
# Parameter init (deterministic, mirrors the module's __init__ distributions)
# ----------------------------------------------------------------------------
def init_params(key, c, h, w, node_num):
    inplanes = 2 * c

    def conv_w(k, cin, cout, ksz):
        n = ksz * ksz * cout
        std = math.sqrt(2.0 / n)
        w_oihw = std * jax.random.normal(k, (cout, cin, ksz, ksz), jnp.float32)
        return jnp.transpose(w_oihw, (2, 3, 1, 0))            # -> [kh, kw, Cin, Cout]

    keys = jax.random.split(key, 9)
    params = {
        "b1_conv1": conv_w(keys[0], inplanes, c, 3),
        "b1_conv2": conv_w(keys[1], c, c, 3),
        "b1_down":  conv_w(keys[2], inplanes, c, 1),
        "b2_conv1": conv_w(keys[3], c, c, 3),
        "b2_conv2": conv_w(keys[4], c, c, 3),
    }

    def linear(kw, kb, fin, fout):
        bound = 1.0 / math.sqrt(fin)
        wt = jax.random.uniform(kw, (fout, fin), jnp.float32, -bound, bound)
        b = jax.random.uniform(kb, (fout,), jnp.float32, -bound, bound)
        return jnp.transpose(wt), b.reshape(1, fout)

    d = c * h * w
    params["fc1_w"], params["fc1_b"] = linear(keys[5], keys[6], d, 128)
    params["fc2_w"], params["fc2_b"] = linear(keys[7], keys[8], 128, node_num)
    return params


# ----------------------------------------------------------------------------
# Forward pass
# ----------------------------------------------------------------------------
@jax.jit
def res_cell_forward(kp, rin_nchw):
    """rin: [N, 2c, H, W] (NCHW). Returns (rout [N,c,H,W], logits [N,node_num])."""
    N, cin2, H, W = rin_nchw.shape
    C = cin2 // 2
    node_num = kp["b2"].shape[1]

    # NCHW -> NHWC, presented as a lane-dense (N*H, W*2C) slab.
    x2 = jnp.transpose(rin_nchw, (0, 2, 3, 1)).astype(jnp.float32)
    x2 = x2.reshape(N * H, W * cin2)

    vmem = pl.BlockSpec(memory_space=pltpu.MemorySpace.VMEM)
    rout_nhwc, logits = pl.pallas_call(
        _make_cell_kernel(N, H, W, C),
        out_shape=(jax.ShapeDtypeStruct((N, H, W * C), jnp.float32),
                   jax.ShapeDtypeStruct((N, node_num), jnp.float32)),
        in_specs=[vmem] * 11,
        out_specs=(vmem, vmem),
        scratch_shapes=[pltpu.VMEM((N, H + 2, W * cin2), jnp.float32),  # H-halo pad, Cin=2C
                        pltpu.VMEM((N, H + 2, W * C), jnp.float32)],    # H-halo pad, Cin=C
    )(x2, kp["wb1"], kp["wd"], kp["wb2"], kp["wb3"], kp["wb4"],
      kp["pmat"], kp["w1"], kp["b1"], kp["w2"], kp["b2"])

    # Tiny XLA transpose at the boundary only (rout must be NCHW like PyTorch).
    rout = jnp.transpose(rout_nhwc.reshape(N, H, W, C), (0, 3, 1, 2))
    return rout, logits

# TODO(synk): BatchNorm running_mean/running_var buffer updates (a training
# side-effect, not part of the returned values) are not materialized.


if __name__ == "__main__":
    N, c, H, W = 2, 4, 16, 16
    node_num = 10
    key = jax.random.PRNGKey(0)
    kparam, kx = jax.random.split(key)

    params = init_params(kparam, c, H, W, node_num)
    kp = prepare_kernel_params(params, c, H, W)        # one-time weight prep
    rin = jax.random.normal(kx, (N, 2 * c, H, W), jnp.float32)

    rout, logits = res_cell_forward(kp, rin)
    jax.block_until_ready((rout, logits))

    assert rout.shape == (N, c, H, W), rout.shape
    assert logits.shape == (N, node_num), logits.shape
    assert bool(jnp.all(jnp.isfinite(rout))) and bool(jnp.all(jnp.isfinite(logits)))
    print("KERNEL_OK")
</pallas_src>

<mosaic_0001>
module attributes {stable_mosaic.version = 11 : i64} {
  func.func @kernel(%arg0: memref<32x128xf32, #tpu.memory_space<vmem>>, %arg1: memref<3x128x64xbf16, #tpu.memory_space<vmem>>, %arg2: memref<128x64xbf16, #tpu.memory_space<vmem>>, %arg3: memref<3x64x64xbf16, #tpu.memory_space<vmem>>, %arg4: memref<3x64x64xbf16, #tpu.memory_space<vmem>>, %arg5: memref<3x64x64xbf16, #tpu.memory_space<vmem>>, %arg6: memref<64x64xf32, #tpu.memory_space<vmem>>, %arg7: memref<16x64x128xbf16, #tpu.memory_space<vmem>>, %arg8: memref<1x128xf32, #tpu.memory_space<vmem>>, %arg9: memref<128x10xbf16, #tpu.memory_space<vmem>>, %arg10: memref<1x10xf32, #tpu.memory_space<vmem>>, %arg11: memref<2x16x64xf32, #tpu.memory_space<vmem>>, %arg12: memref<2x10xf32, #tpu.memory_space<vmem>>, %arg13: memref<2x18x128xf32, #tpu.memory_space<vmem>>, %arg14: memref<2x18x64xf32, #tpu.memory_space<vmem>>) attributes {dimension_semantics = [], scalar_prefetch = 0 : i64, scratch_operands = 2 : i64, tpu.core_type = #tpu.core_type<tc>} {
    %c0 = arith.constant 0 : index
    %c0_0 = arith.constant 0 : index
    %0 = vector.load %arg6[%c0, %c0_0] : memref<64x64xf32, #tpu.memory_space<vmem>>, vector<64x64xf32>
    %c0_1 = arith.constant 0 : index
    %c0_2 = arith.constant 0 : index
    %1 = vector.load %arg0[%c0_1, %c0_2] : memref<32x128xf32, #tpu.memory_space<vmem>>, vector<32x128xf32>
    %cst = arith.constant 0.000000e+00 : f32
    %2 = vector.broadcast %cst : f32 to vector<2x18x128xf32>
    %c0_3 = arith.constant 0 : index
    %c0_4 = arith.constant 0 : index
    %c0_5 = arith.constant 0 : index
    %3 = vector.load %arg13[%c0_3, %c0_4, %c0_5] : memref<2x18x128xf32, #tpu.memory_space<vmem>>, vector<2x18x128xf32>
    tpu.vector_store %arg13[%c0_3, %c0_4, %c0_5], %2 {strides = array<i32>} : memref<2x18x128xf32, #tpu.memory_space<vmem>>, vector<2x18x128xf32>,
    %cst_6 = arith.constant 0.000000e+00 : f32
    %4 = vector.broadcast %cst_6 : f32 to vector<2x18x64xf32>
    %c0_7 = arith.constant 0 : index
    %c0_8 = arith.constant 0 : index
    %c0_9 = arith.constant 0 : index
    %5 = vector.load %arg14[%c0_7, %c0_8, %c0_9] : memref<2x18x64xf32, #tpu.memory_space<vmem>>, vector<2x18x64xf32>
    tpu.vector_store %arg14[%c0_7, %c0_8, %c0_9], %4 {strides = array<i32>} : memref<2x18x64xf32, #tpu.memory_space<vmem>>, vector<2x18x64xf32>,
    %6 = arith.truncf %1 : vector<32x128xf32> to vector<32x128xbf16>
    %c0_10 = arith.constant 0 : index
    %c0_11 = arith.constant 0 : index
    %7 = vector.load %arg2[%c0_10, %c0_11] : memref<128x64xbf16, #tpu.memory_space<vmem>>, vector<128x64xbf16>
    %cst_12 = arith.constant dense<0.000000e+00> : vector<32x64xf32>
    %8 = tpu.matmul %6, %7, %cst_12 {dimension_numbers = #tpu.dot_dimension_numbers<[1], [0], [0], [1], [0, 0, 1, 1], [], []>} : vector<32x128xbf16>, vector<128x64xbf16>, vector<32x64xf32> -> vector<32x64xf32>
    %cst_13 = arith.constant dense<0.000000e+00> : vector<32x64xf32>
    %9 = tpu.matmul %8, %0, %cst_13 {dimension_numbers = #tpu.dot_dimension_numbers<[1], [0], [0], [1], [0, 0, 1, 1], [], []>} : vector<32x64xf32>, vector<64x64xf32>, vector<32x64xf32> -> vector<32x64xf32>
    %cst_14 = arith.constant dense<0.000000e+00> : vector<64xf32>
    %10 = vector.multi_reduction <add>, %9, %cst_14 [0] : vector<32x64xf32> to vector<64xf32>
    %11 = vector.shape_cast %10 : vector<64xf32> to vector<1x64xf32>
    %cst_15 = arith.constant 3.200000e+01 : f32
    %12 = vector.broadcast %cst_15 : f32 to vector<1x64xf32>
    %13 = arith.divf %11, %12 : vector<1x64xf32>
    %14 = vector.broadcast %13 : vector<1x64xf32> to vector<32x64xf32>
    %15 = arith.subf %8, %14 : vector<32x64xf32>
    %16 = arith.mulf %15, %15 : vector<32x64xf32>
    %cst_16 = arith.constant dense<0.000000e+00> : vector<32x64xf32>
    %17 = tpu.matmul %16, %0, %cst_16 {dimension_numbers = #tpu.dot_dimension_numbers<[1], [0], [0], [1], [0, 0, 1, 1], [], []>} : vector<32x64xf32>, vector<64x64xf32>, vector<32x64xf32> -> vector<32x64xf32>
    %cst_17 = arith.constant dense<0.000000e+00> : vector<64xf32>
    %18 = vector.multi_reduction <add>, %17, %cst_17 [0] : vector<32x64xf32> to vector<64xf32>
    %19 = vector.shape_cast %18 : vector<64xf32> to vector<1x64xf32>
    %cst_18 = arith.constant 3.200000e+01 : f32
    %20 = vector.broadcast %cst_18 : f32 to vector<1x64xf32>
    %21 = arith.divf %19, %20 : vector<1x64xf32>
    %cst_19 = arith.constant 9.99999974E-6 : f32
    %22 = vector.broadcast %cst_19 : f32 to vector<1x64xf32>
    %23 = arith.addf %21, %22 : vector<1x64xf32>
    %24 = math.rsqrt %23 : vector<1x64xf32>
    %25 = vector.broadcast %24 : vector<1x64xf32> to vector<32x64xf32>
    %26 = arith.mulf %15, %25 : vector<32x64xf32>
    %27 = vector.shape_cast %1 : vector<32x128xf32> to vector<2x16x128xf32>
    %c0_20 = arith.constant 0 : index
    %c1 = arith.constant 1 : index
    %c0_21 = arith.constant 0 : index
    %28 = vector.load %arg13[%c0_20, %c1, %c0_21] : memref<2x18x128xf32, #tpu.memory_space<vmem>>, vector<2x16x128xf32>
    tpu.vector_store %arg13[%c0_20, %c1, %c0_21], %27 {strides = array<i32>} : memref<2x18x128xf32, #tpu.memory_space<vmem>>, vector<2x16x128xf32>,
    %c0_22 = arith.constant 0 : index
    %c0_23 = arith.constant 0 : index
    %c0_24 = arith.constant 0 : index
    %29 = vector.load %arg13[%c0_22, %c0_23, %c0_24] : memref<2x18x128xf32, #tpu.memory_space<vmem>>, vector<2x16x128xf32>
    %30 = vector.shape_cast %29 : vector<2x16x128xf32> to vector<32x128xf32>
    %31 = arith.truncf %30 : vector<32x128xf32> to vector<32x128xbf16>
    %c0_25 = arith.constant 0 : index
    %c0_26 = arith.constant 0 : index
    %c0_27 = arith.constant 0 : index
    %32 = vector.load %arg1[%c0_25, %c0_26, %c0_27] : memref<3x128x64xbf16, #tpu.memory_space<vmem>>, vector<1x128x64xbf16>
    %33 = vector.shape_cast %32 : vector<1x128x64xbf16> to vector<128x64xbf16>
    %cst_28 = arith.constant dense<0.000000e+00> : vector<32x64xf32>
    %34 = tpu.matmul %31, %33, %cst_28 {dimension_numbers = #tpu.dot_dimension_numbers<[1], [0], [0], [1], [0, 0, 1, 1], [], []>} : vector<32x128xbf16>, vector<128x64xbf16>, vector<32x64xf32> -> vector<32x64xf32>
    %c0_29 = arith.constant 0 : index
    %c1_30 = arith.constant 1 : index
    %c0_31 = arith.constant 0 : index
    %35 = vector.load %arg13[%c0_29, %c1_30, %c0_31] : memref<2x18x128xf32, #tpu.memory_space<vmem>>, vector<2x16x128xf32>
    %36 = vector.shape_cast %35 : vector<2x16x128xf32> to vector<32x128xf32>
    %37 = arith.truncf %36 : vector<32x128xf32> to vector<32x128xbf16>
    %c1_32 = arith.constant 1 : index
    %c0_33 = arith.constant 0 : index
    %c0_34 = arith.constant 0 : index
    %38 = vector.load %arg1[%c1_32, %c0_33, %c0_34] : memref<3x128x64xbf16, #tpu.memory_space<vmem>>, vector<1x128x64xbf16>
    %39 = vector.shape_cast %38 : vector<1x128x64xbf16> to vector<128x64xbf16>
    %cst_35 = arith.constant dense<0.000000e+00> : vector<32x64xf32>
    %40 = tpu.matmul %37, %39, %cst_35 {dimension_numbers = #tpu.dot_dimension_numbers<[1], [0], [0], [1], [0, 0, 1, 1], [], []>} : vector<32x128xbf16>, vector<128x64xbf16>, vector<32x64xf32> -> vector<32x64xf32>
    %41 = arith.addf %34, %40 : vector<32x64xf32>
    %c0_36 = arith.constant 0 : index
    %c2 = arith.constant 2 : index
    %c0_37 = arith.constant 0 : index
    %42 = vector.load %arg13[%c0_36, %c2, %c0_37] : memref<2x18x128xf32, #tpu.memory_space<vmem>>, vector<2x16x128xf32>
    %43 = vector.shape_cast %42 : vector<2x16x128xf32> to vector<32x128xf32>
    %44 = arith.truncf %43 : vector<32x128xf32> to vector<32x128xbf16>
    %c2_38 = arith.constant 2 : index
    %c0_39 = arith.constant 0 : index
    %c0_40 = arith.constant 0 : index
    %45 = vector.load %arg1[%c2_38, %c0_39, %c0_40] : memref<3x128x64xbf16, #tpu.memory_space<vmem>>, vector<1x128x64xbf16>
    %46 = vector.shape_cast %45 : vector<1x128x64xbf16> to vector<128x64xbf16>
    %cst_41 = arith.constant dense<0.000000e+00> : vector<32x64xf32>
    %47 = tpu.matmul %44, %46, %cst_41 {dimension_numbers = #tpu.dot_dimension_numbers<[1], [0], [0], [1], [0, 0, 1, 1], [], []>} : vector<32x128xbf16>, vector<128x64xbf16>, vector<32x64xf32> -> vector<32x64xf32>
    %48 = arith.addf %41, %47 : vector<32x64xf32>
    %cst_42 = arith.constant dense<0.000000e+00> : vector<32x64xf32>
    %49 = tpu.matmul %48, %0, %cst_42 {dimension_numbers = #tpu.dot_dimension_numbers<[1], [0], [0], [1], [0, 0, 1, 1], [], []>} : vector<32x64xf32>, vector<64x64xf32>, vector<32x64xf32> -> vector<32x64xf32>
    %cst_43 = arith.constant dense<0.000000e+00> : vector<64xf32>
    %50 = vector.multi_reduction <add>, %49, %cst_43 [0] : vector<32x64xf32> to vector<64xf32>
    %51 = vector.shape_cast %50 : vector<64xf32> to vector<1x64xf32>
    %cst_44 = arith.constant 3.200000e+01 : f32
    %52 = vector.broadcast %cst_44 : f32 to vector<1x64xf32>
    %53 = arith.divf %51, %52 : vector<1x64xf32>
    %54 = vector.broadcast %53 : vector<1x64xf32> to vector<32x64xf32>
    %55 = arith.subf %48, %54 : vector<32x64xf32>
    %56 = arith.mulf %55, %55 : vector<32x64xf32>
    %cst_45 = arith.constant dense<0.000000e+00> : vector<32x64xf32>
    %57 = tpu.matmul %56, %0, %cst_45 {dimension_numbers = #tpu.dot_dimension_numbers<[1], [0], [0], [1], [0, 0, 1, 1], [], []>} : vector<32x64xf32>, vector<64x64xf32>, vector<32x64xf32> -> vector<32x64xf32>
    %cst_46 = arith.constant dense<0.000000e+00> : vector<64xf32>
    %58 = vector.multi_reduction <add>, %57, %cst_46 [0] : vector<32x64xf32> to vector<64xf32>
    %59 = vector.shape_cast %58 : vector<64xf32> to vector<1x64xf32>
    %cst_47 = arith.constant 3.200000e+01 : f32
    %60 = vector.broadcast %cst_47 : f32 to vector<1x64xf32>
    %61 = arith.divf %59, %60 : vector<1x64xf32>
    %cst_48 = arith.constant 9.99999974E-6 : f32
    %62 = vector.broadcast %cst_48 : f32 to vector<1x64xf32>
    %63 = arith.addf %61, %62 : vector<1x64xf32>
    %64 = math.rsqrt %63 : vector<1x64xf32>
    %65 = vector.broadcast %64 : vector<1x64xf32> to vector<32x64xf32>
    %66 = arith.mulf %55, %65 : vector<32x64xf32>
    %cst_49 = arith.constant 0.000000e+00 : f32
    %67 = vector.broadcast %cst_49 : f32 to vector<32x64xf32>
    %68 = arith.maximumf %66, %67 : vector<32x64xf32>
    %69 = vector.shape_cast %68 : vector<32x64xf32> to vector<2x16x64xf32>
    %c0_50 = arith.constant 0 : index
    %c1_51 = arith.constant 1 : index
    %c0_52 = arith.constant 0 : index
    %70 = vector.load %arg14[%c0_50, %c1_51, %c0_52] : memref<2x18x64xf32, #tpu.memory_space<vmem>>, vector<2x16x64xf32>
    tpu.vector_store %arg14[%c0_50, %c1_51, %c0_52], %69 {strides = array<i32>} : memref<2x18x64xf32, #tpu.memory_space<vmem>>, vector<2x16x64xf32>,
    %c0_53 = arith.constant 0 : index
    %c0_54 = arith.constant 0 : index
    %c0_55 = arith.constant 0 : index
    %71 = vector.load %arg14[%c0_53, %c0_54, %c0_55] : memref<2x18x64xf32, #tpu.memory_space<vmem>>, vector<2x16x64xf32>
    %72 = vector.shape_cast %71 : vector<2x16x64xf32> to vector<32x64xf32>
    %73 = arith.truncf %72 : vector<32x64xf32> to vector<32x64xbf16>
    %c0_56 = arith.constant 0 : index
    %c0_57 = arith.constant 0 : index
    %c0_58 = arith.constant 0 : index
    %74 = vector.load %arg3[%c0_56, %c0_57, %c0_58] : memref<3x64x64xbf16, #tpu.memory_space<vmem>>, vector<1x64x64xbf16>
    %75 = vector.shape_cast %74 : vector<1x64x64xbf16> to vector<64x64xbf16>
    %cst_59 = arith.constant dense<0.000000e+00> : vector<32x64xf32>
    %76 = tpu.matmul %73, %75, %cst_59 {dimension_numbers = #tpu.dot_dimension_numbers<[1], [0], [0], [1], [0, 0, 1, 1], [], []>} : vector<32x64xbf16>, vector<64x64xbf16>, vector<32x64xf32> -> vector<32x64xf32>
    %c0_60 = arith.constant 0 : index
    %c1_61 = arith.constant 1 : index
    %c0_62 = arith.constant 0 : index
    %77 = vector.load %arg14[%c0_60, %c1_61, %c0_62] : memref<2x18x64xf32, #tpu.memory_space<vmem>>, vector<2x16x64xf32>
    %78 = vector.shape_cast %77 : vector<2x16x64xf32> to vector<32x64xf32>
    %79 = arith.truncf %78 : vector<32x64xf32> to vector<32x64xbf16>
    %c1_63 = arith.constant 1 : index
    %c0_64 = arith.constant 0 : index
    %c0_65 = arith.constant 0 : index
    %80 = vector.load %arg3[%c1_63, %c0_64, %c0_65] : memref<3x64x64xbf16, #tpu.memory_space<vmem>>, vector<1x64x64xbf16>
    %81 = vector.shape_cast %80 : vector<1x64x64xbf16> to vector<64x64xbf16>
    %cst_66 = arith.constant dense<0.000000e+00> : vector<32x64xf32>
    %82 = tpu.matmul %79, %81, %cst_66 {dimension_numbers = #tpu.dot_dimension_numbers<[1], [0], [0], [1], [0, 0, 1, 1], [], []>} : vector<32x64xbf16>, vector<64x64xbf16>, vector<32x64xf32> -> vector<32x64xf32>
    %83 = arith.addf %76, %82 : vector<32x64xf32>
    %c0_67 = arith.constant 0 : index
    %c2_68 = arith.constant 2 : index
    %c0_69 = arith.constant 0 : index
    %84 = vector.load %arg14[%c0_67, %c2_68, %c0_69] : memref<2x18x64xf32, #tpu.memory_space<vmem>>, vector<2x16x64xf32>
    %85 = vector.shape_cast %84 : vector<2x16x64xf32> to vector<32x64xf32>
    %86 = arith.truncf %85 : vector<32x64xf32> to vector<32x64xbf16>
    %c2_70 = arith.constant 2 : index
    %c0_71 = arith.constant 0 : index
    %c0_72 = arith.constant 0 : index
    %87 = vector.load %arg3[%c2_70, %c0_71, %c0_72] : memref<3x64x64xbf16, #tpu.memory_space<vmem>>, vector<1x64x64xbf16>
    %88 = vector.shape_cast %87 : vector<1x64x64xbf16> to vector<64x64xbf16>
    %cst_73 = arith.constant dense<0.000000e+00> : vector<32x64xf32>
    %89 = tpu.matmul %86, %88, %cst_73 {dimension_numbers = #tpu.dot_dimension_numbers<[1], [0], [0], [1], [0, 0, 1, 1], [], []>} : vector<32x64xbf16>, vector<64x64xbf16>, vector<32x64xf32> -> vector<32x64xf32>
    %90 = arith.addf %83, %89 : vector<32x64xf32>
    %cst_74 = arith.constant dense<0.000000e+00> : vector<32x64xf32>
    %91 = tpu.matmul %90, %0, %cst_74 {dimension_numbers = #tpu.dot_dimension_numbers<[1], [0], [0], [1], [0, 0, 1, 1], [], []>} : vector<32x64xf32>, vector<64x64xf32>, vector<32x64xf32> -> vector<32x64xf32>
    %cst_75 = arith.constant dense<0.000000e+00> : vector<64xf32>
    %92 = vector.multi_reduction <add>, %91, %cst_75 [0] : vector<32x64xf32> to vector<64xf32>
    %93 = vector.shape_cast %92 : vector<64xf32> to vector<1x64xf32>
    %cst_76 = arith.constant 3.200000e+01 : f32
    %94 = vector.broadcast %cst_76 : f32 to vector<1x64xf32>
    %95 = arith.divf %93, %94 : vector<1x64xf32>
    %96 = vector.broadcast %95 : vector<1x64xf32> to vector<32x64xf32>
    %97 = arith.subf %90, %96 : vector<32x64xf32>
    %98 = arith.mulf %97, %97 : vector<32x64xf32>
    %cst_77 = arith.constant dense<0.000000e+00> : vector<32x64xf32>
    %99 = tpu.matmul %98, %0, %cst_77 {dimension_numbers = #tpu.dot_dimension_numbers<[1], [0], [0], [1], [0, 0, 1, 1], [], []>} : vector<32x64xf32>, vector<64x64xf32>, vector<32x64xf32> -> vector<32x64xf32>
    %cst_78 = arith.constant dense<0.000000e+00> : vector<64xf32>
    %100 = vector.multi_reduction <add>, %99, %cst_78 [0] : vector<32x64xf32> to vector<64xf32>
    %101 = vector.shape_cast %100 : vector<64xf32> to vector<1x64xf32>
    %cst_79 = arith.constant 3.200000e+01 : f32
    %102 = vector.broadcast %cst_79 : f32 to vector<1x64xf32>
    %103 = arith.divf %101, %102 : vector<1x64xf32>
    %cst_80 = arith.constant 9.99999974E-6 : f32
    %104 = vector.broadcast %cst_80 : f32 to vector<1x64xf32>
    %105 = arith.addf %103, %104 : vector<1x64xf32>
    %106 = math.rsqrt %105 : vector<1x64xf32>
    %107 = vector.broadcast %106 : vector<1x64xf32> to vector<32x64xf32>
    %108 = arith.mulf %97, %107 : vector<32x64xf32>
    %109 = arith.addf %108, %26 : vector<32x64xf32>
    %cst_81 = arith.constant 0.000000e+00 : f32
    %110 = vector.broadcast %cst_81 : f32 to vector<32x64xf32>
    %111 = arith.maximumf %109, %110 : vector<32x64xf32>
    %112 = vector.shape_cast %111 : vector<32x64xf32> to vector<2x16x64xf32>
    %c0_82 = arith.constant 0 : index
    %c1_83 = arith.constant 1 : index
    %c0_84 = arith.constant 0 : index
    %113 = vector.load %arg14[%c0_82, %c1_83, %c0_84] : memref<2x18x64xf32, #tpu.memory_space<vmem>>, vector<2x16x64xf32>
    tpu.vector_store %arg14[%c0_82, %c1_83, %c0_84], %112 {strides = array<i32>} : memref<2x18x64xf32, #tpu.memory_space<vmem>>, vector<2x16x64xf32>,
    %c0_85 = arith.constant 0 : index
    %c0_86 = arith.constant 0 : index
    %c0_87 = arith.constant 0 : index
    %114 = vector.load %arg14[%c0_85, %c0_86, %c0_87] : memref<2x18x64xf32, #tpu.memory_space<vmem>>, vector<2x16x64xf32>
    %115 = vector.shape_cast %114 : vector<2x16x64xf32> to vector<32x64xf32>
    %116 = arith.truncf %115 : vector<32x64xf32> to vector<32x64xbf16>
    %c0_88 = arith.constant 0 : index
    %c0_89 = arith.constant 0 : index
    %c0_90 = arith.constant 0 : index
    %117 = vector.load %arg4[%c0_88, %c0_89, %c0_90] : memref<3x64x64xbf16, #tpu.memory_space<vmem>>, vector<1x64x64xbf16>
    %118 = vector.shape_cast %117 : vector<1x64x64xbf16> to vector<64x64xbf16>
    %cst_91 = arith.constant dense<0.000000e+00> : vector<32x64xf32>
    %119 = tpu.matmul %116, %118, %cst_91 {dimension_numbers = #tpu.dot_dimension_numbers<[1], [0], [0], [1], [0, 0, 1, 1], [], []>} : vector<32x64xbf16>, vector<64x64xbf16>, vector<32x64xf32> -> vector<32x64xf32>
    %c0_92 = arith.constant 0 : index
    %c1_93 = arith.constant 1 : index
    %c0_94 = arith.constant 0 : index
    %120 = vector.load %arg14[%c0_92, %c1_93, %c0_94] : memref<2x18x64xf32, #tpu.memory_space<vmem>>, vector<2x16x64xf32>
    %121 = vector.shape_cast %120 : vector<2x16x64xf32> to vector<32x64xf32>
    %122 = arith.truncf %121 : vector<32x64xf32> to vector<32x64xbf16>
    %c1_95 = arith.constant 1 : index
    %c0_96 = arith.constant 0 : index
    %c0_97 = arith.constant 0 : index
    %123 = vector.load %arg4[%c1_95, %c0_96, %c0_97] : memref<3x64x64xbf16, #tpu.memory_space<vmem>>, vector<1x64x64xbf16>
    %124 = vector.shape_cast %123 : vector<1x64x64xbf16> to vector<64x64xbf16>
    %cst_98 = arith.constant dense<0.000000e+00> : vector<32x64xf32>
    %125 = tpu.matmul %122, %124, %cst_98 {dimension_numbers = #tpu.dot_dimension_numbers<[1], [0], [0], [1], [0, 0, 1, 1], [], []>} : vector<32x64xbf16>, vector<64x64xbf16>, vector<32x64xf32> -> vector<32x64xf32>
    %126 = arith.addf %119, %125 : vector<32x64xf32>
    %c0_99 = arith.constant 0 : index
    %c2_100 = arith.constant 2 : index
    %c0_101 = arith.constant 0 : index
    %127 = vector.load %arg14[%c0_99, %c2_100, %c0_101] : memref<2x18x64xf32, #tpu.memory_space<vmem>>, vector<2x16x64xf32>
    %128 = vector.shape_cast %127 : vector<2x16x64xf32> to vector<32x64xf32>
    %129 = arith.truncf %128 : vector<32x64xf32> to vector<32x64xbf16>
    %c2_102 = arith.constant 2 : index
    %c0_103 = arith.constant 0 : index
    %c0_104 = arith.constant 0 : index
    %130 = vector.load %arg4[%c2_102, %c0_103, %c0_104] : memref<3x64x64xbf16, #tpu.memory_space<vmem>>, vector<1x64x64xbf16>
    %131 = vector.shape_cast %130 : vector<1x64x64xbf16> to vector<64x64xbf16>
    %cst_105 = arith.constant dense<0.000000e+00> : vector<32x64xf32>
    %132 = tpu.matmul %129, %131, %cst_105 {dimension_numbers = #tpu.dot_dimension_numbers<[1], [0], [0], [1], [0, 0, 1, 1], [], []>} : vector<32x64xbf16>, vector<64x64xbf16>, vector<32x64xf32> -> vector<32x64xf32>
    %133 = arith.addf %126, %132 : vector<32x64xf32>
    %cst_106 = arith.constant dense<0.000000e+00> : vector<32x64xf32>
    %134 = tpu.matmul %133, %0, %cst_106 {dimension_numbers = #tpu.dot_dimension_numbers<[1], [0], [0], [1], [0, 0, 1, 1], [], []>} : vector<32x64xf32>, vector<64x64xf32>, vector<32x64xf32> -> vector<32x64xf32>
    %cst_107 = arith.constant dense<0.000000e+00> : vector<64xf32>
    %135 = vector.multi_reduction <add>, %134, %cst_107 [0] : vector<32x64xf32> to vector<64xf32>
    %136 = vector.shape_cast %135 : vector<64xf32> to vector<1x64xf32>
    %cst_108 = arith.constant 3.200000e+01 : f32
    %137 = vector.broadcast %cst_108 : f32 to vector<1x64xf32>
    %138 = arith.divf %136, %137 : vector<1x64xf32>
    %139 = vector.broadcast %138 : vector<1x64xf32> to vector<32x64xf32>
    %140 = arith.subf %133, %139 : vector<32x64xf32>
    %141 = arith.mulf %140, %140 : vector<32x64xf32>
    %cst_109 = arith.constant dense<0.000000e+00> : vector<32x64xf32>
    %142 = tpu.matmul %141, %0, %cst_109 {dimension_numbers = #tpu.dot_dimension_numbers<[1], [0], [0], [1], [0, 0, 1, 1], [], []>} : vector<32x64xf32>, vector<64x64xf32>, vector<32x64xf32> -> vector<32x64xf32>
    %cst_110 = arith.constant dense<0.000000e+00> : vector<64xf32>
    %143 = vector.multi_reduction <add>, %142, %cst_110 [0] : vector<32x64xf32> to vector<64xf32>
    %144 = vector.shape_cast %143 : vector<64xf32> to vector<1x64xf32>
    %cst_111 = arith.constant 3.200000e+01 : f32
    %145 = vector.broadcast %cst_111 : f32 to vector<1x64xf32>
    %146 = arith.divf %144, %145 : vector<1x64xf32>
    %cst_112 = arith.constant 9.99999974E-6 : f32
    %147 = vector.broadcast %cst_112 : f32 to vector<1x64xf32>
    %148 = arith.addf %146, %147 : vector<1x64xf32>
    %149 = math.rsqrt %148 : vector<1x64xf32>
    %150 = vector.broadcast %149 : vector<1x64xf32> to vector<32x64xf32>
    %151 = arith.mulf %140, %150 : vector<32x64xf32>
    %cst_113 = arith.constant 0.000000e+00 : f32
    %152 = vector.broadcast %cst_113 : f32 to vector<32x64xf32>
    %153 = arith.maximumf %151, %152 : vector<32x64xf32>
    %154 = vector.shape_cast %153 : vector<32x64xf32> to vector<2x16x64xf32>
    %c0_114 = arith.constant 0 : index
    %c1_115 = arith.constant 1 : index
    %c0_116 = arith.constant 0 : index
    %155 = vector.load %arg14[%c0_114, %c1_115, %c0_116] : memref<2x18x64xf32, #tpu.memory_space<vmem>>, vector<2x16x64xf32>
    tpu.vector_store %arg14[%c0_114, %c1_115, %c0_116], %154 {strides = array<i32>} : memref<2x18x64xf32, #tpu.memory_space<vmem>>, vector<2x16x64xf32>,
    %c0_117 = arith.constant 0 : index
    %c0_118 = arith.constant 0 : index
    %c0_119 = arith.constant 0 : index
    %156 = vector.load %arg14[%c0_117, %c0_118, %c0_119] : memref<2x18x64xf32, #tpu.memory_space<vmem>>, vector<2x16x64xf32>
    %157 = vector.shape_cast %156 : vector<2x16x64xf32> to vector<32x64xf32>
    %158 = arith.truncf %157 : vector<32x64xf32> to vector<32x64xbf16>
    %c0_120 = arith.constant 0 : index
    %c0_121 = arith.constant 0 : index
    %c0_122 = arith.constant 0 : index
    %159 = vector.load %arg5[%c0_120, %c0_121, %c0_122] : memref<3x64x64xbf16, #tpu.memory_space<vmem>>, vector<1x64x64xbf16>
    %160 = vector.shape_cast %159 : vector<1x64x64xbf16> to vector<64x64xbf16>
    %cst_123 = arith.constant dense<0.000000e+00> : vector<32x64xf32>
    %161 = tpu.matmul %158, %160, %cst_123 {dimension_numbers = #tpu.dot_dimension_numbers<[1], [0], [0], [1], [0, 0, 1, 1], [], []>} : vector<32x64xbf16>, vector<64x64xbf16>, vector<32x64xf32> -> vector<32x64xf32>
    %c0_124 = arith.constant 0 : index
    %c1_125 = arith.constant 1 : index
    %c0_126 = arith.constant 0 : index
    %162 = vector.load %arg14[%c0_124, %c1_125, %c0_126] : memref<2x18x64xf32, #tpu.memory_space<vmem>>, vector<2x16x64xf32>
    %163 = vector.shape_cast %162 : vector<2x16x64xf32> to vector<32x64xf32>
    %164 = arith.truncf %163 : vector<32x64xf32> to vector<32x64xbf16>
    %c1_127 = arith.constant 1 : index
    %c0_128 = arith.constant 0 : index
    %c0_129 = arith.constant 0 : index
    %165 = vector.load %arg5[%c1_127, %c0_128, %c0_129] : memref<3x64x64xbf16, #tpu.memory_space<vmem>>, vector<1x64x64xbf16>
    %166 = vector.shape_cast %165 : vector<1x64x64xbf16> to vector<64x64xbf16>
    %cst_130 = arith.constant dense<0.000000e+00> : vector<32x64xf32>
    %167 = tpu.matmul %164, %166, %cst_130 {dimension_numbers = #tpu.dot_dimension_numbers<[1], [0], [0], [1], [0, 0, 1, 1], [], []>} : vector<32x64xbf16>, vector<64x64xbf16>, vector<32x64xf32> -> vector<32x64xf32>
    %168 = arith.addf %161, %167 : vector<32x64xf32>
    %c0_131 = arith.constant 0 : index
    %c2_132 = arith.constant 2 : index
    %c0_133 = arith.constant 0 : index
    %169 = vector.load %arg14[%c0_131, %c2_132, %c0_133] : memref<2x18x64xf32, #tpu.memory_space<vmem>>, vector<2x16x64xf32>
    %170 = vector.shape_cast %169 : vector<2x16x64xf32> to vector<32x64xf32>
    %171 = arith.truncf %170 : vector<32x64xf32> to vector<32x64xbf16>
    %c2_134 = arith.constant 2 : index
    %c0_135 = arith.constant 0 : index
    %c0_136 = arith.constant 0 : index
    %172 = vector.load %arg5[%c2_134, %c0_135, %c0_136] : memref<3x64x64xbf16, #tpu.memory_space<vmem>>, vector<1x64x64xbf16>
    %173 = vector.shape_cast %172 : vector<1x64x64xbf16> to vector<64x64xbf16>
    %cst_137 = arith.constant dense<0.000000e+00> : vector<32x64xf32>
    %174 = tpu.matmul %171, %173, %cst_137 {dimension_numbers = #tpu.dot_dimension_numbers<[1], [0], [0], [1], [0, 0, 1, 1], [], []>} : vector<32x64xbf16>, vector<64x64xbf16>, vector<32x64xf32> -> vector<32x64xf32>
    %175 = arith.addf %168, %174 : vector<32x64xf32>
    %cst_138 = arith.constant dense<0.000000e+00> : vector<32x64xf32>
    %176 = tpu.matmul %175, %0, %cst_138 {dimension_numbers = #tpu.dot_dimension_numbers<[1], [0], [0], [1], [0, 0, 1, 1], [], []>} : vector<32x64xf32>, vector<64x64xf32>, vector<32x64xf32> -> vector<32x64xf32>
    %cst_139 = arith.constant dense<0.000000e+00> : vector<64xf32>
    %177 = vector.multi_reduction <add>, %176, %cst_139 [0] : vector<32x64xf32> to vector<64xf32>
    %178 = vector.shape_cast %177 : vector<64xf32> to vector<1x64xf32>
    %cst_140 = arith.constant 3.200000e+01 : f32
    %179 = vector.broadcast %cst_140 : f32 to vector<1x64xf32>
    %180 = arith.divf %178, %179 : vector<1x64xf32>
    %181 = vector.broadcast %180 : vector<1x64xf32> to vector<32x64xf32>
    %182 = arith.subf %175, %181 : vector<32x64xf32>
    %183 = arith.mulf %182, %182 : vector<32x64xf32>
    %cst_141 = arith.constant dense<0.000000e+00> : vector<32x64xf32>
    %184 = tpu.matmul %183, %0, %cst_141 {dimension_numbers = #tpu.dot_dimension_numbers<[1], [0], [0], [1], [0, 0, 1, 1], [], []>} : vector<32x64xf32>, vector<64x64xf32>, vector<32x64xf32> -> vector<32x64xf32>
    %cst_142 = arith.constant dense<0.000000e+00> : vector<64xf32>
    %185 = vector.multi_reduction <add>, %184, %cst_142 [0] : vector<32x64xf32> to vector<64xf32>
    %186 = vector.shape_cast %185 : vector<64xf32> to vector<1x64xf32>
    %cst_143 = arith.constant 3.200000e+01 : f32
    %187 = vector.broadcast %cst_143 : f32 to vector<1x64xf32>
    %188 = arith.divf %186, %187 : vector<1x64xf32>
    %cst_144 = arith.constant 9.99999974E-6 : f32
    %189 = vector.broadcast %cst_144 : f32 to vector<1x64xf32>
    %190 = arith.addf %188, %189 : vector<1x64xf32>
    %191 = math.rsqrt %190 : vector<1x64xf32>
    %192 = vector.broadcast %191 : vector<1x64xf32> to vector<32x64xf32>
    %193 = arith.mulf %182, %192 : vector<32x64xf32>
    %194 = arith.addf %193, %111 : vector<32x64xf32>
    %cst_145 = arith.constant 0.000000e+00 : f32
    %195 = vector.broadcast %cst_145 : f32 to vector<32x64xf32>
    %196 = arith.maximumf %194, %195 : vector<32x64xf32>
    %197 = vector.shape_cast %196 : vector<32x64xf32> to vector<2x16x64xf32>
    %c0_146 = arith.constant 0 : index
    %c0_147 = arith.constant 0 : index
    %c0_148 = arith.constant 0 : index
    %198 = vector.load %arg11[%c0_146, %c0_147, %c0_148] : memref<2x16x64xf32, #tpu.memory_space<vmem>>, vector<2x16x64xf32>
    tpu.vector_store %arg11[%c0_146, %c0_147, %c0_148], %197 {strides = array<i32>} : memref<2x16x64xf32, #tpu.memory_space<vmem>>, vector<2x16x64xf32>,
    %199 = vector.extract_strided_slice %197 {offsets = [0, 0, 0], sizes = [2, 1, 64], strides = [1, 1, 1]} : vector<2x16x64xf32> to vector<2x1x64xf32>
    %200 = vector.shape_cast %199 : vector<2x1x64xf32> to vector<2x64xf32>
    %201 = arith.truncf %200 : vector<2x64xf32> to vector<2x64xbf16>
    %c0_149 = arith.constant 0 : index
    %c0_150 = arith.constant 0 : index
    %c0_151 = arith.constant 0 : index
    %202 = vector.load %arg7[%c0_149, %c0_150, %c0_151] : memref<16x64x128xbf16, #tpu.memory_space<vmem>>, vector<1x64x128xbf16>
    %203 = vector.shape_cast %202 : vector<1x64x128xbf16> to vector<64x128xbf16>
    %cst_152 = arith.constant dense<0.000000e+00> : vector<2x128xf32>
    %204 = tpu.matmul %201, %203, %cst_152 {dimension_numbers = #tpu.dot_dimension_numbers<[1], [0], [0], [1], [0, 0, 1, 1], [], []>} : vector<2x64xbf16>, vector<64x128xbf16>, vector<2x128xf32> -> vector<2x128xf32>
    %205 = vector.extract_strided_slice %197 {offsets = [0, 1, 0], sizes = [2, 1, 64], strides = [1, 1, 1]} : vector<2x16x64xf32> to vector<2x1x64xf32>
    %206 = vector.shape_cast %205 : vector<2x1x64xf32> to vector<2x64xf32>
    %207 = arith.truncf %206 : vector<2x64xf32> to vector<2x64xbf16>
    %c1_153 = arith.constant 1 : index
    %c0_154 = arith.constant 0 : index
    %c0_155 = arith.constant 0 : index
    %208 = vector.load %arg7[%c1_153, %c0_154, %c0_155] : memref<16x64x128xbf16, #tpu.memory_space<vmem>>, vector<1x64x128xbf16>
    %209 = vector.shape_cast %208 : vector<1x64x128xbf16> to vector<64x128xbf16>
    %cst_156 = arith.constant dense<0.000000e+00> : vector<2x128xf32>
    %210 = tpu.matmul %207, %209, %cst_156 {dimension_numbers = #tpu.dot_dimension_numbers<[1], [0], [0], [1], [0, 0, 1, 1], [], []>} : vector<2x64xbf16>, vector<64x128xbf16>, vector<2x128xf32> -> vector<2x128xf32>
    %211 = arith.addf %204, %210 : vector<2x128xf32>
    %212 = vector.extract_strided_slice %197 {offsets = [0, 2, 0], sizes = [2, 1, 64], strides = [1, 1, 1]} : vector<2x16x64xf32> to vector<2x1x64xf32>
    %213 = vector.shape_cast %212 : vector<2x1x64xf32> to vector<2x64xf32>
    %214 = arith.truncf %213 : vector<2x64xf32> to vector<2x64xbf16>
    %c2_157 = arith.constant 2 : index
    %c0_158 = arith.constant 0 : index
    %c0_159 = arith.constant 0 : index
    %215 = vector.load %arg7[%c2_157, %c0_158, %c0_159] : memref<16x64x128xbf16, #tpu.memory_space<vmem>>, vector<1x64x128xbf16>
    %216 = vector.shape_cast %215 : vector<1x64x128xbf16> to vector<64x128xbf16>
    %cst_160 = arith.constant dense<0.000000e+00> : vector<2x128xf32>
    %217 = tpu.matmul %214, %216, %cst_160 {dimension_numbers = #tpu.dot_dimension_numbers<[1], [0], [0], [1], [0, 0, 1, 1], [], []>} : vector<2x64xbf16>, vector<64x128xbf16>, vector<2x128xf32> -> vector<2x128xf32>
    %218 = arith.addf %211, %217 : vector<2x128xf32>
    %219 = vector.extract_strided_slice %197 {offsets = [0, 3, 0], sizes = [2, 1, 64], strides = [1, 1, 1]} : vector<2x16x64xf32> to vector<2x1x64xf32>
    %220 = vector.shape_cast %219 : vector<2x1x64xf32> to vector<2x64xf32>
    %221 = arith.truncf %220 : vector<2x64xf32> to vector<2x64xbf16>
    %c3 = arith.constant 3 : index
    %c0_161 = arith.constant 0 : index
    %c0_162 = arith.constant 0 : index
    %222 = vector.load %arg7[%c3, %c0_161, %c0_162] : memref<16x64x128xbf16, #tpu.memory_space<vmem>>, vector<1x64x128xbf16>
    %223 = vector.shape_cast %222 : vector<1x64x128xbf16> to vector<64x128xbf16>
    %cst_163 = arith.constant dense<0.000000e+00> : vector<2x128xf32>
    %224 = tpu.matmul %221, %223, %cst_163 {dimension_numbers = #tpu.dot_dimension_numbers<[1], [0], [0], [1], [0, 0, 1, 1], [], []>} : vector<2x64xbf16>, vector<64x128xbf16>, vector<2x128xf32> -> vector<2x128xf32>
    %225 = arith.addf %218, %224 : vector<2x128xf32>
    %226 = vector.extract_strided_slice %197 {offsets = [0, 4, 0], sizes = [2, 1, 64], strides = [1, 1, 1]} : vector<2x16x64xf32> to vector<2x1x64xf32>
    %227 = vector.shape_cast %226 : vector<2x1x64xf32> to vector<2x64xf32>
    %228 = arith.truncf %227 : vector<2x64xf32> to vector<2x64xbf16>
    %c4 = arith.constant 4 : index
    %c0_164 = arith.constant 0 : index
    %c0_165 = arith.constant 0 : index
    %229 = vector.load %arg7[%c4, %c0_164, %c0_165] : memref<16x64x128xbf16, #tpu.memory_space<vmem>>, vector<1x64x128xbf16>
    %230 = vector.shape_cast %229 : vector<1x64x128xbf16> to vector<64x128xbf16>
    %cst_166 = arith.constant dense<0.000000e+00> : vector<2x128xf32>
    %231 = tpu.matmul %228, %230, %cst_166 {dimension_numbers = #tpu.dot_dimension_numbers<[1], [0], [0], [1], [0, 0, 1, 1], [], []>} : vector<2x64xbf16>, vector<64x128xbf16>, vector<2x128xf32> -> vector<2x128xf32>
    %232 = arith.addf %225, %231 : vector<2x128xf32>
    %233 = vector.extract_strided_slice %197 {offsets = [0, 5, 0], sizes = [2, 1, 64], strides = [1, 1, 1]} : vector<2x16x64xf32> to vector<2x1x64xf32>
    %234 = vector.shape_cast %233 : vector<2x1x64xf32> to vector<2x64xf32>
    %235 = arith.truncf %234 : vector<2x64xf32> to vector<2x64xbf16>
    %c5 = arith.constant 5 : index
    %c0_167 = arith.constant 0 : index
    %c0_168 = arith.constant 0 : index
    %236 = vector.load %arg7[%c5, %c0_167, %c0_168] : memref<16x64x128xbf16, #tpu.memory_space<vmem>>, vector<1x64x128xbf16>
    %237 = vector.shape_cast %236 : vector<1x64x128xbf16> to vector<64x128xbf16>
    %cst_169 = arith.constant dense<0.000000e+00> : vector<2x128xf32>
    %238 = tpu.matmul %235, %237, %cst_169 {dimension_numbers = #tpu.dot_dimension_numbers<[1], [0], [0], [1], [0, 0, 1, 1], [], []>} : vector<2x64xbf16>, vector<64x128xbf16>, vector<2x128xf32> -> vector<2x128xf32>
    %239 = arith.addf %232, %238 : vector<2x128xf32>
    %240 = vector.extract_strided_slice %197 {offsets = [0, 6, 0], sizes = [2, 1, 64], strides = [1, 1, 1]} : vector<2x16x64xf32> to vector<2x1x64xf32>
    %241 = vector.shape_cast %240 : vector<2x1x64xf32> to vector<2x64xf32>
    %242 = arith.truncf %241 : vector<2x64xf32> to vector<2x64xbf16>
    %c6 = arith.constant 6 : index
    %c0_170 = arith.constant 0 : index
    %c0_171 = arith.constant 0 : index
    %243 = vector.load %arg7[%c6, %c0_170, %c0_171] : memref<16x64x128xbf16, #tpu.memory_space<vmem>>, vector<1x64x128xbf16>
    %244 = vector.shape_cast %243 : vector<1x64x128xbf16> to vector<64x128xbf16>
    %cst_172 = arith.constant dense<0.000000e+00> : vector<2x128xf32>
    %245 = tpu.matmul %242, %244, %cst_172 {dimension_numbers = #tpu.dot_dimension_numbers<[1], [0], [0], [1], [0, 0, 1, 1], [], []>} : vector<2x64xbf16>, vector<64x128xbf16>, vector<2x128xf32> -> vector<2x128xf32>
    %246 = arith.addf %239, %245 : vector<2x128xf32>
    %247 = vector.extract_strided_slice %197 {offsets = [0, 7, 0], sizes = [2, 1, 64], strides = [1, 1, 1]} : vector<2x16x64xf32> to vector<2x1x64xf32>
    %248 = vector.shape_cast %247 : vector<2x1x64xf32> to vector<2x64xf32>
    %249 = arith.truncf %248 : vector<2x64xf32> to vector<2x64xbf16>
    %c7 = arith.constant 7 : index
    %c0_173 = arith.constant 0 : index
    %c0_174 = arith.constant 0 : index
    %250 = vector.load %arg7[%c7, %c0_173, %c0_174] : memref<16x64x128xbf16, #tpu.memory_space<vmem>>, vector<1x64x128xbf16>
    %251 = vector.shape_cast %250 : vector<1x64x128xbf16> to vector<64x128xbf16>
    %cst_175 = arith.constant dense<0.000000e+00> : vector<2x128xf32>
    %252 = tpu.matmul %249, %251, %cst_175 {dimension_numbers = #tpu.dot_dimension_numbers<[1], [0], [0], [1], [0, 0, 1, 1], [], []>} : vector<2x64xbf16>, vector<64x128xbf16>, vector<2x128xf32> -> vector<2x128xf32>
    %253 = arith.addf %246, %252 : vector<2x128xf32>
    %254 = vector.extract_strided_slice %197 {offsets = [0, 8, 0], sizes = [2, 1, 64], strides = [1, 1, 1]} : vector<2x16x64xf32> to vector<2x1x64xf32>
    %255 = vector.shape_cast %254 : vector<2x1x64xf32> to vector<2x64xf32>
    %256 = arith.truncf %255 : vector<2x64xf32> to vector<2x64xbf16>
    %c8 = arith.constant 8 : index
    %c0_176 = arith.constant 0 : index
    %c0_177 = arith.constant 0 : index
    %257 = vector.load %arg7[%c8, %c0_176, %c0_177] : memref<16x64x128xbf16, #tpu.memory_space<vmem>>, vector<1x64x128xbf16>
    %258 = vector.shape_cast %257 : vector<1x64x128xbf16> to vector<64x128xbf16>
    %cst_178 = arith.constant dense<0.000000e+00> : vector<2x128xf32>
    %259 = tpu.matmul %256, %258, %cst_178 {dimension_numbers = #tpu.dot_dimension_numbers<[1], [0], [0], [1], [0, 0, 1, 1], [], []>} : vector<2x64xbf16>, vector<64x128xbf16>, vector<2x128xf32> -> vector<2x128xf32>
    %260 = arith.addf %253, %259 : vector<2x128xf32>
    %261 = vector.extract_strided_slice %197 {offsets = [0, 9, 0], sizes = [2, 1, 64], strides = [1, 1, 1]} : vector<2x16x64xf32> to vector<2x1x64xf32>
    %262 = vector.shape_cast %261 : vector<2x1x64xf32> to vector<2x64xf32>
    %263 = arith.truncf %262 : vector<2x64xf32> to vector<2x64xbf16>
    %c9 = arith.constant 9 : index
    %c0_179 = arith.constant 0 : index
    %c0_180 = arith.constant 0 : index
    %264 = vector.load %arg7[%c9, %c0_179, %c0_180] : memref<16x64x128xbf16, #tpu.memory_space<vmem>>, vector<1x64x128xbf16>
    %265 = vector.shape_cast %264 : vector<1x64x128xbf16> to vector<64x128xbf16>
    %cst_181 = arith.constant dense<0.000000e+00> : vector<2x128xf32>
    %266 = tpu.matmul %263, %265, %cst_181 {dimension_numbers = #tpu.dot_dimension_numbers<[1], [0], [0], [1], [0, 0, 1, 1], [], []>} : vector<2x64xbf16>, vector<64x128xbf16>, vector<2x128xf32> -> vector<2x128xf32>
    %267 = arith.addf %260, %266 : vector<2x128xf32>
    %268 = vector.extract_strided_slice %197 {offsets = [0, 10, 0], sizes = [2, 1, 64], strides = [1, 1, 1]} : vector<2x16x64xf32> to vector<2x1x64xf32>
    %269 = vector.shape_cast %268 : vector<2x1x64xf32> to vector<2x64xf32>
    %270 = arith.truncf %269 : vector<2x64xf32> to vector<2x64xbf16>
    %c10 = arith.constant 10 : index
    %c0_182 = arith.constant 0 : index
    %c0_183 = arith.constant 0 : index
    %271 = vector.load %arg7[%c10, %c0_182, %c0_183] : memref<16x64x128xbf16, #tpu.memory_space<vmem>>, vector<1x64x128xbf16>
    %272 = vector.shape_cast %271 : vector<1x64x128xbf16> to vector<64x128xbf16>
    %cst_184 = arith.constant dense<0.000000e+00> : vector<2x128xf32>
    %273 = tpu.matmul %270, %272, %cst_184 {dimension_numbers = #tpu.dot_dimension_numbers<[1], [0], [0], [1], [0, 0, 1, 1], [], []>} : vector<2x64xbf16>, vector<64x128xbf16>, vector<2x128xf32> -> vector<2x128xf32>
    %274 = arith.addf %267, %273 : vector<2x128xf32>
    %275 = vector.extract_strided_slice %197 {offsets = [0, 11, 0], sizes = [2, 1, 64], strides = [1, 1, 1]} : vector<2x16x64xf32> to vector<2x1x64xf32>
    %276 = vector.shape_cast %275 : vector<2x1x64xf32> to vector<2x64xf32>
    %277 = arith.truncf %276 : vector<2x64xf32> to vector<2x64xbf16>
    %c11 = arith.constant 11 : index
    %c0_185 = arith.constant 0 : index
    %c0_186 = arith.constant 0 : index
    %278 = vector.load %arg7[%c11, %c0_185, %c0_186] : memref<16x64x128xbf16, #tpu.memory_space<vmem>>, vector<1x64x128xbf16>
    %279 = vector.shape_cast %278 : vector<1x64x128xbf16> to vector<64x128xbf16>
    %cst_187 = arith.constant dense<0.000000e+00> : vector<2x128xf32>
    %280 = tpu.matmul %277, %279, %cst_187 {dimension_numbers = #tpu.dot_dimension_numbers<[1], [0], [0], [1], [0, 0, 1, 1], [], []>} : vector<2x64xbf16>, vector<64x128xbf16>, vector<2x128xf32> -> vector<2x128xf32>
    %281 = arith.addf %274, %280 : vector<2x128xf32>
    %282 = vector.extract_strided_slice %197 {offsets = [0, 12, 0], sizes = [2, 1, 64], strides = [1, 1, 1]} : vector<2x16x64xf32> to vector<2x1x64xf32>
    %283 = vector.shape_cast %282 : vector<2x1x64xf32> to vector<2x64xf32>
    %284 = arith.truncf %283 : vector<2x64xf32> to vector<2x64xbf16>
    %c12 = arith.constant 12 : index
    %c0_188 = arith.constant 0 : index
    %c0_189 = arith.constant 0 : index
    %285 = vector.load %arg7[%c12, %c0_188, %c0_189] : memref<16x64x128xbf16, #tpu.memory_space<vmem>>, vector<1x64x128xbf16>
    %286 = vector.shape_cast %285 : vector<1x64x128xbf16> to vector<64x128xbf16>
    %cst_190 = arith.constant dense<0.000000e+00> : vector<2x128xf32>
    %287 = tpu.matmul %284, %286, %cst_190 {dimension_numbers = #tpu.dot_dimension_numbers<[1], [0], [0], [1], [0, 0, 1, 1], [], []>} : vector<2x64xbf16>, vector<64x128xbf16>, vector<2x128xf32> -> vector<2x128xf32>
    %288 = arith.addf %281, %287 : vector<2x128xf32>
    %289 = vector.extract_strided_slice %197 {offsets = [0, 13, 0], sizes = [2, 1, 64], strides = [1, 1, 1]} : vector<2x16x64xf32> to vector<2x1x64xf32>
    %290 = vector.shape_cast %289 : vector<2x1x64xf32> to vector<2x64xf32>
    %291 = arith.truncf %290 : vector<2x64xf32> to vector<2x64xbf16>
    %c13 = arith.constant 13 : index
    %c0_191 = arith.constant 0 : index
    %c0_192 = arith.constant 0 : index
    %292 = vector.load %arg7[%c13, %c0_191, %c0_192] : memref<16x64x128xbf16, #tpu.memory_space<vmem>>, vector<1x64x128xbf16>
    %293 = vector.shape_cast %292 : vector<1x64x128xbf16> to vector<64x128xbf16>
    %cst_193 = arith.constant dense<0.000000e+00> : vector<2x128xf32>
    %294 = tpu.matmul %291, %293, %cst_193 {dimension_numbers = #tpu.dot_dimension_numbers<[1], [0], [0], [1], [0, 0, 1, 1], [], []>} : vector<2x64xbf16>, vector<64x128xbf16>, vector<2x128xf32> -> vector<2x128xf32>
    %295 = arith.addf %288, %294 : vector<2x128xf32>
    %296 = vector.extract_strided_slice %197 {offsets = [0, 14, 0], sizes = [2, 1, 64], strides = [1, 1, 1]} : vector<2x16x64xf32> to vector<2x1x64xf32>
    %297 = vector.shape_cast %296 : vector<2x1x64xf32> to vector<2x64xf32>
    %298 = arith.truncf %297 : vector<2x64xf32> to vector<2x64xbf16>
    %c14 = arith.constant 14 : index
    %c0_194 = arith.constant 0 : index
    %c0_195 = arith.constant 0 : index
    %299 = vector.load %arg7[%c14, %c0_194, %c0_195] : memref<16x64x128xbf16, #tpu.memory_space<vmem>>, vector<1x64x128xbf16>
    %300 = vector.shape_cast %299 : vector<1x64x128xbf16> to vector<64x128xbf16>
    %cst_196 = arith.constant dense<0.000000e+00> : vector<2x128xf32>
    %301 = tpu.matmul %298, %300, %cst_196 {dimension_numbers = #tpu.dot_dimension_numbers<[1], [0], [0], [1], [0, 0, 1, 1], [], []>} : vector<2x64xbf16>, vector<64x128xbf16>, vector<2x128xf32> -> vector<2x128xf32>
    %302 = arith.addf %295, %301 : vector<2x128xf32>
    %303 = vector.extract_strided_slice %197 {offsets = [0, 15, 0], sizes = [2, 1, 64], strides = [1, 1, 1]} : vector<2x16x64xf32> to vector<2x1x64xf32>
    %304 = vector.shape_cast %303 : vector<2x1x64xf32> to vector<2x64xf32>
    %305 = arith.truncf %304 : vector<2x64xf32> to vector<2x64xbf16>
    %c15 = arith.constant 15 : index
    %c0_197 = arith.constant 0 : index
    %c0_198 = arith.constant 0 : index
    %306 = vector.load %arg7[%c15, %c0_197, %c0_198] : memref<16x64x128xbf16, #tpu.memory_space<vmem>>, vector<1x64x128xbf16>
    %307 = vector.shape_cast %306 : vector<1x64x128xbf16> to vector<64x128xbf16>
    %cst_199 = arith.constant dense<0.000000e+00> : vector<2x128xf32>
    %308 = tpu.matmul %305, %307, %cst_199 {dimension_numbers = #tpu.dot_dimension_numbers<[1], [0], [0], [1], [0, 0, 1, 1], [], []>} : vector<2x64xbf16>, vector<64x128xbf16>, vector<2x128xf32> -> vector<2x128xf32>
    %309 = arith.addf %302, %308 : vector<2x128xf32>
    %c0_200 = arith.constant 0 : index
    %c0_201 = arith.constant 0 : index
    %310 = vector.load %arg8[%c0_200, %c0_201] : memref<1x128xf32, #tpu.memory_space<vmem>>, vector<1x128xf32>
    %311 = vector.broadcast %310 : vector<1x128xf32> to vector<2x128xf32>
    %312 = arith.addf %309, %311 : vector<2x128xf32>
    %cst_202 = arith.constant 0.000000e+00 : f32
    %313 = vector.broadcast %cst_202 : f32 to vector<2x128xf32>
    %314 = arith.maximumf %312, %313 : vector<2x128xf32>
    %315 = arith.truncf %314 : vector<2x128xf32> to vector<2x128xbf16>
    %c0_203 = arith.constant 0 : index
    %c0_204 = arith.constant 0 : index
    %316 = vector.load %arg9[%c0_203, %c0_204] : memref<128x10xbf16, #tpu.memory_space<vmem>>, vector<128x10xbf16>
    %cst_205 = arith.constant dense<0.000000e+00> : vector<2x10xf32>
    %317 = tpu.matmul %315, %316, %cst_205 {dimension_numbers = #tpu.dot_dimension_numbers<[1], [0], [0], [1], [0, 0, 1, 1], [], []>} : vector<2x128xbf16>, vector<128x10xbf16>, vector<2x10xf32> -> vector<2x10xf32>
    %c0_206 = arith.constant 0 : index
    %c0_207 = arith.constant 0 : index
    %318 = vector.load %arg10[%c0_206, %c0_207] : memref<1x10xf32, #tpu.memory_space<vmem>>, vector<1x10xf32>
    %319 = vector.broadcast %318 : vector<1x10xf32> to vector<2x10xf32>
    %320 = arith.addf %317, %319 : vector<2x10xf32>
    %c0_208 = arith.constant 0 : index
    %c0_209 = arith.constant 0 : index
    %321 = vector.load %arg12[%c0_208, %c0_209] : memref<2x10xf32, #tpu.memory_space<vmem>>, vector<2x10xf32>
    tpu.vector_store %arg12[%c0_208, %c0_209], %320 {strides = array<i32>} : memref<2x10xf32, #tpu.memory_space<vmem>>, vector<2x10xf32>,
    return
  }
}

</mosaic_0001>

<llo_original>
// kernel: res_cell_forward.1
$region0: #{res_cell_forward.1}
  #allocation0 [shape = 'u32[]', space=smem, size = 0x4, offset = 0x4, fixed_abs, tag = 'smem constant byte address 0x4 - core index']
  #allocation1 [shape = 'u32[144,128]{1,0:T(1,128)}', space=vmem, size = 0x12000, scoped, tag = 'internal scratch']
  #allocation2 [shape = 'f32[2,18,128]{2,1,0:T(8,128)}', space=vmem, size = 0x6000, scoped, tag = 'scratch operand']
  #allocation3 [shape = 'f32[2,18,64]{2,1,0:T(8,128)}', space=vmem, size = 0x6000, scoped, tag = 'scratch operand']
  %s0 = inlined_call_operand.vmem [shape: f32[32,128], index: 0, kind: input, shape index: {}]
  %s1 = inlined_call_operand.vmem [shape: bf16[3,128,64], index: 1, kind: input, shape index: {}]
  %s2 = inlined_call_operand.vmem [shape: bf16[128,64], index: 2, kind: input, shape index: {}]
  %s3 = inlined_call_operand.vmem [shape: bf16[3,64,64], index: 3, kind: input, shape index: {}]
  %s4 = inlined_call_operand.vmem [shape: bf16[3,64,64], index: 4, kind: input, shape index: {}]
  %s5 = inlined_call_operand.vmem [shape: bf16[3,64,64], index: 5, kind: input, shape index: {}]
  %s6 = inlined_call_operand.vmem [shape: f32[64,64], index: 6, kind: input, shape index: {}]
  %s7 = inlined_call_operand.vmem [shape: bf16[16,64,128], index: 7, kind: input, shape index: {}]
  %s8 = inlined_call_operand.vmem [shape: f32[1,128], index: 8, kind: input, shape index: {}]
  %s9 = inlined_call_operand.vmem [shape: bf16[128,10], index: 9, kind: input, shape index: {}]
  %s10 = inlined_call_operand.vmem [shape: f32[1,10], index: 10, kind: input, shape index: {}]
  %s11 = inlined_call_operand.vmem [shape: f32[2,16,64], index: 11, kind: output, shape index: {0}]
  %s12 = inlined_call_operand.hbm [shape: f32[2,10], index: 12, kind: output, shape index: {1}]
  %13 = xla_tuple %s11, %s12
  %s14 = sld [smem:[#allocation0]]
  $region62: #{res_cell_forward.1} parent=0
    _
  %s16 = ssub.s32 1, %s14
  %s17 = scalar_select 0, %s16, %s14
  $region1: #{res_cell_forward.1} parent=0
    #allocation4 [shape = 'u8[1024]{0}', space=vmem, size = 0x400, scoped, tag = 'output window, operand 1, single buffered']
    #allocation5 [shape = 's32[1]{0}', space=sflag, size = 0x4, scoped, tag = 'scoped memory for res_cell_forward.1']
    %18 = vsyncpa [#allocation5], 0
    // Predicated region
    $region2: #{res_cell_forward.1} parent=1 // pred_check
      _
    $region3: #{res_cell_forward.1} parent=1 // pred_check_branch
      %20 = sbr.rel (0) target = $region5
    $region4: #{res_cell_forward.1} parent=1 // pred_region
      _
    $region5: #{res_cell_forward.1} parent=1 // pred_fallthru
      _
    // Predicated region
    $region6: #{res_cell_forward.1} parent=1 // pred_check
      _
    $region7: #{res_cell_forward.1} parent=1 // pred_check_branch
      %22 = sbr.rel (0) target = $region9
    $region8: #{res_cell_forward.1} parent=1 // pred_region
      _
    $region9: #{res_cell_forward.1} parent=1 // pred_fallthru
      _
    // Predicated region
    $region10: #{res_cell_forward.1} parent=1 // pred_check
      _
    $region11: #{res_cell_forward.1} parent=1 // pred_check_branch
      %24 = sbr.rel (0) target = $region13
    $region12: #{res_cell_forward.1} parent=1 // pred_region
      _
    $region13: #{res_cell_forward.1} parent=1 // pred_fallthru
      _
    // Predicated region
    $region14: #{res_cell_forward.1} parent=1 // pred_check
      _
    $region15: #{res_cell_forward.1} parent=1 // pred_check_branch
      %26 = sbr.rel (0) target = $region17
    $region16: #{res_cell_forward.1} parent=1 // pred_region
      _
    $region17: #{res_cell_forward.1} parent=1 // pred_fallthru
      _
    // Predicated region
    $region18: #{res_cell_forward.1} parent=1 // pred_check
      _
    $region19: #{res_cell_forward.1} parent=1 // pred_check_branch
      %28 = sbr.rel (0) target = $region21
    $region20: #{res_cell_forward.1} parent=1 // pred_region
      _
    $region21: #{res_cell_forward.1} parent=1 // pred_fallthru
      _
    // Predicated region
    $region22: #{res_cell_forward.1} parent=1 // pred_check
      _
    $region23: #{res_cell_forward.1} parent=1 // pred_check_branch
      %30 = sbr.rel (0) target = $region25
    $region24: #{res_cell_forward.1} parent=1 // pred_region
      _
    $region25: #{res_cell_forward.1} parent=1 // pred_fallthru
      _
    // Predicated region
    $region26: #{res_cell_forward.1} parent=1 // pred_check
      _
    $region27: #{res_cell_forward.1} parent=1 // pred_check_branch
      %32 = sbr.rel (0) target = $region29
    $region28: #{res_cell_forward.1} parent=1 // pred_region
      _
    $region29: #{res_cell_forward.1} parent=1 // pred_fallthru
      _
    // Predicated region
    $region30: #{res_cell_forward.1} parent=1 // pred_check
      _
    $region31: #{res_cell_forward.1} parent=1 // pred_check_branch
      %34 = sbr.rel (0) target = $region33
    $region32: #{res_cell_forward.1} parent=1 // pred_region
      _
    $region33: #{res_cell_forward.1} parent=1 // pred_fallthru
      _
    // Predicated region
    $region34: #{res_cell_forward.1} parent=1 // pred_check
      _
    $region35: #{res_cell_forward.1} parent=1 // pred_check_branch
      %36 = sbr.rel (0) target = $region37
    $region36: #{res_cell_forward.1} parent=1 // pred_region
      _
    $region37: #{res_cell_forward.1} parent=1 // pred_fallthru
      _
    // Predicated region
    $region38: #{res_cell_forward.1} parent=1 // pred_check
      _
    $region39: #{res_cell_forward.1} parent=1 // pred_check_branch
      %38 = sbr.rel (0) target = $region41
    $region40: #{res_cell_forward.1} parent=1 // pred_region
      _
    $region41: #{res_cell_forward.1} parent=1 // pred_fallthru
      _
    // Predicated region
    $region42: #{res_cell_forward.1} parent=1 // pred_check
      _
    $region43: #{res_cell_forward.1} parent=1 // pred_check_branch
      %40 = sbr.rel (0) target = $region45
    $region44: #{res_cell_forward.1} parent=1 // pred_region
      _
    $region45: #{res_cell_forward.1} parent=1 // pred_fallthru
      _
    %v42 = vld [vmem:[%s6] sm:$0xff]
    %v43 = vld [vmem:[%s6 + $0x8] sm:$0xff]
    %v44 = vld [vmem:[%s6 + $0x10] sm:$0xff]
    %v45 = vld [vmem:[%s6 + $0x18] sm:$0xff]
    %v46 = vld [vmem:[%s6 + $0x20] sm:$0xff]
    %v47 = vld [vmem:[%s6 + $0x28] sm:$0xff]
    %v48 = vld [vmem:[%s6 + $0x30] sm:$0xff]
    %v49 = vld [vmem:[%s6 + $0x38] sm:$0xff]
    %v50 = vld [vmem:[%s0] sm:$0xff]
    %v51 = vld [vmem:[%s0 + $0x8] sm:$0xff]
    %v52 = vld [vmem:[%s0 + $0x10] sm:$0xff]
    %v53 = vld [vmem:[%s0 + $0x18] sm:$0xff]
    %54 = vst [vmem:[#allocation2] sm:$0xff] 0.0
    %55 = vst [vmem:[#allocation2 + $0x8] sm:$0xff] 0.0
    %56 = vst [vmem:[#allocation2 + $0x10] sm:$0x3] 0.0
    %57 = vst [vmem:[#allocation2 + $0x18] sm:$0xff] 0.0
    %58 = vst [vmem:[#allocation2 + $0x20] sm:$0xff] 0.0
    %59 = vst [vmem:[#allocation2 + $0x28] sm:$0x3] 0.0
    %vm60 = vcmask 523264
    %61 = vst.msk [vmem:[#allocation3] sm:$0xff] %vm60, 0.0
    %62 = vst.msk [vmem:[#allocation3 + $0x8] sm:$0xff] %vm60, 0.0
    %vm63 = vcmask 517120
    %64 = vst.msk [vmem:[#allocation3 + $0x10] sm:$0x3] %vm63, 0.0
    %65 = vst.msk [vmem:[#allocation3 + $0x18] sm:$0xff] %vm60, 0.0
    %66 = vst.msk [vmem:[#allocation3 + $0x20] sm:$0xff] %vm60, 0.0
    %67 = vst.msk [vmem:[#allocation3 + $0x28] sm:$0x3] %vm63, 0.0
    %v68 = vpack.c.bf16 %v51, %v50
    %v69 = vpack.c.bf16 %v53, %v52
    %v70 = vld [vmem:[%s2] sm:$0xf]
    %v71 = vld [vmem:[%s2 + $0x4] sm:$0xf]
    %v72 = vld [vmem:[%s2 + $0x8] sm:$0xf]
    %v73 = vld [vmem:[%s2 + $0xc] sm:$0xf]
    %v74 = vld [vmem:[%s2 + $0x10] sm:$0xf]
    %v75 = vld [vmem:[%s2 + $0x14] sm:$0xf]
    %v76 = vld [vmem:[%s2 + $0x18] sm:$0xf]
    %v77 = vld [vmem:[%s2 + $0x1c] sm:$0xf]
    %v78 = vld [vmem:[%s2 + $0x20] sm:$0xf]
    %v79 = vld [vmem:[%s2 + $0x24] sm:$0xf]
    %v80 = vld [vmem:[%s2 + $0x28] sm:$0xf]
    %v81 = vld [vmem:[%s2 + $0x2c] sm:$0xf]
    %v82 = vld [vmem:[%s2 + $0x30] sm:$0xf]
    %v83 = vld [vmem:[%s2 + $0x34] sm:$0xf]
    %v84 = vld [vmem:[%s2 + $0x38] sm:$0xf]
    %v85 = vld [vmem:[%s2 + $0x3c] sm:$0xf]
    %v102 = vunpack.c.l.b16 %v70
    %v103 = vunpack.c.l.b16 %v71
    %v104 = vunpack.c.l.b16 %v72
    %v105 = vunpack.c.l.b16 %v73
    %v106 = vunpack.c.l.b16 %v74
    %v107 = vunpack.c.l.b16 %v75
    %v108 = vunpack.c.l.b16 %v76
    %v109 = vunpack.c.l.b16 %v77
    %v110 = vunpack.c.l.b16 %v78
    %v111 = vunpack.c.l.b16 %v79
    %v112 = vunpack.c.l.b16 %v80
    %v113 = vunpack.c.l.b16 %v81
    %v114 = vunpack.c.l.b16 %v82
    %v115 = vunpack.c.l.b16 %v83
    %v116 = vunpack.c.l.b16 %v84
    %v117 = vunpack.c.l.b16 %v85
    %v118 = vpack.c.b16 %v103, %v102
    %v119 = vpack.c.b16 %v105, %v104
    %v120 = vpack.c.b16 %v107, %v106
    %v121 = vpack.c.b16 %v109, %v108
    %v122 = vpack.c.b16 %v111, %v110
    %v123 = vpack.c.b16 %v113, %v112
    %v124 = vpack.c.b16 %v115, %v114
    %v125 = vpack.c.b16 %v117, %v116
    %134 = vmatprep.subr.bf16.mxu0 0
    %135 = vmatpush1.bf16.msra.mxu0 %v118
    %136 = vmatprep.subr.bf16.mxu0 0
    %137 = vmatpush1.bf16.msra.mxu0 %v119
    %138 = vmatprep.subr.bf16.mxu0 0
    %139 = vmatpush1.bf16.msra.mxu0 %v120
    %140 = vmatprep.subr.bf16.mxu0 0
    %141 = vmatpush1.bf16.msra.mxu0 %v121
    %142 = vmatprep.subr.bf16.mxu0 0
    %143 = vmatpush1.bf16.msra.mxu0 %v122
    %144 = vmatprep.subr.bf16.mxu0 0
    %145 = vmatpush1.bf16.msra.mxu0 %v123
    %146 = vmatprep.subr.bf16.mxu0 0
    %147 = vmatpush1.bf16.msra.mxu0 %v124
    %148 = vmatprep.subr.bf16.mxu0 0
    %149 = vmatpush1.bf16.msra.mxu0 %v125
    %150 = vmatprep.subr.bf16.mxu0 0
    %151 = vmatpush1.bf16.msra.mxu0 0
    %152 = vmatprep.subr.bf16.mxu0 0
    %153 = vmatpush1.bf16.msra.mxu0 0
    %154 = vmatprep.subr.bf16.mxu0 0
    %155 = vmatpush1.bf16.msra.mxu0 0
    %156 = vmatprep.subr.bf16.mxu0 0
    %157 = vmatpush1.bf16.msra.mxu0 0
    %158 = vmatprep.subr.bf16.mxu0 0
    %159 = vmatpush1.bf16.msra.mxu0 0
    %160 = vmatprep.subr.bf16.mxu0 0
    %161 = vmatpush1.bf16.msra.mxu0 0
    %162 = vmatprep.subr.bf16.mxu0 0
    %163 = vmatpush1.bf16.msra.mxu0 0
    %164 = vmatprep.subr.bf16.mxu0 0
    %165 = vmatpush1.bf16.msra.mxu0 0
    %166 = vmatprep.mubr.bf16.mxu0 0
    %167 = vmatmul.mubr.bf16.gmra.mrb[0].mxu0 %v68
    %v168 = vpop.f32.mrb[0].mxu0
    %v169 = vadd.f32 0.0, %v168
    %v170 = vpop.f32.mrb[0].mxu0
    %v171 = vpop.f32.mrb[0].mxu0
    %v172 = vadd.f32 0.0, %v171
    %v173 = vpop.f32.mrb[0].mxu0
    %174 = vmatprep.mubr.bf16.mxu0 0
    %175 = vmatmul.mubr.bf16.gmra.mrb[0].mxu0 %v69
    %v176 = vpop.f32.mrb[0].mxu0
    %v177 = vadd.f32 0.0, %v176
    %v178 = vpop.f32.mrb[0].mxu0
    %v179 = vpop.f32.mrb[0].mxu0
    %v180 = vadd.f32 0.0, %v179
    %v181 = vpop.f32.mrb[0].mxu0
    %182 = vdwg.mxu0
    %v184 = vsel %vm60, %v169, 0
    %v187 = vsel %vm60, %v172, 0
    %v190 = vsel %vm60, %v177, 0
    %v193 = vsel %vm60, %v180, 0
    %195 = vmatprep.subr.mxu0 0.0
    %196 = vmatpush1.msra.mxu0 %v42
    %197 = vmatprep.subr.mxu0 0.0
    %198 = vmatpush1.msra.mxu0 %v43
    %199 = vmatprep.subr.mxu0 0.0
    %200 = vmatpush1.msra.mxu0 %v44
    %201 = vmatprep.subr.mxu0 0.0
    %202 = vmatpush1.msra.mxu0 %v45
    %203 = vmatprep.subr.mxu0 0.0
    %204 = vmatpush1.msra.mxu0 %v46
    %205 = vmatprep.subr.mxu0 0.0
    %206 = vmatpush1.msra.mxu0 %v47
    %207 = vmatprep.subr.mxu0 0.0
    %208 = vmatpush1.msra.mxu0 %v48
    %209 = vmatprep.subr.mxu0 0.0
    %210 = vmatpush1.msra.mxu0 %v49
    %211 = vmatprep.subr.mxu0 0.0
    %212 = vmatpush1.msra.mxu0 0.0
    %213 = vmatprep.subr.mxu0 0.0
    %214 = vmatpush1.msra.mxu0 0.0
    %215 = vmatprep.subr.mxu0 0.0
    %216 = vmatpush1.msra.mxu0 0.0
    %217 = vmatprep.subr.mxu0 0.0
    %218 = vmatpush1.msra.mxu0 0.0
    %219 = vmatprep.subr.mxu0 0.0
    %220 = vmatpush1.msra.mxu0 0.0
    %221 = vmatprep.subr.mxu0 0.0
    %222 = vmatpush1.msra.mxu0 0.0
    %223 = vmatprep.subr.mxu0 0.0
    %224 = vmatpush1.msra.mxu0 0.0
    %225 = vmatprep.subr.mxu0 0.0
    %226 = vmatpush1.msra.mxu0 0.0
    %227 = vmatprep.subr.mxu0 0.0
    %228 = vmatpush1.msra.mxu0 0.0
    %229 = vmatprep.subr.mxu0 0.0
    %230 = vmatpush1.msra.mxu0 0.0
    %231 = vmatprep.subr.mxu0 0.0
    %232 = vmatpush1.msra.mxu0 0.0
    %233 = vmatprep.subr.mxu0 0.0
    %234 = vmatpush1.msra.mxu0 0.0
    %235 = vmatprep.subr.mxu0 0.0
    %236 = vmatpush1.msra.mxu0 0.0
    %237 = vmatprep.subr.mxu0 0.0
    %238 = vmatpush1.msra.mxu0 0.0
    %239 = vmatprep.subr.mxu0 0.0
    %240 = vmatpush1.msra.mxu0 0.0
    %241 = vmatprep.subr.mxu0 0.0
    %242 = vmatpush1.msra.mxu0 0.0
    %243 = vmatprep.subr.mxu0 0.0
    %244 = vmatpush1.msra.mxu0 0.0
    %245 = vmatprep.subr.mxu0 0.0
    %246 = vmatpush1.msra.mxu0 0.0
    %247 = vmatprep.subr.mxu0 0.0
    %248 = vmatpush1.msra.mxu0 0.0
    %249 = vmatprep.subr.mxu0 0.0
    %250 = vmatpush1.msra.mxu0 0.0
    %251 = vmatprep.subr.mxu0 0.0
    %252 = vmatpush1.msra.mxu0 0.0
    %253 = vmatprep.subr.mxu0 0.0
    %254 = vmatpush1.msra.mxu0 0.0
    %255 = vmatprep.subr.mxu0 0.0
    %256 = vmatpush1.msra.mxu0 0.0
    %257 = vmatprep.subr.mxu0 0.0
    %258 = vmatpush1.msra.mxu0 0.0
    %259 = vmatprep.mubr.f32.mxu0 0.0
    %260 = vmatmul.mubr.f32.gmra.mrb[0].mxu0 %v184
    %v261 = vpop.f32.mrb[0].mxu0
    %v262 = vadd.f32 0.0, %v261
    %v263 = vpop.f32.mrb[0].mxu0
    %264 = vmatprep.mubr.f32.mxu0 0.0
    %265 = vmatmul.mubr.f32.gmra.mrb[0].mxu0 %v187
    %v266 = vpop.f32.mrb[0].mxu0
    %v267 = vadd.f32 0.0, %v266
    %v268 = vpop.f32.mrb[0].mxu0
    %269 = vmatprep.mubr.f32.mxu0 0.0
    %270 = vmatmul.mubr.f32.gmra.mrb[0].mxu0 %v190
    %v271 = vpop.f32.mrb[0].mxu0
    %v272 = vadd.f32 0.0, %v271
    %v273 = vpop.f32.mrb[0].mxu0
    %274 = vmatprep.mubr.f32.mxu0 0.0
    %275 = vmatmul.mubr.f32.gmra.mrb[0].mxu0 %v193
    %v276 = vpop.f32.mrb[0].mxu0
    %v277 = vadd.f32 0.0, %v276
    %v278 = vpop.f32.mrb[0].mxu0
    %279 = vdwg.mxu0
    %v280 = vsel %vm60, %v262, 0.0
    %v281 = vsel %vm60, %v267, 0.0
    %v282 = vadd.f32 %v280, %v281
    %v283 = vsel %vm60, %v272, 0.0
    %v284 = vadd.f32 %v282, %v283
    %v285 = vsel %vm60, %v277, 0.0
    %v286 = vadd.f32 %v284, %v285
    %v287 = vrot.slane %v286, 4
    %v288 = vadd.f32 %v286, %v287
    %v289 = vrot.slane %v288, 2
    %v290 = vadd.f32 %v288, %v289
    %v291 = vrot.slane %v290, 1
    %v292 = vadd.f32 %v290, %v291
    %v293 = vrcp.pop 32.0
    %v294 = vmul.f32 %v292, %v293
    %v295 = vsub.f32 %v169, %v294
    %v296 = vsub.f32 %v172, %v294
    %v297 = vsub.f32 %v177, %v294
    %v298 = vsub.f32 %v180, %v294
    %v299 = vmul.f32 %v295, %v295
    %v300 = vmul.f32 %v296, %v296
    %v301 = vmul.f32 %v297, %v297
    %v302 = vmul.f32 %v298, %v298
    %v304 = vsel %vm60, %v299, 0
    %v307 = vsel %vm60, %v300, 0
    %v310 = vsel %vm60, %v301, 0
    %v313 = vsel %vm60, %v302, 0
    %315 = vmatprep.subr.mxu0 0.0
    %316 = vmatpush1.msra.mxu0 %v42
    %317 = vmatprep.subr.mxu0 0.0
    %318 = vmatpush1.msra.mxu0 %v43
    %319 = vmatprep.subr.mxu0 0.0
    %320 = vmatpush1.msra.mxu0 %v44
    %321 = vmatprep.subr.mxu0 0.0
    %322 = vmatpush1.msra.mxu0 %v45
    %323 = vmatprep.subr.mxu0 0.0
    %324 = vmatpush1.msra.mxu0 %v46
    %325 = vmatprep.subr.mxu0 0.0
    %326 = vmatpush1.msra.mxu0 %v47
    %327 = vmatprep.subr.mxu0 0.0
    %328 = vmatpush1.msra.mxu0 %v48
    %329 = vmatprep.subr.mxu0 0.0
    %330 = vmatpush1.msra.mxu0 %v49
    %331 = vmatprep.subr.mxu0 0.0
    %332 = vmatpush1.msra.mxu0 0.0
    %333 = vmatprep.subr.mxu0 0.0
    %334 = vmatpush1.msra.mxu0 0.0
    %335 = vmatprep.subr.mxu0 0.0
    %336 = vmatpush1.msra.mxu0 0.0
    %337 = vmatprep.subr.mxu0 0.0
    %338 = vmatpush1.msra.mxu0 0.0
    %339 = vmatprep.subr.mxu0 0.0
    %340 = vmatpush1.msra.mxu0 0.0
    %341 = vmatprep.subr.mxu0 0.0
    %342 = vmatpush1.msra.mxu0 0.0
    %343 = vmatprep.subr.mxu0 0.0
    %344 = vmatpush1.msra.mxu0 0.0
    %345 = vmatprep.subr.mxu0 0.0
    %346 = vmatpush1.msra.mxu0 0.0
    %347 = vmatprep.subr.mxu0 0.0
    %348 = vmatpush1.msra.mxu0 0.0
    %349 = vmatprep.subr.mxu0 0.0
    %350 = vmatpush1.msra.mxu0 0.0
    %351 = vmatprep.subr.mxu0 0.0
    %352 = vmatpush1.msra.mxu0 0.0
    %353 = vmatprep.subr.mxu0 0.0
    %354 = vmatpush1.msra.mxu0 0.0
    %355 = vmatprep.subr.mxu0 0.0
    %356 = vmatpush1.msra.mxu0 0.0
    %357 = vmatprep.subr.mxu0 0.0
    %358 = vmatpush1.msra.mxu0 0.0
    %359 = vmatprep.subr.mxu0 0.0
    %360 = vmatpush1.msra.mxu0 0.0
    %361 = vmatprep.subr.mxu0 0.0
    %362 = vmatpush1.msra.mxu0 0.0
    %363 = vmatprep.subr.mxu0 0.0
    %364 = vmatpush1.msra.mxu0 0.0
    %365 = vmatprep.subr.mxu0 0.0
    %366 = vmatpush1.msra.mxu0 0.0
    %367 = vmatprep.subr.mxu0 0.0
    %368 = vmatpush1.msra.mxu0 0.0
    %369 = vmatprep.subr.mxu0 0.0
    %370 = vmatpush1.msra.mxu0 0.0
    %371 = vmatprep.subr.mxu0 0.0
    %372 = vmatpush1.msra.mxu0 0.0
    %373 = vmatprep.subr.mxu0 0.0
    %374 = vmatpush1.msra.mxu0 0.0
    %375 = vmatprep.subr.mxu0 0.0
    %376 = vmatpush1.msra.mxu0 0.0
    %377 = vmatprep.subr.mxu0 0.0
    %378 = vmatpush1.msra.mxu0 0.0
    %379 = vmatprep.mubr.f32.mxu0 0.0
    %380 = vmatmul.mubr.f32.gmra.mrb[0].mxu0 %v304
    %v381 = vpop.f32.mrb[0].mxu0
    %v382 = vadd.f32 0.0, %v381
    %v383 = vpop.f32.mrb[0].mxu0
    %384 = vmatprep.mubr.f32.mxu0 0.0
    %385 = vmatmul.mubr.f32.gmra.mrb[0].mxu0 %v307
    %v386 = vpop.f32.mrb[0].mxu0
    %v387 = vadd.f32 0.0, %v386
    %v388 = vpop.f32.mrb[0].mxu0
    %389 = vmatprep.mubr.f32.mxu0 0.0
    %390 = vmatmul.mubr.f32.gmra.mrb[0].mxu0 %v310
    %v391 = vpop.f32.mrb[0].mxu0
    %v392 = vadd.f32 0.0, %v391
    %v393 = vpop.f32.mrb[0].mxu0
    %394 = vmatprep.mubr.f32.mxu0 0.0
    %395 = vmatmul.mubr.f32.gmra.mrb[0].mxu0 %v313
    %v396 = vpop.f32.mrb[0].mxu0
    %v397 = vadd.f32 0.0, %v396
    %v398 = vpop.f32.mrb[0].mxu0
    %399 = vdwg.mxu0
    %v400 = vsel %vm60, %v382, 0.0
    %v401 = vsel %vm60, %v387, 0.0
    %v402 = vadd.f32 %v400, %v401
    %v403 = vsel %vm60, %v392, 0.0
    %v404 = vadd.f32 %v402, %v403
    %v405 = vsel %vm60, %v397, 0.0
    %v406 = vadd.f32 %v404, %v405
    %v407 = vrot.slane %v406, 4
    %v408 = vadd.f32 %v406, %v407
    %v409 = vrot.slane %v408, 2
    %v410 = vadd.f32 %v408, %v409
    %v411 = vrot.slane %v410, 1
    %v412 = vadd.f32 %v410, %v411
    %v413 = vmul.f32 %v412, %v293
    %v414 = vadd.f32 %v413, 1e-05
    %v415 = vrsqrt.pop %v414
    %v416 = vmul.f32 %v295, %v415
    %v417 = vmul.f32 %v296, %v415
    %v418 = vmul.f32 %v297, %v415
    %v419 = vmul.f32 %v298, %v415
    %420 = vst [vmem:[#allocation2 + $0x1] sm:$0xff] %v50
    %421 = vst [vmem:[#allocation2 + $0x9] sm:$0xff] %v51
    %422 = vst [vmem:[#allocation2 + $0x19] sm:$0xff] %v52
    %423 = vst [vmem:[#allocation2 + $0x21] sm:$0xff] %v53
    %v424 = vld [vmem:[#allocation2] sm:$0xff]
    %v425 = vld [vmem:[#allocation2 + $0x8] sm:$0xff]
    %v426 = vld [vmem:[#allocation2 + $0x18] sm:$0xff]
    %v427 = vld [vmem:[#allocation2 + $0x20] sm:$0xff]
    %v428 = vpack.c.bf16 %v425, %v424
    %v429 = vpack.c.bf16 %v427, %v426
    %v430 = vld [vmem:[%s1] sm:$0xf]
    %v431 = vld [vmem:[%s1 + $0x4] sm:$0xf]
    %v432 = vld [vmem:[%s1 + $0x8] sm:$0xf]
    %v433 = vld [vmem:[%s1 + $0xc] sm:$0xf]
    %v434 = vld [vmem:[%s1 + $0x10] sm:$0xf]
    %v435 = vld [vmem:[%s1 + $0x14] sm:$0xf]
    %v436 = vld [vmem:[%s1 + $0x18] sm:$0xf]
    %v437 = vld [vmem:[%s1 + $0x1c] sm:$0xf]
    %v438 = vld [vmem:[%s1 + $0x20] sm:$0xf]
    %v439 = vld [vmem:[%s1 + $0x24] sm:$0xf]
    %v440 = vld [vmem:[%s1 + $0x28] sm:$0xf]
    %v441 = vld [vmem:[%s1 + $0x2c] sm:$0xf]
    %v442 = vld [vmem:[%s1 + $0x30] sm:$0xf]
    %v443 = vld [vmem:[%s1 + $0x34] sm:$0xf]
    %v444 = vld [vmem:[%s1 + $0x38] sm:$0xf]
    %v445 = vld [vmem:[%s1 + $0x3c] sm:$0xf]
    %v446 = vld [vmem:[#allocation2 + $0x1] sm:$0xff]
    %v447 = vld [vmem:[#allocation2 + $0x9] sm:$0xff]
    %v448 = vld [vmem:[#allocation2 + $0x19] sm:$0xff]
    %v449 = vld [vmem:[#allocation2 + $0x21] sm:$0xff]
    %v450 = vpack.c.bf16 %v447, %v446
    %v451 = vpack.c.bf16 %v449, %v448
    %s452 = scalar_lea.vmem %s1, 64
    %v453 = vld [vmem:[%s452] sm:$0xf]
    %v454 = vld [vmem:[%s452 + $0x4] sm:$0xf]
    %v455 = vld [vmem:[%s452 + $0x8] sm:$0xf]
    %v456 = vld [vmem:[%s452 + $0xc] sm:$0xf]
    %v457 = vld [vmem:[%s452 + $0x10] sm:$0xf]
    %v458 = vld [vmem:[%s452 + $0x14] sm:$0xf]
    %v459 = vld [vmem:[%s452 + $0x18] sm:$0xf]
    %v460 = vld [vmem:[%s452 + $0x1c] sm:$0xf]
    %v461 = vld [vmem:[%s452 + $0x20] sm:$0xf]
    %v462 = vld [vmem:[%s452 + $0x24] sm:$0xf]
    %v463 = vld [vmem:[%s452 + $0x28] sm:$0xf]
    %v464 = vld [vmem:[%s452 + $0x2c] sm:$0xf]
    %v465 = vld [vmem:[%s452 + $0x30] sm:$0xf]
    %v466 = vld [vmem:[%s452 + $0x34] sm:$0xf]
    %v467 = vld [vmem:[%s452 + $0x38] sm:$0xf]
    %v468 = vld [vmem:[%s452 + $0x3c] sm:$0xf]
    %v485 = vunpack.c.l.b16 %v453
    %v486 = vunpack.c.l.b16 %v454
    %v487 = vunpack.c.l.b16 %v455
    %v488 = vunpack.c.l.b16 %v456
    %v489 = vunpack.c.l.b16 %v457
    %v490 = vunpack.c.l.b16 %v458
    %v491 = vunpack.c.l.b16 %v459
    %v492 = vunpack.c.l.b16 %v460
    %v493 = vunpack.c.l.b16 %v461
    %v494 = vunpack.c.l.b16 %v462
    %v495 = vunpack.c.l.b16 %v463
    %v496 = vunpack.c.l.b16 %v464
    %v497 = vunpack.c.l.b16 %v465
    %v498 = vunpack.c.l.b16 %v466
    %v499 = vunpack.c.l.b16 %v467
    %v500 = vunpack.c.l.b16 %v468
    %v501 = vpack.c.b16 %v486, %v485
    %v502 = vpack.c.b16 %v488, %v487
    %v503 = vpack.c.b16 %v490, %v489
    %v504 = vpack.c.b16 %v492, %v491
    %v505 = vpack.c.b16 %v494, %v493
    %v506 = vpack.c.b16 %v496, %v495
    %v507 = vpack.c.b16 %v498, %v497
    %v508 = vpack.c.b16 %v500, %v499
    %517 = vmatprep.subr.bf16.mxu0 0
    %518 = vmatpush1.bf16.msra.mxu0 %v501
    %519 = vmatprep.subr.bf16.mxu0 0
    %520 = vmatpush1.bf16.msra.mxu0 %v502
    %521 = vmatprep.subr.bf16.mxu0 0
    %522 = vmatpush1.bf16.msra.mxu0 %v503
    %523 = vmatprep.subr.bf16.mxu0 0
    %524 = vmatpush1.bf16.msra.mxu0 %v504
    %525 = vmatprep.subr.bf16.mxu0 0
    %526 = vmatpush1.bf16.msra.mxu0 %v505
    %527 = vmatprep.subr.bf16.mxu0 0
    %528 = vmatpush1.bf16.msra.mxu0 %v506
    %529 = vmatprep.subr.bf16.mxu0 0
    %530 = vmatpush1.bf16.msra.mxu0 %v507
    %531 = vmatprep.subr.bf16.mxu0 0
    %532 = vmatpush1.bf16.msra.mxu0 %v508
    %533 = vmatprep.subr.bf16.mxu0 0
    %534 = vmatpush1.bf16.msra.mxu0 0
    %535 = vmatprep.subr.bf16.mxu0 0
    %536 = vmatpush1.bf16.msra.mxu0 0
    %537 = vmatprep.subr.bf16.mxu0 0
    %538 = vmatpush1.bf16.msra.mxu0 0
    %539 = vmatprep.subr.bf16.mxu0 0
    %540 = vmatpush1.bf16.msra.mxu0 0
    %541 = vmatprep.subr.bf16.mxu0 0
    %542 = vmatpush1.bf16.msra.mxu0 0
    %543 = vmatprep.subr.bf16.mxu0 0
    %544 = vmatpush1.bf16.msra.mxu0 0
    %545 = vmatprep.subr.bf16.mxu0 0
    %546 = vmatpush1.bf16.msra.mxu0 0
    %547 = vmatprep.subr.bf16.mxu0 0
    %548 = vmatpush1.bf16.msra.mxu0 0
    %549 = vmatprep.mubr.bf16.mxu0 0
    %550 = vmatmul.mubr.bf16.gmra.mrb[0].mxu0 %v450
    %v551 = vpop.f32.mrb[0].mxu0
    %v552 = vadd.f32 0.0, %v551
    %v553 = vpop.f32.mrb[0].mxu0
    %v554 = vpop.f32.mrb[0].mxu0
    %v555 = vadd.f32 0.0, %v554
    %v556 = vpop.f32.mrb[0].mxu0
    %557 = vmatprep.mubr.bf16.mxu0 0
    %558 = vmatmul.mubr.bf16.gmra.mrb[0].mxu0 %v451
    %v559 = vpop.f32.mrb[0].mxu0
    %v560 = vadd.f32 0.0, %v559
    %v561 = vpop.f32.mrb[0].mxu0
    %v562 = vpop.f32.mrb[0].mxu0
    %v563 = vadd.f32 0.0, %v562
    %v564 = vpop.f32.mrb[0].mxu0
    %565 = vdwg.mxu0
    %v582 = vunpack.c.l.b16 %v430
    %v583 = vunpack.c.l.b16 %v431
    %v584 = vunpack.c.l.b16 %v432
    %v585 = vunpack.c.l.b16 %v433
    %v586 = vunpack.c.l.b16 %v434
    %v587 = vunpack.c.l.b16 %v435
    %v588 = vunpack.c.l.b16 %v436
    %v589 = vunpack.c.l.b16 %v437
    %v590 = vunpack.c.l.b16 %v438
    %v591 = vunpack.c.l.b16 %v439
    %v592 = vunpack.c.l.b16 %v440
    %v593 = vunpack.c.l.b16 %v441
    %v594 = vunpack.c.l.b16 %v442
    %v595 = vunpack.c.l.b16 %v443
    %v596 = vunpack.c.l.b16 %v444
    %v597 = vunpack.c.l.b16 %v445
    %v598 = vpack.c.b16 %v583, %v582
    %v599 = vpack.c.b16 %v585, %v584
    %v600 = vpack.c.b16 %v587, %v586
    %v601 = vpack.c.b16 %v589, %v588
    %v602 = vpack.c.b16 %v591, %v590
    %v603 = vpack.c.b16 %v593, %v592
    %v604 = vpack.c.b16 %v595, %v594
    %v605 = vpack.c.b16 %v597, %v596
    %614 = vmatprep.subr.bf16.mxu0 0
    %615 = vmatpush1.bf16.msra.mxu0 %v598
    %616 = vmatprep.subr.bf16.mxu0 0
    %617 = vmatpush1.bf16.msra.mxu0 %v599
    %618 = vmatprep.subr.bf16.mxu0 0
    %619 = vmatpush1.bf16.msra.mxu0 %v600
    %620 = vmatprep.subr.bf16.mxu0 0
    %621 = vmatpush1.bf16.msra.mxu0 %v601
    %622 = vmatprep.subr.bf16.mxu0 0
    %623 = vmatpush1.bf16.msra.mxu0 %v602
    %624 = vmatprep.subr.bf16.mxu0 0
    %625 = vmatpush1.bf16.msra.mxu0 %v603
    %626 = vmatprep.subr.bf16.mxu0 0
    %627 = vmatpush1.bf16.msra.mxu0 %v604
    %628 = vmatprep.subr.bf16.mxu0 0
    %629 = vmatpush1.bf16.msra.mxu0 %v605
    %630 = vmatprep.subr.bf16.mxu0 0
    %631 = vmatpush1.bf16.msra.mxu0 0
    %632 = vmatprep.subr.bf16.mxu0 0
    %633 = vmatpush1.bf16.msra.mxu0 0
    %634 = vmatprep.subr.bf16.mxu0 0
    %635 = vmatpush1.bf16.msra.mxu0 0
    %636 = vmatprep.subr.bf16.mxu0 0
    %637 = vmatpush1.bf16.msra.mxu0 0
    %638 = vmatprep.subr.bf16.mxu0 0
    %639 = vmatpush1.bf16.msra.mxu0 0
    %640 = vmatprep.subr.bf16.mxu0 0
    %641 = vmatpush1.bf16.msra.mxu0 0
    %642 = vmatprep.subr.bf16.mxu0 0
    %643 = vmatpush1.bf16.msra.mxu0 0
    %644 = vmatprep.subr.bf16.mxu0 0
    %645 = vmatpush1.bf16.msra.mxu0 0
    %646 = vmatprep.mubr.bf16.mxu0 0
    %647 = vmatmul.mubr.bf16.gmra.mrb[0].mxu0 %v428
    %v648 = vpop.f32.mrb[0].mxu0
    %v649 = vadd.f32 %v552, %v648
    %v650 = vpop.f32.mrb[0].mxu0
    %v651 = vpop.f32.mrb[0].mxu0
    %v652 = vadd.f32 %v555, %v651
    %v653 = vpop.f32.mrb[0].mxu0
    %654 = vmatprep.mubr.bf16.mxu0 0
    %655 = vmatmul.mubr.bf16.gmra.mrb[0].mxu0 %v429
    %v656 = vpop.f32.mrb[0].mxu0
    %v657 = vadd.f32 %v560, %v656
    %v658 = vpop.f32.mrb[0].mxu0
    %v659 = vpop.f32.mrb[0].mxu0
    %v660 = vadd.f32 %v563, %v659
    %v661 = vpop.f32.mrb[0].mxu0
    %662 = vdwg.mxu0
    %v663 = vld [vmem:[#allocation2 + $0x2] sm:$0xff]
    %v664 = vld [vmem:[#allocation2 + $0xa] sm:$0xff]
    %v665 = vld [vmem:[#allocation2 + $0x1a] sm:$0xff]
    %v666 = vld [vmem:[#allocation2 + $0x22] sm:$0xff]
    %v667 = vpack.c.bf16 %v664, %v663
    %v668 = vpack.c.bf16 %v666, %v665
    %s669 = scalar_lea.vmem %s1, 128
    %v670 = vld [vmem:[%s669] sm:$0xf]
    %v671 = vld [vmem:[%s669 + $0x4] sm:$0xf]
    %v672 = vld [vmem:[%s669 + $0x8] sm:$0xf]
    %v673 = vld [vmem:[%s669 + $0xc] sm:$0xf]
    %v674 = vld [vmem:[%s669 + $0x10] sm:$0xf]
    %v675 = vld [vmem:[%s669 + $0x14] sm:$0xf]
    %v676 = vld [vmem:[%s669 + $0x18] sm:$0xf]
    %v677 = vld [vmem:[%s669 + $0x1c] sm:$0xf]
    %v678 = vld [vmem:[%s669 + $0x20] sm:$0xf]
    %v679 = vld [vmem:[%s669 + $0x24] sm:$0xf]
    %v680 = vld [vmem:[%s669 + $0x28] sm:$0xf]
    %v681 = vld [vmem:[%s669 + $0x2c] sm:$0xf]
    %v682 = vld [vmem:[%s669 + $0x30] sm:$0xf]
    %v683 = vld [vmem:[%s669 + $0x34] sm:$0xf]
    %v684 = vld [vmem:[%s669 + $0x38] sm:$0xf]
    %v685 = vld [vmem:[%s669 + $0x3c] sm:$0xf]
    %v702 = vunpack.c.l.b16 %v670
    %v703 = vunpack.c.l.b16 %v671
    %v704 = vunpack.c.l.b16 %v672
    %v705 = vunpack.c.l.b16 %v673
    %v706 = vunpack.c.l.b16 %v674
    %v707 = vunpack.c.l.b16 %v675
    %v708 = vunpack.c.l.b16 %v676
    %v709 = vunpack.c.l.b16 %v677
    %v710 = vunpack.c.l.b16 %v678
    %v711 = vunpack.c.l.b16 %v679
    %v712 = vunpack.c.l.b16 %v680
    %v713 = vunpack.c.l.b16 %v681
    %v714 = vunpack.c.l.b16 %v682
    %v715 = vunpack.c.l.b16 %v683
    %v716 = vunpack.c.l.b16 %v684
    %v717 = vunpack.c.l.b16 %v685
    %v718 = vpack.c.b16 %v703, %v702
    %v719 = vpack.c.b16 %v705, %v704
    %v720 = vpack.c.b16 %v707, %v706
    %v721 = vpack.c.b16 %v709, %v708
    %v722 = vpack.c.b16 %v711, %v710
    %v723 = vpack.c.b16 %v713, %v712
    %v724 = vpack.c.b16 %v715, %v714
    %v725 = vpack.c.b16 %v717, %v716
    %734 = vmatprep.subr.bf16.mxu0 0
    %735 = vmatpush1.bf16.msra.mxu0 %v718
    %736 = vmatprep.subr.bf16.mxu0 0
    %737 = vmatpush1.bf16.msra.mxu0 %v719
    %738 = vmatprep.subr.bf16.mxu0 0
    %739 = vmatpush1.bf16.msra.mxu0 %v720
    %740 = vmatprep.subr.bf16.mxu0 0
    %741 = vmatpush1.bf16.msra.mxu0 %v721
    %742 = vmatprep.subr.bf16.mxu0 0
    %743 = vmatpush1.bf16.msra.mxu0 %v722
    %744 = vmatprep.subr.bf16.mxu0 0
    %745 = vmatpush1.bf16.msra.mxu0 %v723
    %746 = vmatprep.subr.bf16.mxu0 0
    %747 = vmatpush1.bf16.msra.mxu0 %v724
    %748 = vmatprep.subr.bf16.mxu0 0
    %749 = vmatpush1.bf16.msra.mxu0 %v725
    %750 = vmatprep.subr.bf16.mxu0 0
    %751 = vmatpush1.bf16.msra.mxu0 0
    %752 = vmatprep.subr.bf16.mxu0 0
    %753 = vmatpush1.bf16.msra.mxu0 0
    %754 = vmatprep.subr.bf16.mxu0 0
    %755 = vmatpush1.bf16.msra.mxu0 0
    %756 = vmatprep.subr.bf16.mxu0 0
    %757 = vmatpush1.bf16.msra.mxu0 0
    %758 = vmatprep.subr.bf16.mxu0 0
    %759 = vmatpush1.bf16.msra.mxu0 0
    %760 = vmatprep.subr.bf16.mxu0 0
    %761 = vmatpush1.bf16.msra.mxu0 0
    %762 = vmatprep.subr.bf16.mxu0 0
    %763 = vmatpush1.bf16.msra.mxu0 0
    %764 = vmatprep.subr.bf16.mxu0 0
    %765 = vmatpush1.bf16.msra.mxu0 0
    %766 = vmatprep.mubr.bf16.mxu0 0
    %767 = vmatmul.mubr.bf16.gmra.mrb[0].mxu0 %v667
    %v768 = vpop.f32.mrb[0].mxu0
    %v769 = vadd.f32 0.0, %v768
    %v770 = vpop.f32.mrb[0].mxu0
    %v771 = vpop.f32.mrb[0].mxu0
    %v772 = vadd.f32 0.0, %v771
    %v773 = vpop.f32.mrb[0].mxu0
    %774 = vmatprep.mubr.bf16.mxu0 0
    %775 = vmatmul.mubr.bf16.gmra.mrb[0].mxu0 %v668
    %v776 = vpop.f32.mrb[0].mxu0
    %v777 = vadd.f32 0.0, %v776
    %v778 = vpop.f32.mrb[0].mxu0
    %v779 = vpop.f32.mrb[0].mxu0
    %v780 = vadd.f32 0.0, %v779
    %v781 = vpop.f32.mrb[0].mxu0
    %782 = vdwg.mxu0
    %v783 = vadd.f32 %v649, %v769
    %v784 = vadd.f32 %v652, %v772
    %v785 = vadd.f32 %v657, %v777
    %v786 = vadd.f32 %v660, %v780
    %v788 = vsel %vm60, %v783, 0
    %v791 = vsel %vm60, %v784, 0
    %v794 = vsel %vm60, %v785, 0
    %v797 = vsel %vm60, %v786, 0
    %799 = vmatprep.subr.mxu0 0.0
    %800 = vmatpush1.msra.mxu0 %v42
    %801 = vmatprep.subr.mxu0 0.0
    %802 = vmatpush1.msra.mxu0 %v43
    %803 = vmatprep.subr.mxu0 0.0
    %804 = vmatpush1.msra.mxu0 %v44
    %805 = vmatprep.subr.mxu0 0.0
    %806 = vmatpush1.msra.mxu0 %v45
    %807 = vmatprep.subr.mxu0 0.0
    %808 = vmatpush1.msra.mxu0 %v46
    %809 = vmatprep.subr.mxu0 0.0
    %810 = vmatpush1.msra.mxu0 %v47
    %811 = vmatprep.subr.mxu0 0.0
    %812 = vmatpush1.msra.mxu0 %v48
    %813 = vmatprep.subr.mxu0 0.0
    %814 = vmatpush1.msra.mxu0 %v49
    %815 = vmatprep.subr.mxu0 0.0
    %816 = vmatpush1.msra.mxu0 0.0
    %817 = vmatprep.subr.mxu0 0.0
    %818 = vmatpush1.msra.mxu0 0.0
    %819 = vmatprep.subr.mxu0 0.0
    %820 = vmatpush1.msra.mxu0 0.0
    %821 = vmatprep.subr.mxu0 0.0
    %822 = vmatpush1.msra.mxu0 0.0
    %823 = vmatprep.subr.mxu0 0.0
    %824 = vmatpush1.msra.mxu0 0.0
    %825 = vmatprep.subr.mxu0 0.0
    %826 = vmatpush1.msra.mxu0 0.0
    %827 = vmatprep.subr.mxu0 0.0
    %828 = vmatpush1.msra.mxu0 0.0
    %829 = vmatprep.subr.mxu0 0.0
    %830 = vmatpush1.msra.mxu0 0.0
    %831 = vmatprep.subr.mxu0 0.0
    %832 = vmatpush1.msra.mxu0 0.0
    %833 = vmatprep.subr.mxu0 0.0
    %834 = vmatpush1.msra.mxu0 0.0
    %835 = vmatprep.subr.mxu0 0.0
    %836 = vmatpush1.msra.mxu0 0.0
    %837 = vmatprep.subr.mxu0 0.0
    %838 = vmatpush1.msra.mxu0 0.0
    %839 = vmatprep.subr.mxu0 0.0
    %840 = vmatpush1.msra.mxu0 0.0
    %841 = vmatprep.subr.mxu0 0.0
    %842 = vmatpush1.msra.mxu0 0.0
    %843 = vmatprep.subr.mxu0 0.0
    %844 = vmatpush1.msra.mxu0 0.0
    %845 = vmatprep.subr.mxu0 0.0
    %846 = vmatpush1.msra.mxu0 0.0
    %847 = vmatprep.subr.mxu0 0.0
    %848 = vmatpush1.msra.mxu0 0.0
    %849 = vmatprep.subr.mxu0 0.0
    %850 = vmatpush1.msra.mxu0 0.0
    %851 = vmatprep.subr.mxu0 0.0
    %852 = vmatpush1.msra.mxu0 0.0
    %853 = vmatprep.subr.mxu0 0.0
    %854 = vmatpush1.msra.mxu0 0.0
    %855 = vmatprep.subr.mxu0 0.0
    %856 = vmatpush1.msra.mxu0 0.0
    %857 = vmatprep.subr.mxu0 0.0
    %858 = vmatpush1.msra.mxu0 0.0
    %859 = vmatprep.subr.mxu0 0.0
    %860 = vmatpush1.msra.mxu0 0.0
    %861 = vmatprep.subr.mxu0 0.0
    %862 = vmatpush1.msra.mxu0 0.0
    %863 = vmatprep.mubr.f32.mxu0 0.0
    %864 = vmatmul.mubr.f32.gmra.mrb[0].mxu0 %v788
    %v865 = vpop.f32.mrb[0].mxu0
    %v866 = vadd.f32 0.0, %v865
    %v867 = vpop.f32.mrb[0].mxu0
    %868 = vmatprep.mubr.f32.mxu0 0.0
    %869 = vmatmul.mubr.f32.gmra.mrb[0].mxu0 %v791
    %v870 = vpop.f32.mrb[0].mxu0
    %v871 = vadd.f32 0.0, %v870
    %v872 = vpop.f32.mrb[0].mxu0
    %873 = vmatprep.mubr.f32.mxu0 0.0
    %874 = vmatmul.mubr.f32.gmra.mrb[0].mxu0 %v794
    %v875 = vpop.f32.mrb[0].mxu0
    %v876 = vadd.f32 0.0, %v875
    %v877 = vpop.f32.mrb[0].mxu0
    %878 = vmatprep.mubr.f32.mxu0 0.0
    %879 = vmatmul.mubr.f32.gmra.mrb[0].mxu0 %v797
    %v880 = vpop.f32.mrb[0].mxu0
    %v881 = vadd.f32 0.0, %v880
    %v882 = vpop.f32.mrb[0].mxu0
    %883 = vdwg.mxu0
    %v884 = vsel %vm60, %v866, 0.0
    %v885 = vsel %vm60, %v871, 0.0
    %v886 = vadd.f32 %v884, %v885
    %v887 = vsel %vm60, %v876, 0.0
    %v888 = vadd.f32 %v886, %v887
    %v889 = vsel %vm60, %v881, 0.0
    %v890 = vadd.f32 %v888, %v889
    %v891 = vrot.slane %v890, 4
    %v892 = vadd.f32 %v890, %v891
    %v893 = vrot.slane %v892, 2
    %v894 = vadd.f32 %v892, %v893
    %v895 = vrot.slane %v894, 1
    %v896 = vadd.f32 %v894, %v895
    %v897 = vmul.f32 %v896, %v293
    %v898 = vsub.f32 %v783, %v897
    %v899 = vsub.f32 %v784, %v897
    %v900 = vsub.f32 %v785, %v897
    %v901 = vsub.f32 %v786, %v897
    %v902 = vmul.f32 %v898, %v898
    %v903 = vmul.f32 %v899, %v899
    %v904 = vmul.f32 %v900, %v900
    %v905 = vmul.f32 %v901, %v901
    %v907 = vsel %vm60, %v902, 0
    %v910 = vsel %vm60, %v903, 0
    %v913 = vsel %vm60, %v904, 0
    %v916 = vsel %vm60, %v905, 0
    %918 = vmatprep.subr.mxu0 0.0
    %919 = vmatpush1.msra.mxu0 %v42
    %920 = vmatprep.subr.mxu0 0.0
    %921 = vmatpush1.msra.mxu0 %v43
    %922 = vmatprep.subr.mxu0 0.0
    %923 = vmatpush1.msra.mxu0 %v44
    %924 = vmatprep.subr.mxu0 0.0
    %925 = vmatpush1.msra.mxu0 %v45
    %926 = vmatprep.subr.mxu0 0.0
    %927 = vmatpush1.msra.mxu0 %v46
    %928 = vmatprep.subr.mxu0 0.0
    %929 = vmatpush1.msra.mxu0 %v47
    %930 = vmatprep.subr.mxu0 0.0
    %931 = vmatpush1.msra.mxu0 %v48
    %932 = vmatprep.subr.mxu0 0.0
    %933 = vmatpush1.msra.mxu0 %v49
    %934 = vmatprep.subr.mxu0 0.0
    %935 = vmatpush1.msra.mxu0 0.0
    %936 = vmatprep.subr.mxu0 0.0
    %937 = vmatpush1.msra.mxu0 0.0
    %938 = vmatprep.subr.mxu0 0.0
    %939 = vmatpush1.msra.mxu0 0.0
    %940 = vmatprep.subr.mxu0 0.0
    %941 = vmatpush1.msra.mxu0 0.0
    %942 = vmatprep.subr.mxu0 0.0
    %943 = vmatpush1.msra.mxu0 0.0
    %944 = vmatprep.subr.mxu0 0.0
    %945 = vmatpush1.msra.mxu0 0.0
    %946 = vmatprep.subr.mxu0 0.0
    %947 = vmatpush1.msra.mxu0 0.0
    %948 = vmatprep.subr.mxu0 0.0
    %949 = vmatpush1.msra.mxu0 0.0
    %950 = vmatprep.subr.mxu0 0.0
    %951 = vmatpush1.msra.mxu0 0.0
    %952 = vmatprep.subr.mxu0 0.0
    %953 = vmatpush1.msra.mxu0 0.0
    %954 = vmatprep.subr.mxu0 0.0
    %955 = vmatpush1.msra.mxu0 0.0
    %956 = vmatprep.subr.mxu0 0.0
    %957 = vmatpush1.msra.mxu0 0.0
    %958 = vmatprep.subr.mxu0 0.0
    %959 = vmatpush1.msra.mxu0 0.0
    %960 = vmatprep.subr.mxu0 0.0
    %961 = vmatpush1.msra.mxu0 0.0
    %962 = vmatprep.subr.mxu0 0.0
    %963 = vmatpush1.msra.mxu0 0.0
    %964 = vmatprep.subr.mxu0 0.0
    %965 = vmatpush1.msra.mxu0 0.0
    %966 = vmatprep.subr.mxu0 0.0
    %967 = vmatpush1.msra.mxu0 0.0
    %968 = vmatprep.subr.mxu0 0.0
    %969 = vmatpush1.msra.mxu0 0.0
    %970 = vmatprep.subr.mxu0 0.0
    %971 = vmatpush1.msra.mxu0 0.0
    %972 = vmatprep.subr.mxu0 0.0
    %973 = vmatpush1.msra.mxu0 0.0
    %974 = vmatprep.subr.mxu0 0.0
    %975 = vmatpush1.msra.mxu0 0.0
    %976 = vmatprep.subr.mxu0 0.0
    %977 = vmatpush1.msra.mxu0 0.0
    %978 = vmatprep.subr.mxu0 0.0
    %979 = vmatpush1.msra.mxu0 0.0
    %980 = vmatprep.subr.mxu0 0.0
    %981 = vmatpush1.msra.mxu0 0.0
    %982 = vmatprep.mubr.f32.mxu0 0.0
    %983 = vmatmul.mubr.f32.gmra.mrb[0].mxu0 %v907
    %v984 = vpop.f32.mrb[0].mxu0
    %v985 = vadd.f32 0.0, %v984
    %v986 = vpop.f32.mrb[0].mxu0
    %987 = vmatprep.mubr.f32.mxu0 0.0
    %988 = vmatmul.mubr.f32.gmra.mrb[0].mxu0 %v910
    %v989 = vpop.f32.mrb[0].mxu0
    %v990 = vadd.f32 0.0, %v989
    %v991 = vpop.f32.mrb[0].mxu0
    %992 = vmatprep.mubr.f32.mxu0 0.0
    %993 = vmatmul.mubr.f32.gmra.mrb[0].mxu0 %v913
    %v994 = vpop.f32.mrb[0].mxu0
    %v995 = vadd.f32 0.0, %v994
    %v996 = vpop.f32.mrb[0].mxu0
    %997 = vmatprep.mubr.f32.mxu0 0.0
    %998 = vmatmul.mubr.f32.gmra.mrb[0].mxu0 %v916
    %v999 = vpop.f32.mrb[0].mxu0
    %v1000 = vadd.f32 0.0, %v999
    %v1001 = vpop.f32.mrb[0].mxu0
    %1002 = vdwg.mxu0
    %v1003 = vsel %vm60, %v985, 0.0
    %v1004 = vsel %vm60, %v990, 0.0
    %v1005 = vadd.f32 %v1003, %v1004
    %v1006 = vsel %vm60, %v995, 0.0
    %v1007 = vadd.f32 %v1005, %v1006
    %v1008 = vsel %vm60, %v1000, 0.0
    %v1009 = vadd.f32 %v1007, %v1008
    %v1010 = vrot.slane %v1009, 4
    %v1011 = vadd.f32 %v1009, %v1010
    %v1012 = vrot.slane %v1011, 2
    %v1013 = vadd.f32 %v1011, %v1012
    %v1014 = vrot.slane %v1013, 1
    %v1015 = vadd.f32 %v1013, %v1014
    %v1016 = vmul.f32 %v1015, %v293
    %v1017 = vadd.f32 %v1016, 1e-05
    %v1018 = vrsqrt.pop %v1017
    %v1019 = vmul.f32 %v898, %v1018
    %v1020 = vmul.f32 %v899, %v1018
    %v1021 = vmul.f32 %v900, %v1018
    %v1022 = vmul.f32 %v901, %v1018
    %v1023 = vmax.f32 %v1019, 0.0
    %v1024 = vmax.f32 %v1020, 0.0
    %v1025 = vmax.f32 %v1021, 0.0
    %v1026 = vmax.f32 %v1022, 0.0
    %1027 = vst.msk [vmem:[#allocation3 + $0x1] sm:$0xff] %vm60, %v1023
    %1028 = vst.msk [vmem:[#allocation3 + $0x9] sm:$0xff] %vm60, %v1024
    %1029 = vst.msk [vmem:[#allocation3 + $0x19] sm:$0xff] %vm60, %v1025
    %1030 = vst.msk [vmem:[#allocation3 + $0x21] sm:$0xff] %vm60, %v1026
    %v1031 = vld [vmem:[#allocation3] sm:$0xff]
    %v1032 = vld [vmem:[#allocation3 + $0x8] sm:$0xff]
    %v1033 = vld [vmem:[#allocation3 + $0x18] sm:$0xff]
    %v1034 = vld [vmem:[#allocation3 + $0x20] sm:$0xff]
    %v1035 = vpack.c.bf16 %v1032, %v1031
    %v1036 = vpack.c.bf16 %v1034, %v1033
    %v1037 = vld [vmem:[%s3] sm:$0xf]
    %v1038 = vld [vmem:[%s3 + $0x4] sm:$0xf]
    %v1039 = vld [vmem:[%s3 + $0x8] sm:$0xf]
    %v1040 = vld [vmem:[%s3 + $0xc] sm:$0xf]
    %v1041 = vld [vmem:[%s3 + $0x10] sm:$0xf]
    %v1042 = vld [vmem:[%s3 + $0x14] sm:$0xf]
    %v1043 = vld [vmem:[%s3 + $0x18] sm:$0xf]
    %v1044 = vld [vmem:[%s3 + $0x1c] sm:$0xf]
    %v1045 = vld [vmem:[#allocation3 + $0x1] sm:$0xff]
    %v1046 = vld [vmem:[#allocation3 + $0x9] sm:$0xff]
    %v1047 = vld [vmem:[#allocation3 + $0x19] sm:$0xff]
    %v1048 = vld [vmem:[#allocation3 + $0x21] sm:$0xff]
    %v1049 = vpack.c.bf16 %v1046, %v1045
    %v1050 = vpack.c.bf16 %v1048, %v1047
    %s1051 = scalar_lea.vmem %s3, 32
    %v1052 = vld [vmem:[%s1051] sm:$0xf]
    %v1053 = vld [vmem:[%s1051 + $0x4] sm:$0xf]
    %v1054 = vld [vmem:[%s1051 + $0x8] sm:$0xf]
    %v1055 = vld [vmem:[%s1051 + $0xc] sm:$0xf]
    %v1056 = vld [vmem:[%s1051 + $0x10] sm:$0xf]
    %v1057 = vld [vmem:[%s1051 + $0x14] sm:$0xf]
    %v1058 = vld [vmem:[%s1051 + $0x18] sm:$0xf]
    %v1059 = vld [vmem:[%s1051 + $0x1c] sm:$0xf]
    %v1068 = vunpack.c.l.b16 %v1052
    %v1069 = vunpack.c.l.b16 %v1053
    %v1070 = vunpack.c.l.b16 %v1054
    %v1071 = vunpack.c.l.b16 %v1055
    %v1072 = vunpack.c.l.b16 %v1056
    %v1073 = vunpack.c.l.b16 %v1057
    %v1074 = vunpack.c.l.b16 %v1058
    %v1075 = vunpack.c.l.b16 %v1059
    %v1076 = vpack.c.b16 %v1069, %v1068
    %v1077 = vpack.c.b16 %v1071, %v1070
    %v1078 = vpack.c.b16 %v1073, %v1072
    %v1079 = vpack.c.b16 %v1075, %v1074
    %v1085 = vsel %vm60, %v1049, 0
    %v1088 = vsel %vm60, %v1050, 0
    %1090 = vmatprep.subr.bf16.mxu0 0
    %1091 = vmatpush1.bf16.msra.mxu0 %v1076
    %1092 = vmatprep.subr.bf16.mxu0 0
    %1093 = vmatpush1.bf16.msra.mxu0 %v1077
    %1094 = vmatprep.subr.bf16.mxu0 0
    %1095 = vmatpush1.bf16.msra.mxu0 %v1078
    %1096 = vmatprep.subr.bf16.mxu0 0
    %1097 = vmatpush1.bf16.msra.mxu0 %v1079
    %1098 = vmatprep.subr.bf16.mxu0 0
    %1099 = vmatpush1.bf16.msra.mxu0 0
    %1100 = vmatprep.subr.bf16.mxu0 0
    %1101 = vmatpush1.bf16.msra.mxu0 0
    %1102 = vmatprep.subr.bf16.mxu0 0
    %1103 = vmatpush1.bf16.msra.mxu0 0
    %1104 = vmatprep.subr.bf16.mxu0 0
    %1105 = vmatpush1.bf16.msra.mxu0 0
    %1106 = vmatprep.subr.bf16.mxu0 0
    %1107 = vmatpush1.bf16.msra.mxu0 0
    %1108 = vmatprep.subr.bf16.mxu0 0
    %1109 = vmatpush1.bf16.msra.mxu0 0
    %1110 = vmatprep.subr.bf16.mxu0 0
    %1111 = vmatpush1.bf16.msra.mxu0 0
    %1112 = vmatprep.subr.bf16.mxu0 0
    %1113 = vmatpush1.bf16.msra.mxu0 0
    %1114 = vmatprep.subr.bf16.mxu0 0
    %1115 = vmatpush1.bf16.msra.mxu0 0
    %1116 = vmatprep.subr.bf16.mxu0 0
    %1117 = vmatpush1.bf16.msra.mxu0 0
    %1118 = vmatprep.subr.bf16.mxu0 0
    %1119 = vmatpush1.bf16.msra.mxu0 0
    %1120 = vmatprep.subr.bf16.mxu0 0
    %1121 = vmatpush1.bf16.msra.mxu0 0
    %1122 = vmatprep.mubr.bf16.mxu0 0
    %1123 = vmatmul.mubr.bf16.gmra.mrb[0].mxu0 %v1085
    %v1124 = vpop.f32.mrb[0].mxu0
    %v1125 = vadd.f32 0.0, %v1124
    %v1126 = vpop.f32.mrb[0].mxu0
    %v1127 = vpop.f32.mrb[0].mxu0
    %v1128 = vadd.f32 0.0, %v1127
    %v1129 = vpop.f32.mrb[0].mxu0
    %1130 = vmatprep.mubr.bf16.mxu0 0
    %1131 = vmatmul.mubr.bf16.gmra.mrb[0].mxu0 %v1088
    %v1132 = vpop.f32.mrb[0].mxu0
    %v1133 = vadd.f32 0.0, %v1132
    %v1134 = vpop.f32.mrb[0].mxu0
    %v1135 = vpop.f32.mrb[0].mxu0
    %v1136 = vadd.f32 0.0, %v1135
    %v1137 = vpop.f32.mrb[0].mxu0
    %1138 = vdwg.mxu0
    %v1147 = vunpack.c.l.b16 %v1037
    %v1148 = vunpack.c.l.b16 %v1038
    %v1149 = vunpack.c.l.b16 %v1039
    %v1150 = vunpack.c.l.b16 %v1040
    %v1151 = vunpack.c.l.b16 %v1041
    %v1152 = vunpack.c.l.b16 %v1042
    %v1153 = vunpack.c.l.b16 %v1043
    %v1154 = vunpack.c.l.b16 %v1044
    %v1155 = vpack.c.b16 %v1148, %v1147
    %v1156 = vpack.c.b16 %v1150, %v1149
    %v1157 = vpack.c.b16 %v1152, %v1151
    %v1158 = vpack.c.b16 %v1154, %v1153
    %v1164 = vsel %vm60, %v1035, 0
    %v1167 = vsel %vm60, %v1036, 0
    %1169 = vmatprep.subr.bf16.mxu0 0
    %1170 = vmatpush1.bf16.msra.mxu0 %v1155
    %1171 = vmatprep.subr.bf16.mxu0 0
    %1172 = vmatpush1.bf16.msra.mxu0 %v1156
    %1173 = vmatprep.subr.bf16.mxu0 0
    %1174 = vmatpush1.bf16.msra.mxu0 %v1157
    %1175 = vmatprep.subr.bf16.mxu0 0
    %1176 = vmatpush1.bf16.msra.mxu0 %v1158
    %1177 = vmatprep.subr.bf16.mxu0 0
    %1178 = vmatpush1.bf16.msra.mxu0 0
    %1179 = vmatprep.subr.bf16.mxu0 0
    %1180 = vmatpush1.bf16.msra.mxu0 0
    %1181 = vmatprep.subr.bf16.mxu0 0
    %1182 = vmatpush1.bf16.msra.mxu0 0
    %1183 = vmatprep.subr.bf16.mxu0 0
    %1184 = vmatpush1.bf16.msra.mxu0 0
    %1185 = vmatprep.subr.bf16.mxu0 0
    %1186 = vmatpush1.bf16.msra.mxu0 0
    %1187 = vmatprep.subr.bf16.mxu0 0
    %1188 = vmatpush1.bf16.msra.mxu0 0
    %1189 = vmatprep.subr.bf16.mxu0 0
    %1190 = vmatpush1.bf16.msra.mxu0 0
    %1191 = vmatprep.subr.bf16.mxu0 0
    %1192 = vmatpush1.bf16.msra.mxu0 0
    %1193 = vmatprep.subr.bf16.mxu0 0
    %1194 = vmatpush1.bf16.msra.mxu0 0
    %1195 = vmatprep.subr.bf16.mxu0 0
    %1196 = vmatpush1.bf16.msra.mxu0 0
    %1197 = vmatprep.subr.bf16.mxu0 0
    %1198 = vmatpush1.bf16.msra.mxu0 0
    %1199 = vmatprep.subr.bf16.mxu0 0
    %1200 = vmatpush1.bf16.msra.mxu0 0
    %1201 = vmatprep.mubr.bf16.mxu0 0
    %1202 = vmatmul.mubr.bf16.gmra.mrb[0].mxu0 %v1164
    %v1203 = vpop.f32.mrb[0].mxu0
    %v1204 = vadd.f32 %v1125, %v1203
    %v1205 = vpop.f32.mrb[0].mxu0
    %v1206 = vpop.f32.mrb[0].mxu0
    %v1207 = vadd.f32 %v1128, %v1206
    %v1208 = vpop.f32.mrb[0].mxu0
    %1209 = vmatprep.mubr.bf16.mxu0 0
    %1210 = vmatmul.mubr.bf16.gmra.mrb[0].mxu0 %v1167
    %v1211 = vpop.f32.mrb[0].mxu0
    %v1212 = vadd.f32 %v1133, %v1211
    %v1213 = vpop.f32.mrb[0].mxu0
    %v1214 = vpop.f32.mrb[0].mxu0
    %v1215 = vadd.f32 %v1136, %v1214
    %v1216 = vpop.f32.mrb[0].mxu0
    %1217 = vdwg.mxu0
    %v1218 = vld [vmem:[#allocation3 + $0x2] sm:$0xff]
    %v1219 = vld [vmem:[#allocation3 + $0xa] sm:$0xff]
    %v1220 = vld [vmem:[#allocation3 + $0x1a] sm:$0xff]
    %v1221 = vld [vmem:[#allocation3 + $0x22] sm:$0xff]
    %v1222 = vpack.c.bf16 %v1219, %v1218
    %v1223 = vpack.c.bf16 %v1221, %v1220
    %s1224 = scalar_lea.vmem %s3, 64
    %v1225 = vld [vmem:[%s1224] sm:$0xf]
    %v1226 = vld [vmem:[%s1224 + $0x4] sm:$0xf]
    %v1227 = vld [vmem:[%s1224 + $0x8] sm:$0xf]
    %v1228 = vld [vmem:[%s1224 + $0xc] sm:$0xf]
    %v1229 = vld [vmem:[%s1224 + $0x10] sm:$0xf]
    %v1230 = vld [vmem:[%s1224 + $0x14] sm:$0xf]
    %v1231 = vld [vmem:[%s1224 + $0x18] sm:$0xf]
    %v1232 = vld [vmem:[%s1224 + $0x1c] sm:$0xf]
    %v1241 = vunpack.c.l.b16 %v1225
    %v1242 = vunpack.c.l.b16 %v1226
    %v1243 = vunpack.c.l.b16 %v1227
    %v1244 = vunpack.c.l.b16 %v1228
    %v1245 = vunpack.c.l.b16 %v1229
    %v1246 = vunpack.c.l.b16 %v1230
    %v1247 = vunpack.c.l.b16 %v1231
    %v1248 = vunpack.c.l.b16 %v1232
    %v1249 = vpack.c.b16 %v1242, %v1241
    %v1250 = vpack.c.b16 %v1244, %v1243
    %v1251 = vpack.c.b16 %v1246, %v1245
    %v1252 = vpack.c.b16 %v1248, %v1247
    %v1258 = vsel %vm60, %v1222, 0
    %v1261 = vsel %vm60, %v1223, 0
    %1263 = vmatprep.subr.bf16.mxu0 0
    %1264 = vmatpush1.bf16.msra.mxu0 %v1249
    %1265 = vmatprep.subr.bf16.mxu0 0
    %1266 = vmatpush1.bf16.msra.mxu0 %v1250
    %1267 = vmatprep.subr.bf16.mxu0 0
    %1268 = vmatpush1.bf16.msra.mxu0 %v1251
    %1269 = vmatprep.subr.bf16.mxu0 0
    %1270 = vmatpush1.bf16.msra.mxu0 %v1252
    %1271 = vmatprep.subr.bf16.mxu0 0
    %1272 = vmatpush1.bf16.msra.mxu0 0
    %1273 = vmatprep.subr.bf16.mxu0 0
    %1274 = vmatpush1.bf16.msra.mxu0 0
    %1275 = vmatprep.subr.bf16.mxu0 0
    %1276 = vmatpush1.bf16.msra.mxu0 0
    %1277 = vmatprep.subr.bf16.mxu0 0
    %1278 = vmatpush1.bf16.msra.mxu0 0
    %1279 = vmatprep.subr.bf16.mxu0 0
    %1280 = vmatpush1.bf16.msra.mxu0 0
    %1281 = vmatprep.subr.bf16.mxu0 0
    %1282 = vmatpush1.bf16.msra.mxu0 0
    %1283 = vmatprep.subr.bf16.mxu0 0
    %1284 = vmatpush1.bf16.msra.mxu0 0
    %1285 = vmatprep.subr.bf16.mxu0 0
    %1286 = vmatpush1.bf16.msra.mxu0 0
    %1287 = vmatprep.subr.bf16.mxu0 0
    %1288 = vmatpush1.bf16.msra.mxu0 0
    %1289 = vmatprep.subr.bf16.mxu0 0
    %1290 = vmatpush1.bf16.msra.mxu0 0
    %1291 = vmatprep.subr.bf16.mxu0 0
    %1292 = vmatpush1.bf16.msra.mxu0 0
    %1293 = vmatprep.subr.bf16.mxu0 0
    %1294 = vmatpush1.bf16.msra.mxu0 0
    %1295 = vmatprep.mubr.bf16.mxu0 0
    %1296 = vmatmul.mubr.bf16.gmra.mrb[0].mxu0 %v1258
    %v1297 = vpop.f32.mrb[0].mxu0
    %v1298 = vadd.f32 0.0, %v1297
    %v1299 = vpop.f32.mrb[0].mxu0
    %v1300 = vpop.f32.mrb[0].mxu0
    %v1301 = vadd.f32 0.0, %v1300
    %v1302 = vpop.f32.mrb[0].mxu0
    %1303 = vmatprep.mubr.bf16.mxu0 0
    %1304 = vmatmul.mubr.bf16.gmra.mrb[0].mxu0 %v1261
    %v1305 = vpop.f32.mrb[0].mxu0
    %v1306 = vadd.f32 0.0, %v1305
    %v1307 = vpop.f32.mrb[0].mxu0
    %v1308 = vpop.f32.mrb[0].mxu0
    %v1309 = vadd.f32 0.0, %v1308
    %v1310 = vpop.f32.mrb[0].mxu0
    %1311 = vdwg.mxu0
    %v1312 = vadd.f32 %v1204, %v1298
    %v1313 = vadd.f32 %v1207, %v1301
    %v1314 = vadd.f32 %v1212, %v1306
    %v1315 = vadd.f32 %v1215, %v1309
    %v1317 = vsel %vm60, %v1312, 0
    %v1320 = vsel %vm60, %v1313, 0
    %v1323 = vsel %vm60, %v1314, 0
    %v1326 = vsel %vm60, %v1315, 0
    %1328 = vmatprep.subr.mxu0 0.0
    %1329 = vmatpush1.msra.mxu0 %v42
    %1330 = vmatprep.subr.mxu0 0.0
    %1331 = vmatpush1.msra.mxu0 %v43
    %1332 = vmatprep.subr.mxu0 0.0
    %1333 = vmatpush1.msra.mxu0 %v44
    %1334 = vmatprep.subr.mxu0 0.0
    %1335 = vmatpush1.msra.mxu0 %v45
    %1336 = vmatprep.subr.mxu0 0.0
    %1337 = vmatpush1.msra.mxu0 %v46
    %1338 = vmatprep.subr.mxu0 0.0
    %1339 = vmatpush1.msra.mxu0 %v47
    %1340 = vmatprep.subr.mxu0 0.0
    %1341 = vmatpush1.msra.mxu0 %v48
    %1342 = vmatprep.subr.mxu0 0.0
    %1343 = vmatpush1.msra.mxu0 %v49
    %1344 = vmatprep.subr.mxu0 0.0
    %1345 = vmatpush1.msra.mxu0 0.0
    %1346 = vmatprep.subr.mxu0 0.0
    %1347 = vmatpush1.msra.mxu0 0.0
    %1348 = vmatprep.subr.mxu0 0.0
    %1349 = vmatpush1.msra.mxu0 0.0
    %1350 = vmatprep.subr.mxu0 0.0
    %1351 = vmatpush1.msra.mxu0 0.0
    %1352 = vmatprep.subr.mxu0 0.0
    %1353 = vmatpush1.msra.mxu0 0.0
    %1354 = vmatprep.subr.mxu0 0.0
    %1355 = vmatpush1.msra.mxu0 0.0
    %1356 = vmatprep.subr.mxu0 0.0
    %1357 = vmatpush1.msra.mxu0 0.0
    %1358 = vmatprep.subr.mxu0 0.0
    %1359 = vmatpush1.msra.mxu0 0.0
    %1360 = vmatprep.subr.mxu0 0.0
    %1361 = vmatpush1.msra.mxu0 0.0
    %1362 = vmatprep.subr.mxu0 0.0
    %1363 = vmatpush1.msra.mxu0 0.0
    %1364 = vmatprep.subr.mxu0 0.0
    %1365 = vmatpush1.msra.mxu0 0.0
    %1366 = vmatprep.subr.mxu0 0.0
    %1367 = vmatpush1.msra.mxu0 0.0
    %1368 = vmatprep.subr.mxu0 0.0
    %1369 = vmatpush1.msra.mxu0 0.0
    %1370 = vmatprep.subr.mxu0 0.0
    %1371 = vmatpush1.msra.mxu0 0.0
    %1372 = vmatprep.subr.mxu0 0.0
    %1373 = vmatpush1.msra.mxu0 0.0
    %1374 = vmatprep.subr.mxu0 0.0
    %1375 = vmatpush1.msra.mxu0 0.0
    %1376 = vmatprep.subr.mxu0 0.0
    %1377 = vmatpush1.msra.mxu0 0.0
    %1378 = vmatprep.subr.mxu0 0.0
    %1379 = vmatpush1.msra.mxu0 0.0
    %1380 = vmatprep.subr.mxu0 0.0
    %1381 = vmatpush1.msra.mxu0 0.0
    %1382 = vmatprep.subr.mxu0 0.0
    %1383 = vmatpush1.msra.mxu0 0.0
    %1384 = vmatprep.subr.mxu0 0.0
    %1385 = vmatpush1.msra.mxu0 0.0
    %1386 = vmatprep.subr.mxu0 0.0
    %1387 = vmatpush1.msra.mxu0 0.0
    %1388 = vmatprep.subr.mxu0 0.0
    %1389 = vmatpush1.msra.mxu0 0.0
    %1390 = vmatprep.subr.mxu0 0.0
    %1391 = vmatpush1.msra.mxu0 0.0
    %1392 = vmatprep.mubr.f32.mxu0 0.0
    %1393 = vmatmul.mubr.f32.gmra.mrb[0].mxu0 %v1317
    %v1394 = vpop.f32.mrb[0].mxu0
    %v1395 = vadd.f32 0.0, %v1394
    %v1396 = vpop.f32.mrb[0].mxu0
    %1397 = vmatprep.mubr.f32.mxu0 0.0
    %1398 = vmatmul.mubr.f32.gmra.mrb[0].mxu0 %v1320
    %v1399 = vpop.f32.mrb[0].mxu0
    %v1400 = vadd.f32 0.0, %v1399
    %v1401 = vpop.f32.mrb[0].mxu0
    %1402 = vmatprep.mubr.f32.mxu0 0.0
    %1403 = vmatmul.mubr.f32.gmra.mrb[0].mxu0 %v1323
    %v1404 = vpop.f32.mrb[0].mxu0
    %v1405 = vadd.f32 0.0, %v1404
    %v1406 = vpop.f32.mrb[0].mxu0
    %1407 = vmatprep.mubr.f32.mxu0 0.0
    %1408 = vmatmul.mubr.f32.gmra.mrb[0].mxu0 %v1326
    %v1409 = vpop.f32.mrb[0].mxu0
    %v1410 = vadd.f32 0.0, %v1409
    %v1411 = vpop.f32.mrb[0].mxu0
    %1412 = vdwg.mxu0
    %v1413 = vsel %vm60, %v1395, 0.0
    %v1414 = vsel %vm60, %v1400, 0.0
    %v1415 = vadd.f32 %v1413, %v1414
    %v1416 = vsel %vm60, %v1405, 0.0
    %v1417 = vadd.f32 %v1415, %v1416
    %v1418 = vsel %vm60, %v1410, 0.0
    %v1419 = vadd.f32 %v1417, %v1418
    %v1420 = vrot.slane %v1419, 4
    %v1421 = vadd.f32 %v1419, %v1420
    %v1422 = vrot.slane %v1421, 2
    %v1423 = vadd.f32 %v1421, %v1422
    %v1424 = vrot.slane %v1423, 1
    %v1425 = vadd.f32 %v1423, %v1424
    %v1426 = vmul.f32 %v1425, %v293
    %v1427 = vsub.f32 %v1312, %v1426
    %v1428 = vsub.f32 %v1313, %v1426
    %v1429 = vsub.f32 %v1314, %v1426
    %v1430 = vsub.f32 %v1315, %v1426
    %v1431 = vmul.f32 %v1427, %v1427
    %v1432 = vmul.f32 %v1428, %v1428
    %v1433 = vmul.f32 %v1429, %v1429
    %v1434 = vmul.f32 %v1430, %v1430
    %v1436 = vsel %vm60, %v1431, 0
    %v1439 = vsel %vm60, %v1432, 0
    %v1442 = vsel %vm60, %v1433, 0
    %v1445 = vsel %vm60, %v1434, 0
    %1447 = vmatprep.subr.mxu0 0.0
    %1448 = vmatpush1.msra.mxu0 %v42
    %1449 = vmatprep.subr.mxu0 0.0
    %1450 = vmatpush1.msra.mxu0 %v43
    %1451 = vmatprep.subr.mxu0 0.0
    %1452 = vmatpush1.msra.mxu0 %v44
    %1453 = vmatprep.subr.mxu0 0.0
    %1454 = vmatpush1.msra.mxu0 %v45
    %1455 = vmatprep.subr.mxu0 0.0
    %1456 = vmatpush1.msra.mxu0 %v46
    %1457 = vmatprep.subr.mxu0 0.0
    %1458 = vmatpush1.msra.mxu0 %v47
    %1459 = vmatprep.subr.mxu0 0.0
    %1460 = vmatpush1.msra.mxu0 %v48
    %1461 = vmatprep.subr.mxu0 0.0
    %1462 = vmatpush1.msra.mxu0 %v49
    %1463 = vmatprep.subr.mxu0 0.0
    %1464 = vmatpush1.msra.mxu0 0.0
    %1465 = vmatprep.subr.mxu0 0.0
    %1466 = vmatpush1.msra.mxu0 0.0
    %1467 = vmatprep.subr.mxu0 0.0
    %1468 = vmatpush1.msra.mxu0 0.0
    %1469 = vmatprep.subr.mxu0 0.0
    %1470 = vmatpush1.msra.mxu0 0.0
    %1471 = vmatprep.subr.mxu0 0.0
    %1472 = vmatpush1.msra.mxu0 0.0
    %1473 = vmatprep.subr.mxu0 0.0
    %1474 = vmatpush1.msra.mxu0 0.0
    %1475 = vmatprep.subr.mxu0 0.0
    %1476 = vmatpush1.msra.mxu0 0.0
    %1477 = vmatprep.subr.mxu0 0.0
    %1478 = vmatpush1.msra.mxu0 0.0
    %1479 = vmatprep.subr.mxu0 0.0
    %1480 = vmatpush1.msra.mxu0 0.0
    %1481 = vmatprep.subr.mxu0 0.0
    %1482 = vmatpush1.msra.mxu0 0.0
    %1483 = vmatprep.subr.mxu0 0.0
    %1484 = vmatpush1.msra.mxu0 0.0
    %1485 = vmatprep.subr.mxu0 0.0
    %1486 = vmatpush1.msra.mxu0 0.0
    %1487 = vmatprep.subr.mxu0 0.0
    %1488 = vmatpush1.msra.mxu0 0.0
    %1489 = vmatprep.subr.mxu0 0.0
    %1490 = vmatpush1.msra.mxu0 0.0
    %1491 = vmatprep.subr.mxu0 0.0
    %1492 = vmatpush1.msra.mxu0 0.0
    %1493 = vmatprep.subr.mxu0 0.0
    %1494 = vmatpush1.msra.mxu0 0.0
    %1495 = vmatprep.subr.mxu0 0.0
    %1496 = vmatpush1.msra.mxu0 0.0
    %1497 = vmatprep.subr.mxu0 0.0
    %1498 = vmatpush1.msra.mxu0 0.0
    %1499 = vmatprep.subr.mxu0 0.0
    %1500 = vmatpush1.msra.mxu0 0.0
    %1501 = vmatprep.subr.mxu0 0.0
    %1502 = vmatpush1.msra.mxu0 0.0
    %1503 = vmatprep.subr.mxu0 0.0
    %1504 = vmatpush1.msra.mxu0 0.0
    %1505 = vmatprep.subr.mxu0 0.0
    %1506 = vmatpush1.msra.mxu0 0.0
    %1507 = vmatprep.subr.mxu0 0.0
    %1508 = vmatpush1.msra.mxu0 0.0
    %1509 = vmatprep.subr.mxu0 0.0
    %1510 = vmatpush1.msra.mxu0 0.0
    %1511 = vmatprep.mubr.f32.mxu0 0.0
    %1512 = vmatmul.mubr.f32.gmra.mrb[0].mxu0 %v1436
    %v1513 = vpop.f32.mrb[0].mxu0
    %v1514 = vadd.f32 0.0, %v1513
    %v1515 = vpop.f32.mrb[0].mxu0
    %1516 = vmatprep.mubr.f32.mxu0 0.0
    %1517 = vmatmul.mubr.f32.gmra.mrb[0].mxu0 %v1439
    %v1518 = vpop.f32.mrb[0].mxu0
    %v1519 = vadd.f32 0.0, %v1518
    %v1520 = vpop.f32.mrb[0].mxu0
    %1521 = vmatprep.mubr.f32.mxu0 0.0
    %1522 = vmatmul.mubr.f32.gmra.mrb[0].mxu0 %v1442
    %v1523 = vpop.f32.mrb[0].mxu0
    %v1524 = vadd.f32 0.0, %v1523
    %v1525 = vpop.f32.mrb[0].mxu0
    %1526 = vmatprep.mubr.f32.mxu0 0.0
    %1527 = vmatmul.mubr.f32.gmra.mrb[0].mxu0 %v1445
    %v1528 = vpop.f32.mrb[0].mxu0
    %v1529 = vadd.f32 0.0, %v1528
    %v1530 = vpop.f32.mrb[0].mxu0
    %1531 = vdwg.mxu0
    %v1532 = vsel %vm60, %v1514, 0.0
    %v1533 = vsel %vm60, %v1519, 0.0
    %v1534 = vadd.f32 %v1532, %v1533
    %v1535 = vsel %vm60, %v1524, 0.0
    %v1536 = vadd.f32 %v1534, %v1535
    %v1537 = vsel %vm60, %v1529, 0.0
    %v1538 = vadd.f32 %v1536, %v1537
    %v1539 = vrot.slane %v1538, 4
    %v1540 = vadd.f32 %v1538, %v1539
    %v1541 = vrot.slane %v1540, 2
    %v1542 = vadd.f32 %v1540, %v1541
    %v1543 = vrot.slane %v1542, 1
    %v1544 = vadd.f32 %v1542, %v1543
    %v1545 = vmul.f32 %v1544, %v293
    %v1546 = vadd.f32 %v1545, 1e-05
    %v1547 = vrsqrt.pop %v1546
    %v1548 = vmul.f32 %v1427, %v1547
    %v1549 = vmul.f32 %v1428, %v1547
    %v1550 = vmul.f32 %v1429, %v1547
    %v1551 = vmul.f32 %v1430, %v1547
    %v1552 = vadd.f32 %v1548, %v416
    %v1553 = vadd.f32 %v1549, %v417
    %v1554 = vadd.f32 %v1550, %v418
    %v1555 = vadd.f32 %v1551, %v419
    %v1556 = vmax.f32 %v1552, 0.0
    %v1557 = vmax.f32 %v1553, 0.0
    %v1558 = vmax.f32 %v1554, 0.0
    %v1559 = vmax.f32 %v1555, 0.0
    %1560 = vst.msk [vmem:[#allocation3 + $0x1] sm:$0xff] %vm60, %v1556
    %1561 = vst.msk [vmem:[#allocation3 + $0x9] sm:$0xff] %vm60, %v1557
    %1562 = vst.msk [vmem:[#allocation3 + $0x19] sm:$0xff] %vm60, %v1558
    %1563 = vst.msk [vmem:[#allocation3 + $0x21] sm:$0xff] %vm60, %v1559
    %v1564 = vld [vmem:[#allocation3] sm:$0xff]
    %v1565 = vld [vmem:[#allocation3 + $0x8] sm:$0xff]
    %v1566 = vld [vmem:[#allocation3 + $0x18] sm:$0xff]
    %v1567 = vld [vmem:[#allocation3 + $0x20] sm:$0xff]
    %v1568 = vpack.c.bf16 %v1565, %v1564
    %v1569 = vpack.c.bf16 %v1567, %v1566
    %v1570 = vld [vmem:[%s4] sm:$0xf]
    %v1571 = vld [vmem:[%s4 + $0x4] sm:$0xf]
    %v1572 = vld [vmem:[%s4 + $0x8] sm:$0xf]
    %v1573 = vld [vmem:[%s4 + $0xc] sm:$0xf]
    %v1574 = vld [vmem:[%s4 + $0x10] sm:$0xf]
    %v1575 = vld [vmem:[%s4 + $0x14] sm:$0xf]
    %v1576 = vld [vmem:[%s4 + $0x18] sm:$0xf]
    %v1577 = vld [vmem:[%s4 + $0x1c] sm:$0xf]
    %v1578 = vld [vmem:[#allocation3 + $0x1] sm:$0xff]
    %v1579 = vld [vmem:[#allocation3 + $0x9] sm:$0xff]
    %v1580 = vld [vmem:[#allocation3 + $0x19] sm:$0xff]
    %v1581 = vld [vmem:[#allocation3 + $0x21] sm:$0xff]
    %v1582 = vpack.c.bf16 %v1579, %v1578
    %v1583 = vpack.c.bf16 %v1581, %v1580
    %s1584 = scalar_lea.vmem %s4, 32
    %v1585 = vld [vmem:[%s1584] sm:$0xf]
    %v1586 = vld [vmem:[%s1584 + $0x4] sm:$0xf]
    %v1587 = vld [vmem:[%s1584 + $0x8] sm:$0xf]
    %v1588 = vld [vmem:[%s1584 + $0xc] sm:$0xf]
    %v1589 = vld [vmem:[%s1584 + $0x10] sm:$0xf]
    %v1590 = vld [vmem:[%s1584 + $0x14] sm:$0xf]
    %v1591 = vld [vmem:[%s1584 + $0x18] sm:$0xf]
    %v1592 = vld [vmem:[%s1584 + $0x1c] sm:$0xf]
    %v1601 = vunpack.c.l.b16 %v1585
    %v1602 = vunpack.c.l.b16 %v1586
    %v1603 = vunpack.c.l.b16 %v1587
    %v1604 = vunpack.c.l.b16 %v1588
    %v1605 = vunpack.c.l.b16 %v1589
    %v1606 = vunpack.c.l.b16 %v1590
    %v1607 = vunpack.c.l.b16 %v1591
    %v1608 = vunpack.c.l.b16 %v1592
    %v1609 = vpack.c.b16 %v1602, %v1601
    %v1610 = vpack.c.b16 %v1604, %v1603
    %v1611 = vpack.c.b16 %v1606, %v1605
    %v1612 = vpack.c.b16 %v1608, %v1607
    %v1618 = vsel %vm60, %v1582, 0
    %v1621 = vsel %vm60, %v1583, 0
    %1623 = vmatprep.subr.bf16.mxu0 0
    %1624 = vmatpush1.bf16.msra.mxu0 %v1609
    %1625 = vmatprep.subr.bf16.mxu0 0
    %1626 = vmatpush1.bf16.msra.mxu0 %v1610
    %1627 = vmatprep.subr.bf16.mxu0 0
    %1628 = vmatpush1.bf16.msra.mxu0 %v1611
    %1629 = vmatprep.subr.bf16.mxu0 0
    %1630 = vmatpush1.bf16.msra.mxu0 %v1612
    %1631 = vmatprep.subr.bf16.mxu0 0
    %1632 = vmatpush1.bf16.msra.mxu0 0
    %1633 = vmatprep.subr.bf16.mxu0 0
    %1634 = vmatpush1.bf16.msra.mxu0 0
    %1635 = vmatprep.subr.bf16.mxu0 0
    %1636 = vmatpush1.bf16.msra.mxu0 0
    %1637 = vmatprep.subr.bf16.mxu0 0
    %1638 = vmatpush1.bf16.msra.mxu0 0
    %1639 = vmatprep.subr.bf16.mxu0 0
    %1640 = vmatpush1.bf16.msra.mxu0 0
    %1641 = vmatprep.subr.bf16.mxu0 0
    %1642 = vmatpush1.bf16.msra.mxu0 0
    %1643 = vmatprep.subr.bf16.mxu0 0
    %1644 = vmatpush1.bf16.msra.mxu0 0
    %1645 = vmatprep.subr.bf16.mxu0 0
    %1646 = vmatpush1.bf16.msra.mxu0 0
    %1647 = vmatprep.subr.bf16.mxu0 0
    %1648 = vmatpush1.bf16.msra.mxu0 0
    %1649 = vmatprep.subr.bf16.mxu0 0
    %1650 = vmatpush1.bf16.msra.mxu0 0
    %1651 = vmatprep.subr.bf16.mxu0 0
    %1652 = vmatpush1.bf16.msra.mxu0 0
    %1653 = vmatprep.subr.bf16.mxu0 0
    %1654 = vmatpush1.bf16.msra.mxu0 0
    %1655 = vmatprep.mubr.bf16.mxu0 0
    %1656 = vmatmul.mubr.bf16.gmra.mrb[0].mxu0 %v1618
    %v1657 = vpop.f32.mrb[0].mxu0
    %v1658 = vadd.f32 0.0, %v1657
    %v1659 = vpop.f32.mrb[0].mxu0
    %v1660 = vpop.f32.mrb[0].mxu0
    %v1661 = vadd.f32 0.0, %v1660
    %v1662 = vpop.f32.mrb[0].mxu0
    %1663 = vmatprep.mubr.bf16.mxu0 0
    %1664 = vmatmul.mubr.bf16.gmra.mrb[0].mxu0 %v1621
    %v1665 = vpop.f32.mrb[0].mxu0
    %v1666 = vadd.f32 0.0, %v1665
    %v1667 = vpop.f32.mrb[0].mxu0
    %v1668 = vpop.f32.mrb[0].mxu0
    %v1669 = vadd.f32 0.0, %v1668
    %v1670 = vpop.f32.mrb[0].mxu0
    %1671 = vdwg.mxu0
    %v1680 = vunpack.c.l.b16 %v1570
    %v1681 = vunpack.c.l.b16 %v1571
    %v1682 = vunpack.c.l.b16 %v1572
    %v1683 = vunpack.c.l.b16 %v1573
    %v1684 = vunpack.c.l.b16 %v1574
    %v1685 = vunpack.c.l.b16 %v1575
    %v1686 = vunpack.c.l.b16 %v1576
    %v1687 = vunpack.c.l.b16 %v1577
    %v1688 = vpack.c.b16 %v1681, %v1680
    %v1689 = vpack.c.b16 %v1683, %v1682
    %v1690 = vpack.c.b16 %v1685, %v1684
    %v1691 = vpack.c.b16 %v1687, %v1686
    %v1697 = vsel %vm60, %v1568, 0
    %v1700 = vsel %vm60, %v1569, 0
    %1702 = vmatprep.subr.bf16.mxu0 0
    %1703 = vmatpush1.bf16.msra.mxu0 %v1688
    %1704 = vmatprep.subr.bf16.mxu0 0
    %1705 = vmatpush1.bf16.msra.mxu0 %v1689
    %1706 = vmatprep.subr.bf16.mxu0 0
    %1707 = vmatpush1.bf16.msra.mxu0 %v1690
    %1708 = vmatprep.subr.bf16.mxu0 0
    %1709 = vmatpush1.bf16.msra.mxu0 %v1691
    %1710 = vmatprep.subr.bf16.mxu0 0
    %1711 = vmatpush1.bf16.msra.mxu0 0
    %1712 = vmatprep.subr.bf16.mxu0 0
    %1713 = vmatpush1.bf16.msra.mxu0 0
    %1714 = vmatprep.subr.bf16.mxu0 0
    %1715 = vmatpush1.bf16.msra.mxu0 0
    %1716 = vmatprep.subr.bf16.mxu0 0
    %1717 = vmatpush1.bf16.msra.mxu0 0
    %1718 = vmatprep.subr.bf16.mxu0 0
    %1719 = vmatpush1.bf16.msra.mxu0 0
    %1720 = vmatprep.subr.bf16.mxu0 0
    %1721 = vmatpush1.bf16.msra.mxu0 0
    %1722 = vmatprep.subr.bf16.mxu0 0
    %1723 = vmatpush1.bf16.msra.mxu0 0
    %1724 = vmatprep.subr.bf16.mxu0 0
    %1725 = vmatpush1.bf16.msra.mxu0 0
    %1726 = vmatprep.subr.bf16.mxu0 0
    %1727 = vmatpush1.bf16.msra.mxu0 0
    %1728 = vmatprep.subr.bf16.mxu0 0
    %1729 = vmatpush1.bf16.msra.mxu0 0
    %1730 = vmatprep.subr.bf16.mxu0 0
    %1731 = vmatpush1.bf16.msra.mxu0 0
    %1732 = vmatprep.subr.bf16.mxu0 0
    %1733 = vmatpush1.bf16.msra.mxu0 0
    %1734 = vmatprep.mubr.bf16.mxu0 0
    %1735 = vmatmul.mubr.bf16.gmra.mrb[0].mxu0 %v1697
    %v1736 = vpop.f32.mrb[0].mxu0
    %v1737 = vadd.f32 %v1658, %v1736
    %v1738 = vpop.f32.mrb[0].mxu0
    %v1739 = vpop.f32.mrb[0].mxu0
    %v1740 = vadd.f32 %v1661, %v1739
    %v1741 = vpop.f32.mrb[0].mxu0
    %1742 = vmatprep.mubr.bf16.mxu0 0
    %1743 = vmatmul.mubr.bf16.gmra.mrb[0].mxu0 %v1700
    %v1744 = vpop.f32.mrb[0].mxu0
    %v1745 = vadd.f32 %v1666, %v1744
    %v1746 = vpop.f32.mrb[0].mxu0
    %v1747 = vpop.f32.mrb[0].mxu0
    %v1748 = vadd.f32 %v1669, %v1747
    %v1749 = vpop.f32.mrb[0].mxu0
    %1750 = vdwg.mxu0
    %v1751 = vld [vmem:[#allocation3 + $0x2] sm:$0xff]
    %v1752 = vld [vmem:[#allocation3 + $0xa] sm:$0xff]
    %v1753 = vld [vmem:[#allocation3 + $0x1a] sm:$0xff]
    %v1754 = vld [vmem:[#allocation3 + $0x22] sm:$0xff]
    %v1755 = vpack.c.bf16 %v1752, %v1751
    %v1756 = vpack.c.bf16 %v1754, %v1753
    %s1757 = scalar_lea.vmem %s4, 64
    %v1758 = vld [vmem:[%s1757] sm:$0xf]
    %v1759 = vld [vmem:[%s1757 + $0x4] sm:$0xf]
    %v1760 = vld [vmem:[%s1757 + $0x8] sm:$0xf]
    %v1761 = vld [vmem:[%s1757 + $0xc] sm:$0xf]
    %v1762 = vld [vmem:[%s1757 + $0x10] sm:$0xf]
    %v1763 = vld [vmem:[%s1757 + $0x14] sm:$0xf]
    %v1764 = vld [vmem:[%s1757 + $0x18] sm:$0xf]
    %v1765 = vld [vmem:[%s1757 + $0x1c] sm:$0xf]
    %v1774 = vunpack.c.l.b16 %v1758
    %v1775 = vunpack.c.l.b16 %v1759
    %v1776 = vunpack.c.l.b16 %v1760
    %v1777 = vunpack.c.l.b16 %v1761
    %v1778 = vunpack.c.l.b16 %v1762
    %v1779 = vunpack.c.l.b16 %v1763
    %v1780 = vunpack.c.l.b16 %v1764
    %v1781 = vunpack.c.l.b16 %v1765
    %v1782 = vpack.c.b16 %v1775, %v1774
    %v1783 = vpack.c.b16 %v1777, %v1776
    %v1784 = vpack.c.b16 %v1779, %v1778
    %v1785 = vpack.c.b16 %v1781, %v1780
    %v1791 = vsel %vm60, %v1755, 0
    %v1794 = vsel %vm60, %v1756, 0
    %1796 = vmatprep.subr.bf16.mxu0 0
    %1797 = vmatpush1.bf16.msra.mxu0 %v1782
    %1798 = vmatprep.subr.bf16.mxu0 0
    %1799 = vmatpush1.bf16.msra.mxu0 %v1783
    %1800 = vmatprep.subr.bf16.mxu0 0
    %1801 = vmatpush1.bf16.msra.mxu0 %v1784
    %1802 = vmatprep.subr.bf16.mxu0 0
    %1803 = vmatpush1.bf16.msra.mxu0 %v1785
    %1804 = vmatprep.subr.bf16.mxu0 0
    %1805 = vmatpush1.bf16.msra.mxu0 0
    %1806 = vmatprep.subr.bf16.mxu0 0
    %1807 = vmatpush1.bf16.msra.mxu0 0
    %1808 = vmatprep.subr.bf16.mxu0 0
    %1809 = vmatpush1.bf16.msra.mxu0 0
    %1810 = vmatprep.subr.bf16.mxu0 0
    %1811 = vmatpush1.bf16.msra.mxu0 0
    %1812 = vmatprep.subr.bf16.mxu0 0
    %1813 = vmatpush1.bf16.msra.mxu0 0
    %1814 = vmatprep.subr.bf16.mxu0 0
    %1815 = vmatpush1.bf16.msra.mxu0 0
    %1816 = vmatprep.subr.bf16.mxu0 0
    %1817 = vmatpush1.bf16.msra.mxu0 0
    %1818 = vmatprep.subr.bf16.mxu0 0
    %1819 = vmatpush1.bf16.msra.mxu0 0
    %1820 = vmatprep.subr.bf16.mxu0 0
    %1821 = vmatpush1.bf16.msra.mxu0 0
    %1822 = vmatprep.subr.bf16.mxu0 0
    %1823 = vmatpush1.bf16.msra.mxu0 0
    %1824 = vmatprep.subr.bf16.mxu0 0
    %1825 = vmatpush1.bf16.msra.mxu0 0
    %1826 = vmatprep.subr.bf16.mxu0 0
    %1827 = vmatpush1.bf16.msra.mxu0 0
    %1828 = vmatprep.mubr.bf16.mxu0 0
    %1829 = vmatmul.mubr.bf16.gmra.mrb[0].mxu0 %v1791
    %v1830 = vpop.f32.mrb[0].mxu0
    %v1831 = vadd.f32 0.0, %v1830
    %v1832 = vpop.f32.mrb[0].mxu0
    %v1833 = vpop.f32.mrb[0].mxu0
    %v1834 = vadd.f32 0.0, %v1833
    %v1835 = vpop.f32.mrb[0].mxu0
    %1836 = vmatprep.mubr.bf16.mxu0 0
    %1837 = vmatmul.mubr.bf16.gmra.mrb[0].mxu0 %v1794
    %v1838 = vpop.f32.mrb[0].mxu0
    %v1839 = vadd.f32 0.0, %v1838
    %v1840 = vpop.f32.mrb[0].mxu0
    %v1841 = vpop.f32.mrb[0].mxu0
    %v1842 = vadd.f32 0.0, %v1841
    %v1843 = vpop.f32.mrb[0].mxu0
    %1844 = vdwg.mxu0
    %v1845 = vadd.f32 %v1737, %v1831
    %v1846 = vadd.f32 %v1740, %v1834
    %v1847 = vadd.f32 %v1745, %v1839
    %v1848 = vadd.f32 %v1748, %v1842
    %v1850 = vsel %vm60, %v1845, 0
    %v1853 = vsel %vm60, %v1846, 0
    %v1856 = vsel %vm60, %v1847, 0
    %v1859 = vsel %vm60, %v1848, 0
    %1861 = vmatprep.subr.mxu0 0.0
    %1862 = vmatpush1.msra.mxu0 %v42
    %1863 = vmatprep.subr.mxu0 0.0
    %1864 = vmatpush1.msra.mxu0 %v43
    %1865 = vmatprep.subr.mxu0 0.0
    %1866 = vmatpush1.msra.mxu0 %v44
    %1867 = vmatprep.subr.mxu0 0.0
    %1868 = vmatpush1.msra.mxu0 %v45
    %1869 = vmatprep.subr.mxu0 0.0
    %1870 = vmatpush1.msra.mxu0 %v46
    %1871 = vmatprep.subr.mxu0 0.0
    %1872 = vmatpush1.msra.mxu0 %v47
    %1873 = vmatprep.subr.mxu0 0.0
    %1874 = vmatpush1.msra.mxu0 %v48
    %1875 = vmatprep.subr.mxu0 0.0
    %1876 = vmatpush1.msra.mxu0 %v49
    %1877 = vmatprep.subr.mxu0 0.0
    %1878 = vmatpush1.msra.mxu0 0.0
    %1879 = vmatprep.subr.mxu0 0.0
    %1880 = vmatpush1.msra.mxu0 0.0
    %1881 = vmatprep.subr.mxu0 0.0
    %1882 = vmatpush1.msra.mxu0 0.0
    %1883 = vmatprep.subr.mxu0 0.0
    %1884 = vmatpush1.msra.mxu0 0.0
    %1885 = vmatprep.subr.mxu0 0.0
    %1886 = vmatpush1.msra.mxu0 0.0
    %1887 = vmatprep.subr.mxu0 0.0
    %1888 = vmatpush1.msra.mxu0 0.0
    %1889 = vmatprep.subr.mxu0 0.0
    %1890 = vmatpush1.msra.mxu0 0.0
    %1891 = vmatprep.subr.mxu0 0.0
    %1892 = vmatpush1.msra.mxu0 0.0
    %1893 = vmatprep.subr.mxu0 0.0
    %1894 = vmatpush1.msra.mxu0 0.0
    %1895 = vmatprep.subr.mxu0 0.0
    %1896 = vmatpush1.msra.mxu0 0.0
    %1897 = vmatprep.subr.mxu0 0.0
    %1898 = vmatpush1.msra.mxu0 0.0
    %1899 = vmatprep.subr.mxu0 0.0
    %1900 = vmatpush1.msra.mxu0 0.0
    %1901 = vmatprep.subr.mxu0 0.0
    %1902 = vmatpush1.msra.mxu0 0.0
    %1903 = vmatprep.subr.mxu0 0.0
    %1904 = vmatpush1.msra.mxu0 0.0
    %1905 = vmatprep.subr.mxu0 0.0
    %1906 = vmatpush1.msra.mxu0 0.0
    %1907 = vmatprep.subr.mxu0 0.0
    %1908 = vmatpush1.msra.mxu0 0.0
    %1909 = vmatprep.subr.mxu0 0.0
    %1910 = vmatpush1.msra.mxu0 0.0
    %1911 = vmatprep.subr.mxu0 0.0
    %1912 = vmatpush1.msra.mxu0 0.0
    %1913 = vmatprep.subr.mxu0 0.0
    %1914 = vmatpush1.msra.mxu0 0.0
    %1915 = vmatprep.subr.mxu0 0.0
    %1916 = vmatpush1.msra.mxu0 0.0
    %1917 = vmatprep.subr.mxu0 0.0
    %1918 = vmatpush1.msra.mxu0 0.0
    %1919 = vmatprep.subr.mxu0 0.0
    %1920 = vmatpush1.msra.mxu0 0.0
    %1921 = vmatprep.subr.mxu0 0.0
    %1922 = vmatpush1.msra.mxu0 0.0
    %1923 = vmatprep.subr.mxu0 0.0
    %1924 = vmatpush1.msra.mxu0 0.0
    %1925 = vmatprep.mubr.f32.mxu0 0.0
    %1926 = vmatmul.mubr.f32.gmra.mrb[0].mxu0 %v1850
    %v1927 = vpop.f32.mrb[0].mxu0
    %v1928 = vadd.f32 0.0, %v1927
    %v1929 = vpop.f32.mrb[0].mxu0
    %1930 = vmatprep.mubr.f32.mxu0 0.0
    %1931 = vmatmul.mubr.f32.gmra.mrb[0].mxu0 %v1853
    %v1932 = vpop.f32.mrb[0].mxu0
    %v1933 = vadd.f32 0.0, %v1932
    %v1934 = vpop.f32.mrb[0].mxu0
    %1935 = vmatprep.mubr.f32.mxu0 0.0
    %1936 = vmatmul.mubr.f32.gmra.mrb[0].mxu0 %v1856
    %v1937 = vpop.f32.mrb[0].mxu0
    %v1938 = vadd.f32 0.0, %v1937
    %v1939 = vpop.f32.mrb[0].mxu0
    %1940 = vmatprep.mubr.f32.mxu0 0.0
    %1941 = vmatmul.mubr.f32.gmra.mrb[0].mxu0 %v1859
    %v1942 = vpop.f32.mrb[0].mxu0
    %v1943 = vadd.f32 0.0, %v1942
    %v1944 = vpop.f32.mrb[0].mxu0
    %1945 = vdwg.mxu0
    %v1946 = vsel %vm60, %v1928, 0.0
    %v1947 = vsel %vm60, %v1933, 0.0
    %v1948 = vadd.f32 %v1946, %v1947
    %v1949 = vsel %vm60, %v1938, 0.0
    %v1950 = vadd.f32 %v1948, %v1949
    %v1951 = vsel %vm60, %v1943, 0.0
    %v1952 = vadd.f32 %v1950, %v1951
    %v1953 = vrot.slane %v1952, 4
    %v1954 = vadd.f32 %v1952, %v1953
    %v1955 = vrot.slane %v1954, 2
    %v1956 = vadd.f32 %v1954, %v1955
    %v1957 = vrot.slane %v1956, 1
    %v1958 = vadd.f32 %v1956, %v1957
    %v1959 = vmul.f32 %v1958, %v293
    %v1960 = vsub.f32 %v1845, %v1959
    %v1961 = vsub.f32 %v1846, %v1959
    %v1962 = vsub.f32 %v1847, %v1959
    %v1963 = vsub.f32 %v1848, %v1959
    %v1964 = vmul.f32 %v1960, %v1960
    %v1965 = vmul.f32 %v1961, %v1961
    %v1966 = vmul.f32 %v1962, %v1962
    %v1967 = vmul.f32 %v1963, %v1963
    %v1969 = vsel %vm60, %v1964, 0
    %v1972 = vsel %vm60, %v1965, 0
    %v1975 = vsel %vm60, %v1966, 0
    %v1978 = vsel %vm60, %v1967, 0
    %1980 = vmatprep.subr.mxu0 0.0
    %1981 = vmatpush1.msra.mxu0 %v42
    %1982 = vmatprep.subr.mxu0 0.0
    %1983 = vmatpush1.msra.mxu0 %v43
    %1984 = vmatprep.subr.mxu0 0.0
    %1985 = vmatpush1.msra.mxu0 %v44
    %1986 = vmatprep.subr.mxu0 0.0
    %1987 = vmatpush1.msra.mxu0 %v45
    %1988 = vmatprep.subr.mxu0 0.0
    %1989 = vmatpush1.msra.mxu0 %v46
    %1990 = vmatprep.subr.mxu0 0.0
    %1991 = vmatpush1.msra.mxu0 %v47
    %1992 = vmatprep.subr.mxu0 0.0
    %1993 = vmatpush1.msra.mxu0 %v48
    %1994 = vmatprep.subr.mxu0 0.0
    %1995 = vmatpush1.msra.mxu0 %v49
    %1996 = vmatprep.subr.mxu0 0.0
    %1997 = vmatpush1.msra.mxu0 0.0
    %1998 = vmatprep.subr.mxu0 0.0
    %1999 = vmatpush1.msra.mxu0 0.0
    %2000 = vmatprep.subr.mxu0 0.0
    %2001 = vmatpush1.msra.mxu0 0.0
    %2002 = vmatprep.subr.mxu0 0.0
    %2003 = vmatpush1.msra.mxu0 0.0
    %2004 = vmatprep.subr.mxu0 0.0
    %2005 = vmatpush1.msra.mxu0 0.0
    %2006 = vmatprep.subr.mxu0 0.0
    %2007 = vmatpush1.msra.mxu0 0.0
    %2008 = vmatprep.subr.mxu0 0.0
    %2009 = vmatpush1.msra.mxu0 0.0
    %2010 = vmatprep.subr.mxu0 0.0
    %2011 = vmatpush1.msra.mxu0 0.0
    %2012 = vmatprep.subr.mxu0 0.0
    %2013 = vmatpush1.msra.mxu0 0.0
    %2014 = vmatprep.subr.mxu0 0.0
    %2015 = vmatpush1.msra.mxu0 0.0
    %2016 = vmatprep.subr.mxu0 0.0
    %2017 = vmatpush1.msra.mxu0 0.0
    %2018 = vmatprep.subr.mxu0 0.0
    %2019 = vmatpush1.msra.mxu0 0.0
    %2020 = vmatprep.subr.mxu0 0.0
    %2021 = vmatpush1.msra.mxu0 0.0
    %2022 = vmatprep.subr.mxu0 0.0
    %2023 = vmatpush1.msra.mxu0 0.0
    %2024 = vmatprep.subr.mxu0 0.0
    %2025 = vmatpush1.msra.mxu0 0.0
    %2026 = vmatprep.subr.mxu0 0.0
    %2027 = vmatpush1.msra.mxu0 0.0
    %2028 = vmatprep.subr.mxu0 0.0
    %2029 = vmatpush1.msra.mxu0 0.0
    %2030 = vmatprep.subr.mxu0 0.0
    %2031 = vmatpush1.msra.mxu0 0.0
    %2032 = vmatprep.subr.mxu0 0.0
    %2033 = vmatpush1.msra.mxu0 0.0
    %2034 = vmatprep.subr.mxu0 0.0
    %2035 = vmatpush1.msra.mxu0 0.0
    %2036 = vmatprep.subr.mxu0 0.0
    %2037 = vmatpush1.msra.mxu0 0.0
    %2038 = vmatprep.subr.mxu0 0.0
    %2039 = vmatpush1.msra.mxu0 0.0
    %2040 = vmatprep.subr.mxu0 0.0
    %2041 = vmatpush1.msra.mxu0 0.0
    %2042 = vmatprep.subr.mxu0 0.0
    %2043 = vmatpush1.msra.mxu0 0.0
    %2044 = vmatprep.mubr.f32.mxu0 0.0
    %2045 = vmatmul.mubr.f32.gmra.mrb[0].mxu0 %v1969
    %v2046 = vpop.f32.mrb[0].mxu0
    %v2047 = vadd.f32 0.0, %v2046
    %v2048 = vpop.f32.mrb[0].mxu0
    %2049 = vmatprep.mubr.f32.mxu0 0.0
    %2050 = vmatmul.mubr.f32.gmra.mrb[0].mxu0 %v1972
    %v2051 = vpop.f32.mrb[0].mxu0
    %v2052 = vadd.f32 0.0, %v2051
    %v2053 = vpop.f32.mrb[0].mxu0
    %2054 = vmatprep.mubr.f32.mxu0 0.0
    %2055 = vmatmul.mubr.f32.gmra.mrb[0].mxu0 %v1975
    %v2056 = vpop.f32.mrb[0].mxu0
    %v2057 = vadd.f32 0.0, %v2056
    %v2058 = vpop.f32.mrb[0].mxu0
    %2059 = vmatprep.mubr.f32.mxu0 0.0
    %2060 = vmatmul.mubr.f32.gmra.mrb[0].mxu0 %v1978
    %v2061 = vpop.f32.mrb[0].mxu0
    %v2062 = vadd.f32 0.0, %v2061
    %v2063 = vpop.f32.mrb[0].mxu0
    %2064 = vdwg.mxu0
    %v2065 = vsel %vm60, %v2047, 0.0
    %v2066 = vsel %vm60, %v2052, 0.0
    %v2067 = vadd.f32 %v2065, %v2066
    %v2068 = vsel %vm60, %v2057, 0.0
    %v2069 = vadd.f32 %v2067, %v2068
    %v2070 = vsel %vm60, %v2062, 0.0
    %v2071 = vadd.f32 %v2069, %v2070
    %v2072 = vrot.slane %v2071, 4
    %v2073 = vadd.f32 %v2071, %v2072
    %v2074 = vrot.slane %v2073, 2
    %v2075 = vadd.f32 %v2073, %v2074
    %v2076 = vrot.slane %v2075, 1
    %v2077 = vadd.f32 %v2075, %v2076
    %v2078 = vmul.f32 %v2077, %v293
    %v2079 = vadd.f32 %v2078, 1e-05
    %v2080 = vrsqrt.pop %v2079
    %v2081 = vmul.f32 %v1960, %v2080
    %v2082 = vmul.f32 %v1961, %v2080
    %v2083 = vmul.f32 %v1962, %v2080
    %v2084 = vmul.f32 %v1963, %v2080
    %v2085 = vmax.f32 %v2081, 0.0
    %v2086 = vmax.f32 %v2082, 0.0
    %v2087 = vmax.f32 %v2083, 0.0
    %v2088 = vmax.f32 %v2084, 0.0
    %2089 = vst.msk [vmem:[#allocation3 + $0x1] sm:$0xff] %vm60, %v2085
    %2090 = vst.msk [vmem:[#allocation3 + $0x9] sm:$0xff] %vm60, %v2086
    %2091 = vst.msk [vmem:[#allocation3 + $0x19] sm:$0xff] %vm60, %v2087
    %2092 = vst.msk [vmem:[#allocation3 + $0x21] sm:$0xff] %vm60, %v2088
    %v2093 = vld [vmem:[#allocation3] sm:$0xff]
    %v2094 = vld [vmem:[#allocation3 + $0x8] sm:$0xff]
    %v2095 = vld [vmem:[#allocation3 + $0x18] sm:$0xff]
    %v2096 = vld [vmem:[#allocation3 + $0x20] sm:$0xff]
    %v2097 = vpack.c.bf16 %v2094, %v2093
    %v2098 = vpack.c.bf16 %v2096, %v2095
    %v2099 = vld [vmem:[%s5] sm:$0xf]
    %v2100 = vld [vmem:[%s5 + $0x4] sm:$0xf]
    %v2101 = vld [vmem:[%s5 + $0x8] sm:$0xf]
    %v2102 = vld [vmem:[%s5 + $0xc] sm:$0xf]
    %v2103 = vld [vmem:[%s5 + $0x10] sm:$0xf]
    %v2104 = vld [vmem:[%s5 + $0x14] sm:$0xf]
    %v2105 = vld [vmem:[%s5 + $0x18] sm:$0xf]
    %v2106 = vld [vmem:[%s5 + $0x1c] sm:$0xf]
    %v2107 = vld [vmem:[#allocation3 + $0x1] sm:$0xff]
    %v2108 = vld [vmem:[#allocation3 + $0x9] sm:$0xff]
    %v2109 = vld [vmem:[#allocation3 + $0x19] sm:$0xff]
    %v2110 = vld [vmem:[#allocation3 + $0x21] sm:$0xff]
    %v2111 = vpack.c.bf16 %v2108, %v2107
    %v2112 = vpack.c.bf16 %v2110, %v2109
    %s2113 = scalar_lea.vmem %s5, 32
    %v2114 = vld [vmem:[%s2113] sm:$0xf]
    %v2115 = vld [vmem:[%s2113 + $0x4] sm:$0xf]
    %v2116 = vld [vmem:[%s2113 + $0x8] sm:$0xf]
    %v2117 = vld [vmem:[%s2113 + $0xc] sm:$0xf]
    %v2118 = vld [vmem:[%s2113 + $0x10] sm:$0xf]
    %v2119 = vld [vmem:[%s2113 + $0x14] sm:$0xf]
    %v2120 = vld [vmem:[%s2113 + $0x18] sm:$0xf]
    %v2121 = vld [vmem:[%s2113 + $0x1c] sm:$0xf]
    %v2130 = vunpack.c.l.b16 %v2114
    %v2131 = vunpack.c.l.b16 %v2115
    %v2132 = vunpack.c.l.b16 %v2116
    %v2133 = vunpack.c.l.b16 %v2117
    %v2134 = vunpack.c.l.b16 %v2118
    %v2135 = vunpack.c.l.b16 %v2119
    %v2136 = vunpack.c.l.b16 %v2120
    %v2137 = vunpack.c.l.b16 %v2121
    %v2138 = vpack.c.b16 %v2131, %v2130
    %v2139 = vpack.c.b16 %v2133, %v2132
    %v2140 = vpack.c.b16 %v2135, %v2134
    %v2141 = vpack.c.b16 %v2137, %v2136
    %v2147 = vsel %vm60, %v2111, 0
    %v2150 = vsel %vm60, %v2112, 0
    %2152 = vmatprep.subr.bf16.mxu0 0
    %2153 = vmatpush1.bf16.msra.mxu0 %v2138
    %2154 = vmatprep.subr.bf16.mxu0 0
    %2155 = vmatpush1.bf16.msra.mxu0 %v2139
    %2156 = vmatprep.subr.bf16.mxu0 0
    %2157 = vmatpush1.bf16.msra.mxu0 %v2140
    %2158 = vmatprep.subr.bf16.mxu0 0
    %2159 = vmatpush1.bf16.msra.mxu0 %v2141
    %2160 = vmatprep.subr.bf16.mxu0 0
    %2161 = vmatpush1.bf16.msra.mxu0 0
    %2162 = vmatprep.subr.bf16.mxu0 0
    %2163 = vmatpush1.bf16.msra.mxu0 0
    %2164 = vmatprep.subr.bf16.mxu0 0
    %2165 = vmatpush1.bf16.msra.mxu0 0
    %2166 = vmatprep.subr.bf16.mxu0 0
    %2167 = vmatpush1.bf16.msra.mxu0 0
    %2168 = vmatprep.subr.bf16.mxu0 0
    %2169 = vmatpush1.bf16.msra.mxu0 0
    %2170 = vmatprep.subr.bf16.mxu0 0
    %2171 = vmatpush1.bf16.msra.mxu0 0
    %2172 = vmatprep.subr.bf16.mxu0 0
    %2173 = vmatpush1.bf16.msra.mxu0 0
    %2174 = vmatprep.subr.bf16.mxu0 0
    %2175 = vmatpush1.bf16.msra.mxu0 0
    %2176 = vmatprep.subr.bf16.mxu0 0
    %2177 = vmatpush1.bf16.msra.mxu0 0
    %2178 = vmatprep.subr.bf16.mxu0 0
    %2179 = vmatpush1.bf16.msra.mxu0 0
    %2180 = vmatprep.subr.bf16.mxu0 0
    %2181 = vmatpush1.bf16.msra.mxu0 0
    %2182 = vmatprep.subr.bf16.mxu0 0
    %2183 = vmatpush1.bf16.msra.mxu0 0
    %2184 = vmatprep.mubr.bf16.mxu0 0
    %2185 = vmatmul.mubr.bf16.gmra.mrb[0].mxu0 %v2147
    %v2186 = vpop.f32.mrb[0].mxu0
    %v2187 = vadd.f32 0.0, %v2186
    %v2188 = vpop.f32.mrb[0].mxu0
    %v2189 = vpop.f32.mrb[0].mxu0
    %v2190 = vadd.f32 0.0, %v2189
    %v2191 = vpop.f32.mrb[0].mxu0
    %2192 = vmatprep.mubr.bf16.mxu0 0
    %2193 = vmatmul.mubr.bf16.gmra.mrb[0].mxu0 %v2150
    %v2194 = vpop.f32.mrb[0].mxu0
    %v2195 = vadd.f32 0.0, %v2194
    %v2196 = vpop.f32.mrb[0].mxu0
    %v2197 = vpop.f32.mrb[0].mxu0
    %v2198 = vadd.f32 0.0, %v2197
    %v2199 = vpop.f32.mrb[0].mxu0
    %2200 = vdwg.mxu0
    %v2209 = vunpack.c.l.b16 %v2099
    %v2210 = vunpack.c.l.b16 %v2100
    %v2211 = vunpack.c.l.b16 %v2101
    %v2212 = vunpack.c.l.b16 %v2102
    %v2213 = vunpack.c.l.b16 %v2103
    %v2214 = vunpack.c.l.b16 %v2104
    %v2215 = vunpack.c.l.b16 %v2105
    %v2216 = vunpack.c.l.b16 %v2106
    %v2217 = vpack.c.b16 %v2210, %v2209
    %v2218 = vpack.c.b16 %v2212, %v2211
    %v2219 = vpack.c.b16 %v2214, %v2213
    %v2220 = vpack.c.b16 %v2216, %v2215
    %v2226 = vsel %vm60, %v2097, 0
    %v2229 = vsel %vm60, %v2098, 0
    %2231 = vmatprep.subr.bf16.mxu0 0
    %2232 = vmatpush1.bf16.msra.mxu0 %v2217
    %2233 = vmatprep.subr.bf16.mxu0 0
    %2234 = vmatpush1.bf16.msra.mxu0 %v2218
    %2235 = vmatprep.subr.bf16.mxu0 0
    %2236 = vmatpush1.bf16.msra.mxu0 %v2219
    %2237 = vmatprep.subr.bf16.mxu0 0
    %2238 = vmatpush1.bf16.msra.mxu0 %v2220
    %2239 = vmatprep.subr.bf16.mxu0 0
    %2240 = vmatpush1.bf16.msra.mxu0 0
    %2241 = vmatprep.subr.bf16.mxu0 0
    %2242 = vmatpush1.bf16.msra.mxu0 0
    %2243 = vmatprep.subr.bf16.mxu0 0
    %2244 = vmatpush1.bf16.msra.mxu0 0
    %2245 = vmatprep.subr.bf16.mxu0 0
    %2246 = vmatpush1.bf16.msra.mxu0 0
    %2247 = vmatprep.subr.bf16.mxu0 0
    %2248 = vmatpush1.bf16.msra.mxu0 0
    %2249 = vmatprep.subr.bf16.mxu0 0
    %2250 = vmatpush1.bf16.msra.mxu0 0
    %2251 = vmatprep.subr.bf16.mxu0 0
    %2252 = vmatpush1.bf16.msra.mxu0 0
    %2253 = vmatprep.subr.bf16.mxu0 0
    %2254 = vmatpush1.bf16.msra.mxu0 0
    %2255 = vmatprep.subr.bf16.mxu0 0
    %2256 = vmatpush1.bf16.msra.mxu0 0
    %2257 = vmatprep.subr.bf16.mxu0 0
    %2258 = vmatpush1.bf16.msra.mxu0 0
    %2259 = vmatprep.subr.bf16.mxu0 0
    %2260 = vmatpush1.bf16.msra.mxu0 0
    %2261 = vmatprep.subr.bf16.mxu0 0
    %2262 = vmatpush1.bf16.msra.mxu0 0
    %2263 = vmatprep.mubr.bf16.mxu0 0
    %2264 = vmatmul.mubr.bf16.gmra.mrb[0].mxu0 %v2226
    %v2265 = vpop.f32.mrb[0].mxu0
    %v2266 = vadd.f32 %v2187, %v2265
    %v2267 = vpop.f32.mrb[0].mxu0
    %v2268 = vpop.f32.mrb[0].mxu0
    %v2269 = vadd.f32 %v2190, %v2268
    %v2270 = vpop.f32.mrb[0].mxu0
    %2271 = vmatprep.mubr.bf16.mxu0 0
    %2272 = vmatmul.mubr.bf16.gmra.mrb[0].mxu0 %v2229
    %v2273 = vpop.f32.mrb[0].mxu0
    %v2274 = vadd.f32 %v2195, %v2273
    %v2275 = vpop.f32.mrb[0].mxu0
    %v2276 = vpop.f32.mrb[0].mxu0
    %v2277 = vadd.f32 %v2198, %v2276
    %v2278 = vpop.f32.mrb[0].mxu0
    %2279 = vdwg.mxu0
    %v2280 = vld [vmem:[#allocation3 + $0x2] sm:$0xff]
    %v2281 = vld [vmem:[#allocation3 + $0xa] sm:$0xff]
    %v2282 = vld [vmem:[#allocation3 + $0x1a] sm:$0xff]
    %v2283 = vld [vmem:[#allocation3 + $0x22] sm:$0xff]
    %v2284 = vpack.c.bf16 %v2281, %v2280
    %v2285 = vpack.c.bf16 %v2283, %v2282
    %s2286 = scalar_lea.vmem %s5, 64
    %v2287 = vld [vmem:[%s2286] sm:$0xf]
    %v2288 = vld [vmem:[%s2286 + $0x4] sm:$0xf]
    %v2289 = vld [vmem:[%s2286 + $0x8] sm:$0xf]
    %v2290 = vld [vmem:[%s2286 + $0xc] sm:$0xf]
    %v2291 = vld [vmem:[%s2286 + $0x10] sm:$0xf]
    %v2292 = vld [vmem:[%s2286 + $0x14] sm:$0xf]
    %v2293 = vld [vmem:[%s2286 + $0x18] sm:$0xf]
    %v2294 = vld [vmem:[%s2286 + $0x1c] sm:$0xf]
    %v2303 = vunpack.c.l.b16 %v2287
    %v2304 = vunpack.c.l.b16 %v2288
    %v2305 = vunpack.c.l.b16 %v2289
    %v2306 = vunpack.c.l.b16 %v2290
    %v2307 = vunpack.c.l.b16 %v2291
    %v2308 = vunpack.c.l.b16 %v2292
    %v2309 = vunpack.c.l.b16 %v2293
    %v2310 = vunpack.c.l.b16 %v2294
    %v2311 = vpack.c.b16 %v2304, %v2303
    %v2312 = vpack.c.b16 %v2306, %v2305
    %v2313 = vpack.c.b16 %v2308, %v2307
    %v2314 = vpack.c.b16 %v2310, %v2309
    %v2320 = vsel %vm60, %v2284, 0
    %v2323 = vsel %vm60, %v2285, 0
    %2325 = vmatprep.subr.bf16.mxu0 0
    %2326 = vmatpush1.bf16.msra.mxu0 %v2311
    %2327 = vmatprep.subr.bf16.mxu0 0
    %2328 = vmatpush1.bf16.msra.mxu0 %v2312
    %2329 = vmatprep.subr.bf16.mxu0 0
    %2330 = vmatpush1.bf16.msra.mxu0 %v2313
    %2331 = vmatprep.subr.bf16.mxu0 0
    %2332 = vmatpush1.bf16.msra.mxu0 %v2314
    %2333 = vmatprep.subr.bf16.mxu0 0
    %2334 = vmatpush1.bf16.msra.mxu0 0
    %2335 = vmatprep.subr.bf16.mxu0 0
    %2336 = vmatpush1.bf16.msra.mxu0 0
    %2337 = vmatprep.subr.bf16.mxu0 0
    %2338 = vmatpush1.bf16.msra.mxu0 0
    %2339 = vmatprep.subr.bf16.mxu0 0
    %2340 = vmatpush1.bf16.msra.mxu0 0
    %2341 = vmatprep.subr.bf16.mxu0 0
    %2342 = vmatpush1.bf16.msra.mxu0 0
    %2343 = vmatprep.subr.bf16.mxu0 0
    %2344 = vmatpush1.bf16.msra.mxu0 0
    %2345 = vmatprep.subr.bf16.mxu0 0
    %2346 = vmatpush1.bf16.msra.mxu0 0
    %2347 = vmatprep.subr.bf16.mxu0 0
    %2348 = vmatpush1.bf16.msra.mxu0 0
    %2349 = vmatprep.subr.bf16.mxu0 0
    %2350 = vmatpush1.bf16.msra.mxu0 0
    %2351 = vmatprep.subr.bf16.mxu0 0
    %2352 = vmatpush1.bf16.msra.mxu0 0
    %2353 = vmatprep.subr.bf16.mxu0 0
    %2354 = vmatpush1.bf16.msra.mxu0 0
    %2355 = vmatprep.subr.bf16.mxu0 0
    %2356 = vmatpush1.bf16.msra.mxu0 0
    %2357 = vmatprep.mubr.bf16.mxu0 0
    %2358 = vmatmul.mubr.bf16.gmra.mrb[0].mxu0 %v2320
    %v2359 = vpop.f32.mrb[0].mxu0
    %v2360 = vadd.f32 0.0, %v2359
    %v2361 = vpop.f32.mrb[0].mxu0
    %v2362 = vpop.f32.mrb[0].mxu0
    %v2363 = vadd.f32 0.0, %v2362
    %v2364 = vpop.f32.mrb[0].mxu0
    %2365 = vmatprep.mubr.bf16.mxu0 0
    %2366 = vmatmul.mubr.bf16.gmra.mrb[0].mxu0 %v2323
    %v2367 = vpop.f32.mrb[0].mxu0
    %v2368 = vadd.f32 0.0, %v2367
    %v2369 = vpop.f32.mrb[0].mxu0
    %v2370 = vpop.f32.mrb[0].mxu0
    %v2371 = vadd.f32 0.0, %v2370
    %v2372 = vpop.f32.mrb[0].mxu0
    %2373 = vdwg.mxu0
    %v2374 = vadd.f32 %v2266, %v2360
    %v2375 = vadd.f32 %v2269, %v2363
    %v2376 = vadd.f32 %v2274, %v2368
    %v2377 = vadd.f32 %v2277, %v2371
    %v2379 = vsel %vm60, %v2374, 0
    %v2382 = vsel %vm60, %v2375, 0
    %v2385 = vsel %vm60, %v2376, 0
    %v2388 = vsel %vm60, %v2377, 0
    %2390 = vmatprep.subr.mxu0 0.0
    %2391 = vmatpush1.msra.mxu0 %v42
    %2392 = vmatprep.subr.mxu0 0.0
    %2393 = vmatpush1.msra.mxu0 %v43
    %2394 = vmatprep.subr.mxu0 0.0
    %2395 = vmatpush1.msra.mxu0 %v44
    %2396 = vmatprep.subr.mxu0 0.0
    %2397 = vmatpush1.msra.mxu0 %v45
    %2398 = vmatprep.subr.mxu0 0.0
    %2399 = vmatpush1.msra.mxu0 %v46
    %2400 = vmatprep.subr.mxu0 0.0
    %2401 = vmatpush1.msra.mxu0 %v47
    %2402 = vmatprep.subr.mxu0 0.0
    %2403 = vmatpush1.msra.mxu0 %v48
    %2404 = vmatprep.subr.mxu0 0.0
    %2405 = vmatpush1.msra.mxu0 %v49
    %2406 = vmatprep.subr.mxu0 0.0
    %2407 = vmatpush1.msra.mxu0 0.0
    %2408 = vmatprep.subr.mxu0 0.0
    %2409 = vmatpush1.msra.mxu0 0.0
    %2410 = vmatprep.subr.mxu0 0.0
    %2411 = vmatpush1.msra.mxu0 0.0
    %2412 = vmatprep.subr.mxu0 0.0
    %2413 = vmatpush1.msra.mxu0 0.0
    %2414 = vmatprep.subr.mxu0 0.0
    %2415 = vmatpush1.msra.mxu0 0.0
    %2416 = vmatprep.subr.mxu0 0.0
    %2417 = vmatpush1.msra.mxu0 0.0
    %2418 = vmatprep.subr.mxu0 0.0
    %2419 = vmatpush1.msra.mxu0 0.0
    %2420 = vmatprep.subr.mxu0 0.0
    %2421 = vmatpush1.msra.mxu0 0.0
    %2422 = vmatprep.subr.mxu0 0.0
    %2423 = vmatpush1.msra.mxu0 0.0
    %2424 = vmatprep.subr.mxu0 0.0
    %2425 = vmatpush1.msra.mxu0 0.0
    %2426 = vmatprep.subr.mxu0 0.0
    %2427 = vmatpush1.msra.mxu0 0.0
    %2428 = vmatprep.subr.mxu0 0.0
    %2429 = vmatpush1.msra.mxu0 0.0
    %2430 = vmatprep.subr.mxu0 0.0
    %2431 = vmatpush1.msra.mxu0 0.0
    %2432 = vmatprep.subr.mxu0 0.0
    %2433 = vmatpush1.msra.mxu0 0.0
    %2434 = vmatprep.subr.mxu0 0.0
    %2435 = vmatpush1.msra.mxu0 0.0
    %2436 = vmatprep.subr.mxu0 0.0
    %2437 = vmatpush1.msra.mxu0 0.0
    %2438 = vmatprep.subr.mxu0 0.0
    %2439 = vmatpush1.msra.mxu0 0.0
    %2440 = vmatprep.subr.mxu0 0.0
    %2441 = vmatpush1.msra.mxu0 0.0
    %2442 = vmatprep.subr.mxu0 0.0
    %2443 = vmatpush1.msra.mxu0 0.0
    %2444 = vmatprep.subr.mxu0 0.0
    %2445 = vmatpush1.msra.mxu0 0.0
    %2446 = vmatprep.subr.mxu0 0.0
    %2447 = vmatpush1.msra.mxu0 0.0
    %2448 = vmatprep.subr.mxu0 0.0
    %2449 = vmatpush1.msra.mxu0 0.0
    %2450 = vmatprep.subr.mxu0 0.0
    %2451 = vmatpush1.msra.mxu0 0.0
    %2452 = vmatprep.subr.mxu0 0.0
    %2453 = vmatpush1.msra.mxu0 0.0
    %2454 = vmatprep.mubr.f32.mxu0 0.0
    %2455 = vmatmul.mubr.f32.gmra.mrb[0].mxu0 %v2379
    %v2456 = vpop.f32.mrb[0].mxu0
    %v2457 = vadd.f32 0.0, %v2456
    %v2458 = vpop.f32.mrb[0].mxu0
    %2459 = vmatprep.mubr.f32.mxu0 0.0
    %2460 = vmatmul.mubr.f32.gmra.mrb[0].mxu0 %v2382
    %v2461 = vpop.f32.mrb[0].mxu0
    %v2462 = vadd.f32 0.0, %v2461
    %v2463 = vpop.f32.mrb[0].mxu0
    %2464 = vmatprep.mubr.f32.mxu0 0.0
    %2465 = vmatmul.mubr.f32.gmra.mrb[0].mxu0 %v2385
    %v2466 = vpop.f32.mrb[0].mxu0
    %v2467 = vadd.f32 0.0, %v2466
    %v2468 = vpop.f32.mrb[0].mxu0
    %2469 = vmatprep.mubr.f32.mxu0 0.0
    %2470 = vmatmul.mubr.f32.gmra.mrb[0].mxu0 %v2388
    %v2471 = vpop.f32.mrb[0].mxu0
    %v2472 = vadd.f32 0.0, %v2471
    %v2473 = vpop.f32.mrb[0].mxu0
    %2474 = vdwg.mxu0
    %v2475 = vsel %vm60, %v2457, 0.0
    %v2476 = vsel %vm60, %v2462, 0.0
    %v2477 = vadd.f32 %v2475, %v2476
    %v2478 = vsel %vm60, %v2467, 0.0
    %v2479 = vadd.f32 %v2477, %v2478
    %v2480 = vsel %vm60, %v2472, 0.0
    %v2481 = vadd.f32 %v2479, %v2480
    %v2482 = vrot.slane %v2481, 4
    %v2483 = vadd.f32 %v2481, %v2482
    %v2484 = vrot.slane %v2483, 2
    %v2485 = vadd.f32 %v2483, %v2484
    %v2486 = vrot.slane %v2485, 1
    %v2487 = vadd.f32 %v2485, %v2486
    %v2488 = vmul.f32 %v2487, %v293
    %v2489 = vsub.f32 %v2374, %v2488
    %v2490 = vsub.f32 %v2375, %v2488
    %v2491 = vsub.f32 %v2376, %v2488
    %v2492 = vsub.f32 %v2377, %v2488
    %v2493 = vmul.f32 %v2489, %v2489
    %v2494 = vmul.f32 %v2490, %v2490
    %v2495 = vmul.f32 %v2491, %v2491
    %v2496 = vmul.f32 %v2492, %v2492
    %v2498 = vsel %vm60, %v2493, 0
    %v2501 = vsel %vm60, %v2494, 0
    %v2504 = vsel %vm60, %v2495, 0
    %v2507 = vsel %vm60, %v2496, 0
    %2509 = vmatprep.subr.mxu0 0.0
    %2510 = vmatpush1.msra.mxu0 %v42
    %2511 = vmatprep.subr.mxu0 0.0
    %2512 = vmatpush1.msra.mxu0 %v43
    %2513 = vmatprep.subr.mxu0 0.0
    %2514 = vmatpush1.msra.mxu0 %v44
    %2515 = vmatprep.subr.mxu0 0.0
    %2516 = vmatpush1.msra.mxu0 %v45
    %2517 = vmatprep.subr.mxu0 0.0
    %2518 = vmatpush1.msra.mxu0 %v46
    %2519 = vmatprep.subr.mxu0 0.0
    %2520 = vmatpush1.msra.mxu0 %v47
    %2521 = vmatprep.subr.mxu0 0.0
    %2522 = vmatpush1.msra.mxu0 %v48
    %2523 = vmatprep.subr.mxu0 0.0
    %2524 = vmatpush1.msra.mxu0 %v49
    %2525 = vmatprep.subr.mxu0 0.0
    %2526 = vmatpush1.msra.mxu0 0.0
    %2527 = vmatprep.subr.mxu0 0.0
    %2528 = vmatpush1.msra.mxu0 0.0
    %2529 = vmatprep.subr.mxu0 0.0
    %2530 = vmatpush1.msra.mxu0 0.0
    %2531 = vmatprep.subr.mxu0 0.0
    %2532 = vmatpush1.msra.mxu0 0.0
    %2533 = vmatprep.subr.mxu0 0.0
    %2534 = vmatpush1.msra.mxu0 0.0
    %2535 = vmatprep.subr.mxu0 0.0
    %2536 = vmatpush1.msra.mxu0 0.0
    %2537 = vmatprep.subr.mxu0 0.0
    %2538 = vmatpush1.msra.mxu0 0.0
    %2539 = vmatprep.subr.mxu0 0.0
    %2540 = vmatpush1.msra.mxu0 0.0
    %2541 = vmatprep.subr.mxu0 0.0
    %2542 = vmatpush1.msra.mxu0 0.0
    %2543 = vmatprep.subr.mxu0 0.0
    %2544 = vmatpush1.msra.mxu0 0.0
    %2545 = vmatprep.subr.mxu0 0.0
    %2546 = vmatpush1.msra.mxu0 0.0
    %2547 = vmatprep.subr.mxu0 0.0
    %2548 = vmatpush1.msra.mxu0 0.0
    %2549 = vmatprep.subr.mxu0 0.0
    %2550 = vmatpush1.msra.mxu0 0.0
    %2551 = vmatprep.subr.mxu0 0.0
    %2552 = vmatpush1.msra.mxu0 0.0
    %2553 = vmatprep.subr.mxu0 0.0
    %2554 = vmatpush1.msra.mxu0 0.0
    %2555 = vmatprep.subr.mxu0 0.0
    %2556 = vmatpush1.msra.mxu0 0.0
    %2557 = vmatprep.subr.mxu0 0.0
    %2558 = vmatpush1.msra.mxu0 0.0
    %2559 = vmatprep.subr.mxu0 0.0
    %2560 = vmatpush1.msra.mxu0 0.0
    %2561 = vmatprep.subr.mxu0 0.0
    %2562 = vmatpush1.msra.mxu0 0.0
    %2563 = vmatprep.subr.mxu0 0.0
    %2564 = vmatpush1.msra.mxu0 0.0
    %2565 = vmatprep.subr.mxu0 0.0
    %2566 = vmatpush1.msra.mxu0 0.0
    %2567 = vmatprep.subr.mxu0 0.0
    %2568 = vmatpush1.msra.mxu0 0.0
    %2569 = vmatprep.subr.mxu0 0.0
    %2570 = vmatpush1.msra.mxu0 0.0
    %2571 = vmatprep.subr.mxu0 0.0
    %2572 = vmatpush1.msra.mxu0 0.0
    %2573 = vmatprep.mubr.f32.mxu0 0.0
    %2574 = vmatmul.mubr.f32.gmra.mrb[0].mxu0 %v2498
    %v2575 = vpop.f32.mrb[0].mxu0
    %v2576 = vadd.f32 0.0, %v2575
    %v2577 = vpop.f32.mrb[0].mxu0
    %2578 = vmatprep.mubr.f32.mxu0 0.0
    %2579 = vmatmul.mubr.f32.gmra.mrb[0].mxu0 %v2501
    %v2580 = vpop.f32.mrb[0].mxu0
    %v2581 = vadd.f32 0.0, %v2580
    %v2582 = vpop.f32.mrb[0].mxu0
    %2583 = vmatprep.mubr.f32.mxu0 0.0
    %2584 = vmatmul.mubr.f32.gmra.mrb[0].mxu0 %v2504
    %v2585 = vpop.f32.mrb[0].mxu0
    %v2586 = vadd.f32 0.0, %v2585
    %v2587 = vpop.f32.mrb[0].mxu0
    %2588 = vmatprep.mubr.f32.mxu0 0.0
    %2589 = vmatmul.mubr.f32.gmra.mrb[0].mxu0 %v2507
    %v2590 = vpop.f32.mrb[0].mxu0
    %v2591 = vadd.f32 0.0, %v2590
    %v2592 = vpop.f32.mrb[0].mxu0
    %2593 = vdwg.mxu0
    %v2594 = vsel %vm60, %v2576, 0.0
    %v2595 = vsel %vm60, %v2581, 0.0
    %v2596 = vadd.f32 %v2594, %v2595
    %v2597 = vsel %vm60, %v2586, 0.0
    %v2598 = vadd.f32 %v2596, %v2597
    %v2599 = vsel %vm60, %v2591, 0.0
    %v2600 = vadd.f32 %v2598, %v2599
    %v2601 = vrot.slane %v2600, 4
    %v2602 = vadd.f32 %v2600, %v2601
    %v2603 = vrot.slane %v2602, 2
    %v2604 = vadd.f32 %v2602, %v2603
    %v2605 = vrot.slane %v2604, 1
    %v2606 = vadd.f32 %v2604, %v2605
    %v2607 = vmul.f32 %v2606, %v293
    %v2608 = vadd.f32 %v2607, 1e-05
    %v2609 = vrsqrt.pop %v2608
    %v2610 = vmul.f32 %v2489, %v2609
    %v2611 = vmul.f32 %v2490, %v2609
    %v2612 = vmul.f32 %v2491, %v2609
    %v2613 = vmul.f32 %v2492, %v2609
    %v2614 = vadd.f32 %v2610, %v1556
    %v2615 = vadd.f32 %v2611, %v1557
    %v2616 = vadd.f32 %v2612, %v1558
    %v2617 = vadd.f32 %v2613, %v1559
    %v2618 = vmax.f32 %v2614, 0.0
    %v2619 = vmax.f32 %v2615, 0.0
    %v2620 = vmax.f32 %v2616, 0.0
    %v2621 = vmax.f32 %v2617, 0.0
    %2622 = vst.msk [vmem:[%s11] sm:$0xff] %vm60, %v2618
    %2623 = vst.msk [vmem:[%s11 + $0x8] sm:$0xff] %vm60, %v2619
    %2624 = vst.msk [vmem:[%s11 + $0x10] sm:$0xff] %vm60, %v2620
    %2625 = vst.msk [vmem:[%s11 + $0x18] sm:$0xff] %vm60, %v2621
    %v2626 = vpack.c.bf16 %v2618, %v2618
    %v2627 = vpack.c.bf16 %v2620, %v2620
    %v2628 = vld [vmem:[%s7] sm:$0xf]
    %v2629 = vld [vmem:[%s7 + $0x4] sm:$0xf]
    %v2630 = vld [vmem:[%s7 + $0x8] sm:$0xf]
    %v2631 = vld [vmem:[%s7 + $0xc] sm:$0xf]
    %v2632 = vld [vmem:[%s7 + $0x10] sm:$0xf]
    %v2633 = vld [vmem:[%s7 + $0x14] sm:$0xf]
    %v2634 = vld [vmem:[%s7 + $0x18] sm:$0xf]
    %v2635 = vld [vmem:[%s7 + $0x1c] sm:$0xf]
    %s2636 = scalar_lea.vmem %s7, 32
    %v2637 = vld [vmem:[%s2636] sm:$0xf]
    %v2638 = vld [vmem:[%s2636 + $0x4] sm:$0xf]
    %v2639 = vld [vmem:[%s2636 + $0x8] sm:$0xf]
    %v2640 = vld [vmem:[%s2636 + $0xc] sm:$0xf]
    %v2641 = vld [vmem:[%s2636 + $0x10] sm:$0xf]
    %v2642 = vld [vmem:[%s2636 + $0x14] sm:$0xf]
    %v2643 = vld [vmem:[%s2636 + $0x18] sm:$0xf]
    %v2644 = vld [vmem:[%s2636 + $0x1c] sm:$0xf]
    %v2647 = vunpack.c.l.b16 %v2626
    %v2648 = vunpack.c.l.b16 %v2627
    %v2649 = vrot.slane %v2647, 1
    %vm2650 = vcmask 1041409
    %v2651 = vsel %vm2650, %v2648, %v2649
    %v2652 = vpack.c.b16 %v2651, %v2651
    %v2661 = vunpack.c.l.b16 %v2637
    %v2662 = vunpack.c.l.b16 %v2638
    %v2663 = vunpack.c.l.b16 %v2639
    %v2664 = vunpack.c.l.b16 %v2640
    %v2665 = vunpack.c.l.b16 %v2641
    %v2666 = vunpack.c.l.b16 %v2642
    %v2667 = vunpack.c.l.b16 %v2643
    %v2668 = vunpack.c.l.b16 %v2644
    %v2669 = vpack.c.b16 %v2662, %v2661
    %v2670 = vpack.c.b16 %v2664, %v2663
    %v2671 = vpack.c.b16 %v2666, %v2665
    %v2672 = vpack.c.b16 %v2668, %v2667
    %v2678 = vsel %vm60, %v2652, 0
    %2680 = vmatprep.subr.bf16.mxu0 0
    %2681 = vmatpush1.bf16.msra.mxu0 %v2669
    %2682 = vmatprep.subr.bf16.mxu0 0
    %2683 = vmatpush1.bf16.msra.mxu0 %v2670
    %2684 = vmatprep.subr.bf16.mxu0 0
    %2685 = vmatpush1.bf16.msra.mxu0 %v2671
    %2686 = vmatprep.subr.bf16.mxu0 0
    %2687 = vmatpush1.bf16.msra.mxu0 %v2672
    %2688 = vmatprep.subr.bf16.mxu0 0
    %2689 = vmatpush1.bf16.msra.mxu0 0
    %2690 = vmatprep.subr.bf16.mxu0 0
    %2691 = vmatpush1.bf16.msra.mxu0 0
    %2692 = vmatprep.subr.bf16.mxu0 0
    %2693 = vmatpush1.bf16.msra.mxu0 0
    %2694 = vmatprep.subr.bf16.mxu0 0
    %2695 = vmatpush1.bf16.msra.mxu0 0
    %2696 = vmatprep.subr.bf16.mxu0 0
    %2697 = vmatpush1.bf16.msra.mxu0 0
    %2698 = vmatprep.subr.bf16.mxu0 0
    %2699 = vmatpush1.bf16.msra.mxu0 0
    %2700 = vmatprep.subr.bf16.mxu0 0
    %2701 = vmatpush1.bf16.msra.mxu0 0
    %2702 = vmatprep.subr.bf16.mxu0 0
    %2703 = vmatpush1.bf16.msra.mxu0 0
    %2704 = vmatprep.subr.bf16.mxu0 0
    %2705 = vmatpush1.bf16.msra.mxu0 0
    %2706 = vmatprep.subr.bf16.mxu0 0
    %2707 = vmatpush1.bf16.msra.mxu0 0
    %2708 = vmatprep.subr.bf16.mxu0 0
    %2709 = vmatpush1.bf16.msra.mxu0 0
    %2710 = vmatprep.subr.bf16.mxu0 0
    %2711 = vmatpush1.bf16.msra.mxu0 0
    %2712 = vmatprep.mubr.bf16.mxu0 0
    %2713 = vmatmul.mubr.bf16.gmra.mrb[0].mxu0 %v2678
    %v2714 = vpop.f32.mrb[0].mxu0
    %v2715 = vadd.f32 0.0, %v2714
    %v2716 = vpop.f32.mrb[0].mxu0
    %v2717 = vpop.f32.mrb[0].mxu0
    %v2718 = vpop.f32.mrb[0].mxu0
    %2719 = vdwg.mxu0
    %v2720 = vrot.slane %v2648, 7
    %v2721 = vsel %vm2650, %v2720, %v2647
    %v2722 = vpack.c.b16 %v2721, %v2721
    %v2731 = vunpack.c.l.b16 %v2628
    %v2732 = vunpack.c.l.b16 %v2629
    %v2733 = vunpack.c.l.b16 %v2630
    %v2734 = vunpack.c.l.b16 %v2631
    %v2735 = vunpack.c.l.b16 %v2632
    %v2736 = vunpack.c.l.b16 %v2633
    %v2737 = vunpack.c.l.b16 %v2634
    %v2738 = vunpack.c.l.b16 %v2635
    %v2739 = vpack.c.b16 %v2732, %v2731
    %v2740 = vpack.c.b16 %v2734, %v2733
    %v2741 = vpack.c.b16 %v2736, %v2735
    %v2742 = vpack.c.b16 %v2738, %v2737
    %v2748 = vsel %vm60, %v2722, 0
    %2750 = vmatprep.subr.bf16.mxu0 0
    %2751 = vmatpush1.bf16.msra.mxu0 %v2739
    %2752 = vmatprep.subr.bf16.mxu0 0
    %2753 = vmatpush1.bf16.msra.mxu0 %v2740
    %2754 = vmatprep.subr.bf16.mxu0 0
    %2755 = vmatpush1.bf16.msra.mxu0 %v2741
    %2756 = vmatprep.subr.bf16.mxu0 0
    %2757 = vmatpush1.bf16.msra.mxu0 %v2742
    %2758 = vmatprep.subr.bf16.mxu0 0
    %2759 = vmatpush1.bf16.msra.mxu0 0
    %2760 = vmatprep.subr.bf16.mxu0 0
    %2761 = vmatpush1.bf16.msra.mxu0 0
    %2762 = vmatprep.subr.bf16.mxu0 0
    %2763 = vmatpush1.bf16.msra.mxu0 0
    %2764 = vmatprep.subr.bf16.mxu0 0
    %2765 = vmatpush1.bf16.msra.mxu0 0
    %2766 = vmatprep.subr.bf16.mxu0 0
    %2767 = vmatpush1.bf16.msra.mxu0 0
    %2768 = vmatprep.subr.bf16.mxu0 0
    %2769 = vmatpush1.bf16.msra.mxu0 0
    %2770 = vmatprep.subr.bf16.mxu0 0
    %2771 = vmatpush1.bf16.msra.mxu0 0
    %2772 = vmatprep.subr.bf16.mxu0 0
    %2773 = vmatpush1.bf16.msra.mxu0 0
    %2774 = vmatprep.subr.bf16.mxu0 0
    %2775 = vmatpush1.bf16.msra.mxu0 0
    %2776 = vmatprep.subr.bf16.mxu0 0
    %2777 = vmatpush1.bf16.msra.mxu0 0
    %2778 = vmatprep.subr.bf16.mxu0 0
    %2779 = vmatpush1.bf16.msra.mxu0 0
    %2780 = vmatprep.subr.bf16.mxu0 0
    %2781 = vmatpush1.bf16.msra.mxu0 0
    %2782 = vmatprep.mubr.bf16.mxu0 0
    %2783 = vmatmul.mubr.bf16.gmra.mrb[0].mxu0 %v2748
    %v2784 = vpop.f32.mrb[0].mxu0
    %v2785 = vadd.f32 %v2715, %v2784
    %v2786 = vpop.f32.mrb[0].mxu0
    %v2787 = vpop.f32.mrb[0].mxu0
    %v2788 = vpop.f32.mrb[0].mxu0
    %2789 = vdwg.mxu0
    %s2790 = scalar_lea.vmem %s7, 64
    %v2791 = vld [vmem:[%s2790] sm:$0xf]
    %v2792 = vld [vmem:[%s2790 + $0x4] sm:$0xf]
    %v2793 = vld [vmem:[%s2790 + $0x8] sm:$0xf]
    %v2794 = vld [vmem:[%s2790 + $0xc] sm:$0xf]
    %v2795 = vld [vmem:[%s2790 + $0x10] sm:$0xf]
    %v2796 = vld [vmem:[%s2790 + $0x14] sm:$0xf]
    %v2797 = vld [vmem:[%s2790 + $0x18] sm:$0xf]
    %v2798 = vld [vmem:[%s2790 + $0x1c] sm:$0xf]
    %v2799 = vrot.slane %v2647, 2
    %v2800 = vrot.slane %v2648, 1
    %v2801 = vsel %vm2650, %v2800, %v2799
    %v2802 = vpack.c.b16 %v2801, %v2801
    %v2811 = vunpack.c.l.b16 %v2791
    %v2812 = vunpack.c.l.b16 %v2792
    %v2813 = vunpack.c.l.b16 %v2793
    %v2814 = vunpack.c.l.b16 %v2794
    %v2815 = vunpack.c.l.b16 %v2795
    %v2816 = vunpack.c.l.b16 %v2796
    %v2817 = vunpack.c.l.b16 %v2797
    %v2818 = vunpack.c.l.b16 %v2798
    %v2819 = vpack.c.b16 %v2812, %v2811
    %v2820 = vpack.c.b16 %v2814, %v2813
    %v2821 = vpack.c.b16 %v2816, %v2815
    %v2822 = vpack.c.b16 %v2818, %v2817
    %v2828 = vsel %vm60, %v2802, 0
    %2830 = vmatprep.subr.bf16.mxu0 0
    %2831 = vmatpush1.bf16.msra.mxu0 %v2819
    %2832 = vmatprep.subr.bf16.mxu0 0
    %2833 = vmatpush1.bf16.msra.mxu0 %v2820
    %2834 = vmatprep.subr.bf16.mxu0 0
    %2835 = vmatpush1.bf16.msra.mxu0 %v2821
    %2836 = vmatprep.subr.bf16.mxu0 0
    %2837 = vmatpush1.bf16.msra.mxu0 %v2822
    %2838 = vmatprep.subr.bf16.mxu0 0
    %2839 = vmatpush1.bf16.msra.mxu0 0
    %2840 = vmatprep.subr.bf16.mxu0 0
    %2841 = vmatpush1.bf16.msra.mxu0 0
    %2842 = vmatprep.subr.bf16.mxu0 0
    %2843 = vmatpush1.bf16.msra.mxu0 0
    %2844 = vmatprep.subr.bf16.mxu0 0
    %2845 = vmatpush1.bf16.msra.mxu0 0
    %2846 = vmatprep.subr.bf16.mxu0 0
    %2847 = vmatpush1.bf16.msra.mxu0 0
    %2848 = vmatprep.subr.bf16.mxu0 0
    %2849 = vmatpush1.bf16.msra.mxu0 0
    %2850 = vmatprep.subr.bf16.mxu0 0
    %2851 = vmatpush1.bf16.msra.mxu0 0
    %2852 = vmatprep.subr.bf16.mxu0 0
    %2853 = vmatpush1.bf16.msra.mxu0 0
    %2854 = vmatprep.subr.bf16.mxu0 0
    %2855 = vmatpush1.bf16.msra.mxu0 0
    %2856 = vmatprep.subr.bf16.mxu0 0
    %2857 = vmatpush1.bf16.msra.mxu0 0
    %2858 = vmatprep.subr.bf16.mxu0 0
    %2859 = vmatpush1.bf16.msra.mxu0 0
    %2860 = vmatprep.subr.bf16.mxu0 0
    %2861 = vmatpush1.bf16.msra.mxu0 0
    %2862 = vmatprep.mubr.bf16.mxu0 0
    %2863 = vmatmul.mubr.bf16.gmra.mrb[0].mxu0 %v2828
    %v2864 = vpop.f32.mrb[0].mxu0
    %v2865 = vadd.f32 0.0, %v2864
    %v2866 = vpop.f32.mrb[0].mxu0
    %v2867 = vpop.f32.mrb[0].mxu0
    %v2868 = vpop.f32.mrb[0].mxu0
    %2869 = vdwg.mxu0
    %v2870 = vadd.f32 %v2785, %v2865
    %s2871 = scalar_lea.vmem %s7, 96
    %v2872 = vld [vmem:[%s2871] sm:$0xf]
    %v2873 = vld [vmem:[%s2871 + $0x4] sm:$0xf]
    %v2874 = vld [vmem:[%s2871 + $0x8] sm:$0xf]
    %v2875 = vld [vmem:[%s2871 + $0xc] sm:$0xf]
    %v2876 = vld [vmem:[%s2871 + $0x10] sm:$0xf]
    %v2877 = vld [vmem:[%s2871 + $0x14] sm:$0xf]
    %v2878 = vld [vmem:[%s2871 + $0x18] sm:$0xf]
    %v2879 = vld [vmem:[%s2871 + $0x1c] sm:$0xf]
    %v2880 = vrot.slane %v2647, 3
    %v2881 = vrot.slane %v2648, 2
    %v2882 = vsel %vm2650, %v2881, %v2880
    %v2883 = vpack.c.b16 %v2882, %v2882
    %v2892 = vunpack.c.l.b16 %v2872
    %v2893 = vunpack.c.l.b16 %v2873
    %v2894 = vunpack.c.l.b16 %v2874
    %v2895 = vunpack.c.l.b16 %v2875
    %v2896 = vunpack.c.l.b16 %v2876
    %v2897 = vunpack.c.l.b16 %v2877
    %v2898 = vunpack.c.l.b16 %v2878
    %v2899 = vunpack.c.l.b16 %v2879
    %v2900 = vpack.c.b16 %v2893, %v2892
    %v2901 = vpack.c.b16 %v2895, %v2894
    %v2902 = vpack.c.b16 %v2897, %v2896
    %v2903 = vpack.c.b16 %v2899, %v2898
    %v2909 = vsel %vm60, %v2883, 0
    %2911 = vmatprep.subr.bf16.mxu0 0
    %2912 = vmatpush1.bf16.msra.mxu0 %v2900
    %2913 = vmatprep.subr.bf16.mxu0 0
    %2914 = vmatpush1.bf16.msra.mxu0 %v2901
    %2915 = vmatprep.subr.bf16.mxu0 0
    %2916 = vmatpush1.bf16.msra.mxu0 %v2902
    %2917 = vmatprep.subr.bf16.mxu0 0
    %2918 = vmatpush1.bf16.msra.mxu0 %v2903
    %2919 = vmatprep.subr.bf16.mxu0 0
    %2920 = vmatpush1.bf16.msra.mxu0 0
    %2921 = vmatprep.subr.bf16.mxu0 0
    %2922 = vmatpush1.bf16.msra.mxu0 0
    %2923 = vmatprep.subr.bf16.mxu0 0
    %2924 = vmatpush1.bf16.msra.mxu0 0
    %2925 = vmatprep.subr.bf16.mxu0 0
    %2926 = vmatpush1.bf16.msra.mxu0 0
    %2927 = vmatprep.subr.bf16.mxu0 0
    %2928 = vmatpush1.bf16.msra.mxu0 0
    %2929 = vmatprep.subr.bf16.mxu0 0
    %2930 = vmatpush1.bf16.msra.mxu0 0
    %2931 = vmatprep.subr.bf16.mxu0 0
    %2932 = vmatpush1.bf16.msra.mxu0 0
    %2933 = vmatprep.subr.bf16.mxu0 0
    %2934 = vmatpush1.bf16.msra.mxu0 0
    %2935 = vmatprep.subr.bf16.mxu0 0
    %2936 = vmatpush1.bf16.msra.mxu0 0
    %2937 = vmatprep.subr.bf16.mxu0 0
    %2938 = vmatpush1.bf16.msra.mxu0 0
    %2939 = vmatprep.subr.bf16.mxu0 0
    %2940 = vmatpush1.bf16.msra.mxu0 0
    %2941 = vmatprep.subr.bf16.mxu0 0
    %2942 = vmatpush1.bf16.msra.mxu0 0
    %2943 = vmatprep.mubr.bf16.mxu0 0
    %2944 = vmatmul.mubr.bf16.gmra.mrb[0].mxu0 %v2909
    %v2945 = vpop.f32.mrb[0].mxu0
    %v2946 = vadd.f32 0.0, %v2945
    %v2947 = vpop.f32.mrb[0].mxu0
    %v2948 = vpop.f32.mrb[0].mxu0
    %v2949 = vpop.f32.mrb[0].mxu0
    %2950 = vdwg.mxu0
    %v2951 = vadd.f32 %v2870, %v2946
    %s2952 = scalar_lea.vmem %s7, 128
    %v2953 = vld [vmem:[%s2952] sm:$0xf]
    %v2954 = vld [vmem:[%s2952 + $0x4] sm:$0xf]
    %v2955 = vld [vmem:[%s2952 + $0x8] sm:$0xf]
    %v2956 = vld [vmem:[%s2952 + $0xc] sm:$0xf]
    %v2957 = vld [vmem:[%s2952 + $0x10] sm:$0xf]
    %v2958 = vld [vmem:[%s2952 + $0x14] sm:$0xf]
    %v2959 = vld [vmem:[%s2952 + $0x18] sm:$0xf]
    %v2960 = vld [vmem:[%s2952 + $0x1c] sm:$0xf]
    %v2961 = vrot.slane %v2647, 4
    %v2962 = vrot.slane %v2648, 3
    %v2963 = vsel %vm2650, %v2962, %v2961
    %v2964 = vpack.c.b16 %v2963, %v2963
    %v2973 = vunpack.c.l.b16 %v2953
    %v2974 = vunpack.c.l.b16 %v2954
    %v2975 = vunpack.c.l.b16 %v2955
    %v2976 = vunpack.c.l.b16 %v2956
    %v2977 = vunpack.c.l.b16 %v2957
    %v2978 = vunpack.c.l.b16 %v2958
    %v2979 = vunpack.c.l.b16 %v2959
    %v2980 = vunpack.c.l.b16 %v2960
    %v2981 = vpack.c.b16 %v2974, %v2973
    %v2982 = vpack.c.b16 %v2976, %v2975
    %v2983 = vpack.c.b16 %v2978, %v2977
    %v2984 = vpack.c.b16 %v2980, %v2979
    %v2990 = vsel %vm60, %v2964, 0
    %2992 = vmatprep.subr.bf16.mxu0 0
    %2993 = vmatpush1.bf16.msra.mxu0 %v2981
    %2994 = vmatprep.subr.bf16.mxu0 0
    %2995 = vmatpush1.bf16.msra.mxu0 %v2982
    %2996 = vmatprep.subr.bf16.mxu0 0
    %2997 = vmatpush1.bf16.msra.mxu0 %v2983
    %2998 = vmatprep.subr.bf16.mxu0 0
    %2999 = vmatpush1.bf16.msra.mxu0 %v2984
    %3000 = vmatprep.subr.bf16.mxu0 0
    %3001 = vmatpush1.bf16.msra.mxu0 0
    %3002 = vmatprep.subr.bf16.mxu0 0
    %3003 = vmatpush1.bf16.msra.mxu0 0
    %3004 = vmatprep.subr.bf16.mxu0 0
    %3005 = vmatpush1.bf16.msra.mxu0 0
    %3006 = vmatprep.subr.bf16.mxu0 0
    %3007 = vmatpush1.bf16.msra.mxu0 0
    %3008 = vmatprep.subr.bf16.mxu0 0
    %3009 = vmatpush1.bf16.msra.mxu0 0
    %3010 = vmatprep.subr.bf16.mxu0 0
    %3011 = vmatpush1.bf16.msra.mxu0 0
    %3012 = vmatprep.subr.bf16.mxu0 0
    %3013 = vmatpush1.bf16.msra.mxu0 0
    %3014 = vmatprep.subr.bf16.mxu0 0
    %3015 = vmatpush1.bf16.msra.mxu0 0
    %3016 = vmatprep.subr.bf16.mxu0 0
    %3017 = vmatpush1.bf16.msra.mxu0 0
    %3018 = vmatprep.subr.bf16.mxu0 0
    %3019 = vmatpush1.bf16.msra.mxu0 0
    %3020 = vmatprep.subr.bf16.mxu0 0
    %3021 = vmatpush1.bf16.msra.mxu0 0
    %3022 = vmatprep.subr.bf16.mxu0 0
    %3023 = vmatpush1.bf16.msra.mxu0 0
    %3024 = vmatprep.mubr.bf16.mxu0 0
    %3025 = vmatmul.mubr.bf16.gmra.mrb[0].mxu0 %v2990
    %v3026 = vpop.f32.mrb[0].mxu0
    %v3027 = vadd.f32 0.0, %v3026
    %v3028 = vpop.f32.mrb[0].mxu0
    %v3029 = vpop.f32.mrb[0].mxu0
    %v3030 = vpop.f32.mrb[0].mxu0
    %3031 = vdwg.mxu0
    %v3032 = vadd.f32 %v2951, %v3027
    %s3033 = scalar_lea.vmem %s7, 160
    %v3034 = vld [vmem:[%s3033] sm:$0xf]
    %v3035 = vld [vmem:[%s3033 + $0x4] sm:$0xf]
    %v3036 = vld [vmem:[%s3033 + $0x8] sm:$0xf]
    %v3037 = vld [vmem:[%s3033 + $0xc] sm:$0xf]
    %v3038 = vld [vmem:[%s3033 + $0x10] sm:$0xf]
    %v3039 = vld [vmem:[%s3033 + $0x14] sm:$0xf]
    %v3040 = vld [vmem:[%s3033 + $0x18] sm:$0xf]
    %v3041 = vld [vmem:[%s3033 + $0x1c] sm:$0xf]
    %v3042 = vrot.slane %v2647, 5
    %v3043 = vrot.slane %v2648, 4
    %v3044 = vsel %vm2650, %v3043, %v3042
    %v3045 = vpack.c.b16 %v3044, %v3044
    %v3054 = vunpack.c.l.b16 %v3034
    %v3055 = vunpack.c.l.b16 %v3035
    %v3056 = vunpack.c.l.b16 %v3036
    %v3057 = vunpack.c.l.b16 %v3037
    %v3058 = vunpack.c.l.b16 %v3038
    %v3059 = vunpack.c.l.b16 %v3039
    %v3060 = vunpack.c.l.b16 %v3040
    %v3061 = vunpack.c.l.b16 %v3041
    %v3062 = vpack.c.b16 %v3055, %v3054
    %v3063 = vpack.c.b16 %v3057, %v3056
    %v3064 = vpack.c.b16 %v3059, %v3058
    %v3065 = vpack.c.b16 %v3061, %v3060
    %v3071 = vsel %vm60, %v3045, 0
    %3073 = vmatprep.subr.bf16.mxu0 0
    %3074 = vmatpush1.bf16.msra.mxu0 %v3062
    %3075 = vmatprep.subr.bf16.mxu0 0
    %3076 = vmatpush1.bf16.msra.mxu0 %v3063
    %3077 = vmatprep.subr.bf16.mxu0 0
    %3078 = vmatpush1.bf16.msra.mxu0 %v3064
    %3079 = vmatprep.subr.bf16.mxu0 0
    %3080 = vmatpush1.bf16.msra.mxu0 %v3065
    %3081 = vmatprep.subr.bf16.mxu0 0
    %3082 = vmatpush1.bf16.msra.mxu0 0
    %3083 = vmatprep.subr.bf16.mxu0 0
    %3084 = vmatpush1.bf16.msra.mxu0 0
    %3085 = vmatprep.subr.bf16.mxu0 0
    %3086 = vmatpush1.bf16.msra.mxu0 0
    %3087 = vmatprep.subr.bf16.mxu0 0
    %3088 = vmatpush1.bf16.msra.mxu0 0
    %3089 = vmatprep.subr.bf16.mxu0 0
    %3090 = vmatpush1.bf16.msra.mxu0 0
    %3091 = vmatprep.subr.bf16.mxu0 0
    %3092 = vmatpush1.bf16.msra.mxu0 0
    %3093 = vmatprep.subr.bf16.mxu0 0
    %3094 = vmatpush1.bf16.msra.mxu0 0
    %3095 = vmatprep.subr.bf16.mxu0 0
    %3096 = vmatpush1.bf16.msra.mxu0 0
    %3097 = vmatprep.subr.bf16.mxu0 0
    %3098 = vmatpush1.bf16.msra.mxu0 0
    %3099 = vmatprep.subr.bf16.mxu0 0
    %3100 = vmatpush1.bf16.msra.mxu0 0
    %3101 = vmatprep.subr.bf16.mxu0 0
    %3102 = vmatpush1.bf16.msra.mxu0 0
    %3103 = vmatprep.subr.bf16.mxu0 0
    %3104 = vmatpush1.bf16.msra.mxu0 0
    %3105 = vmatprep.mubr.bf16.mxu0 0
    %3106 = vmatmul.mubr.bf16.gmra.mrb[0].mxu0 %v3071
    %v3107 = vpop.f32.mrb[0].mxu0
    %v3108 = vadd.f32 0.0, %v3107
    %v3109 = vpop.f32.mrb[0].mxu0
    %v3110 = vpop.f32.mrb[0].mxu0
    %v3111 = vpop.f32.mrb[0].mxu0
    %3112 = vdwg.mxu0
    %v3113 = vadd.f32 %v3032, %v3108
    %s3114 = scalar_lea.vmem %s7, 192
    %v3115 = vld [vmem:[%s3114] sm:$0xf]
    %v3116 = vld [vmem:[%s3114 + $0x4] sm:$0xf]
    %v3117 = vld [vmem:[%s3114 + $0x8] sm:$0xf]
    %v3118 = vld [vmem:[%s3114 + $0xc] sm:$0xf]
    %v3119 = vld [vmem:[%s3114 + $0x10] sm:$0xf]
    %v3120 = vld [vmem:[%s3114 + $0x14] sm:$0xf]
    %v3121 = vld [vmem:[%s3114 + $0x18] sm:$0xf]
    %v3122 = vld [vmem:[%s3114 + $0x1c] sm:$0xf]
    %v3123 = vrot.slane %v2647, 6
    %v3124 = vrot.slane %v2648, 5
    %v3125 = vsel %vm2650, %v3124, %v3123
    %v3126 = vpack.c.b16 %v3125, %v3125
    %v3135 = vunpack.c.l.b16 %v3115
    %v3136 = vunpack.c.l.b16 %v3116
    %v3137 = vunpack.c.l.b16 %v3117
    %v3138 = vunpack.c.l.b16 %v3118
    %v3139 = vunpack.c.l.b16 %v3119
    %v3140 = vunpack.c.l.b16 %v3120
    %v3141 = vunpack.c.l.b16 %v3121
    %v3142 = vunpack.c.l.b16 %v3122
    %v3143 = vpack.c.b16 %v3136, %v3135
    %v3144 = vpack.c.b16 %v3138, %v3137
    %v3145 = vpack.c.b16 %v3140, %v3139
    %v3146 = vpack.c.b16 %v3142, %v3141
    %v3152 = vsel %vm60, %v3126, 0
    %3154 = vmatprep.subr.bf16.mxu0 0
    %3155 = vmatpush1.bf16.msra.mxu0 %v3143
    %3156 = vmatprep.subr.bf16.mxu0 0
    %3157 = vmatpush1.bf16.msra.mxu0 %v3144
    %3158 = vmatprep.subr.bf16.mxu0 0
    %3159 = vmatpush1.bf16.msra.mxu0 %v3145
    %3160 = vmatprep.subr.bf16.mxu0 0
    %3161 = vmatpush1.bf16.msra.mxu0 %v3146
    %3162 = vmatprep.subr.bf16.mxu0 0
    %3163 = vmatpush1.bf16.msra.mxu0 0
    %3164 = vmatprep.subr.bf16.mxu0 0
    %3165 = vmatpush1.bf16.msra.mxu0 0
    %3166 = vmatprep.subr.bf16.mxu0 0
    %3167 = vmatpush1.bf16.msra.mxu0 0
    %3168 = vmatprep.subr.bf16.mxu0 0
    %3169 = vmatpush1.bf16.msra.mxu0 0
    %3170 = vmatprep.subr.bf16.mxu0 0
    %3171 = vmatpush1.bf16.msra.mxu0 0
    %3172 = vmatprep.subr.bf16.mxu0 0
    %3173 = vmatpush1.bf16.msra.mxu0 0
    %3174 = vmatprep.subr.bf16.mxu0 0
    %3175 = vmatpush1.bf16.msra.mxu0 0
    %3176 = vmatprep.subr.bf16.mxu0 0
    %3177 = vmatpush1.bf16.msra.mxu0 0
    %3178 = vmatprep.subr.bf16.mxu0 0
    %3179 = vmatpush1.bf16.msra.mxu0 0
    %3180 = vmatprep.subr.bf16.mxu0 0
    %3181 = vmatpush1.bf16.msra.mxu0 0
    %3182 = vmatprep.subr.bf16.mxu0 0
    %3183 = vmatpush1.bf16.msra.mxu0 0
    %3184 = vmatprep.subr.bf16.mxu0 0
    %3185 = vmatpush1.bf16.msra.mxu0 0
    %3186 = vmatprep.mubr.bf16.mxu0 0
    %3187 = vmatmul.mubr.bf16.gmra.mrb[0].mxu0 %v3152
    %v3188 = vpop.f32.mrb[0].mxu0
    %v3189 = vadd.f32 0.0, %v3188
    %v3190 = vpop.f32.mrb[0].mxu0
    %v3191 = vpop.f32.mrb[0].mxu0
    %v3192 = vpop.f32.mrb[0].mxu0
    %3193 = vdwg.mxu0
    %v3194 = vadd.f32 %v3113, %v3189
    %s3195 = scalar_lea.vmem %s7, 224
    %v3196 = vld [vmem:[%s3195] sm:$0xf]
    %v3197 = vld [vmem:[%s3195 + $0x4] sm:$0xf]
    %v3198 = vld [vmem:[%s3195 + $0x8] sm:$0xf]
    %v3199 = vld [vmem:[%s3195 + $0xc] sm:$0xf]
    %v3200 = vld [vmem:[%s3195 + $0x10] sm:$0xf]
    %v3201 = vld [vmem:[%s3195 + $0x14] sm:$0xf]
    %v3202 = vld [vmem:[%s3195 + $0x18] sm:$0xf]
    %v3203 = vld [vmem:[%s3195 + $0x1c] sm:$0xf]
    %v3204 = vrot.slane %v2647, 7
    %v3205 = vrot.slane %v2648, 6
    %v3206 = vsel %vm2650, %v3205, %v3204
    %v3207 = vpack.c.b16 %v3206, %v3206
    %v3216 = vunpack.c.l.b16 %v3196
    %v3217 = vunpack.c.l.b16 %v3197
    %v3218 = vunpack.c.l.b16 %v3198
    %v3219 = vunpack.c.l.b16 %v3199
    %v3220 = vunpack.c.l.b16 %v3200
    %v3221 = vunpack.c.l.b16 %v3201
    %v3222 = vunpack.c.l.b16 %v3202
    %v3223 = vunpack.c.l.b16 %v3203
    %v3224 = vpack.c.b16 %v3217, %v3216
    %v3225 = vpack.c.b16 %v3219, %v3218
    %v3226 = vpack.c.b16 %v3221, %v3220
    %v3227 = vpack.c.b16 %v3223, %v3222
    %v3233 = vsel %vm60, %v3207, 0
    %3235 = vmatprep.subr.bf16.mxu0 0
    %3236 = vmatpush1.bf16.msra.mxu0 %v3224
    %3237 = vmatprep.subr.bf16.mxu0 0
    %3238 = vmatpush1.bf16.msra.mxu0 %v3225
    %3239 = vmatprep.subr.bf16.mxu0 0
    %3240 = vmatpush1.bf16.msra.mxu0 %v3226
    %3241 = vmatprep.subr.bf16.mxu0 0
    %3242 = vmatpush1.bf16.msra.mxu0 %v3227
    %3243 = vmatprep.subr.bf16.mxu0 0
    %3244 = vmatpush1.bf16.msra.mxu0 0
    %3245 = vmatprep.subr.bf16.mxu0 0
    %3246 = vmatpush1.bf16.msra.mxu0 0
    %3247 = vmatprep.subr.bf16.mxu0 0
    %3248 = vmatpush1.bf16.msra.mxu0 0
    %3249 = vmatprep.subr.bf16.mxu0 0
    %3250 = vmatpush1.bf16.msra.mxu0 0
    %3251 = vmatprep.subr.bf16.mxu0 0
    %3252 = vmatpush1.bf16.msra.mxu0 0
    %3253 = vmatprep.subr.bf16.mxu0 0
    %3254 = vmatpush1.bf16.msra.mxu0 0
    %3255 = vmatprep.subr.bf16.mxu0 0
    %3256 = vmatpush1.bf16.msra.mxu0 0
    %3257 = vmatprep.subr.bf16.mxu0 0
    %3258 = vmatpush1.bf16.msra.mxu0 0
    %3259 = vmatprep.subr.bf16.mxu0 0
    %3260 = vmatpush1.bf16.msra.mxu0 0
    %3261 = vmatprep.subr.bf16.mxu0 0
    %3262 = vmatpush1.bf16.msra.mxu0 0
    %3263 = vmatprep.subr.bf16.mxu0 0
    %3264 = vmatpush1.bf16.msra.mxu0 0
    %3265 = vmatprep.subr.bf16.mxu0 0
    %3266 = vmatpush1.bf16.msra.mxu0 0
    %3267 = vmatprep.mubr.bf16.mxu0 0
    %3268 = vmatmul.mubr.bf16.gmra.mrb[0].mxu0 %v3233
    %v3269 = vpop.f32.mrb[0].mxu0
    %v3270 = vadd.f32 0.0, %v3269
    %v3271 = vpop.f32.mrb[0].mxu0
    %v3272 = vpop.f32.mrb[0].mxu0
    %v3273 = vpop.f32.mrb[0].mxu0
    %3274 = vdwg.mxu0
    %v3275 = vadd.f32 %v3194, %v3270
    %v3276 = vpack.c.bf16 %v2619, %v2619
    %v3277 = vpack.c.bf16 %v2621, %v2621
    %s3278 = scalar_lea.vmem %s7, 256
    %v3279 = vld [vmem:[%s3278] sm:$0xf]
    %v3280 = vld [vmem:[%s3278 + $0x4] sm:$0xf]
    %v3281 = vld [vmem:[%s3278 + $0x8] sm:$0xf]
    %v3282 = vld [vmem:[%s3278 + $0xc] sm:$0xf]
    %v3283 = vld [vmem:[%s3278 + $0x10] sm:$0xf]
    %v3284 = vld [vmem:[%s3278 + $0x14] sm:$0xf]
    %v3285 = vld [vmem:[%s3278 + $0x18] sm:$0xf]
    %v3286 = vld [vmem:[%s3278 + $0x1c] sm:$0xf]
    %v3289 = vunpack.c.l.b16 %v3276
    %v3290 = vunpack.c.l.b16 %v3277
    %v3291 = vrot.slane %v3290, 7
    %v3292 = vsel %vm2650, %v3291, %v3289
    %v3293 = vpack.c.b16 %v3292, %v3292
    %v3302 = vunpack.c.l.b16 %v3279
    %v3303 = vunpack.c.l.b16 %v3280
    %v3304 = vunpack.c.l.b16 %v3281
    %v3305 = vunpack.c.l.b16 %v3282
    %v3306 = vunpack.c.l.b16 %v3283
    %v3307 = vunpack.c.l.b16 %v3284
    %v3308 = vunpack.c.l.b16 %v3285
    %v3309 = vunpack.c.l.b16 %v3286
    %v3310 = vpack.c.b16 %v3303, %v3302
    %v3311 = vpack.c.b16 %v3305, %v3304
    %v3312 = vpack.c.b16 %v3307, %v3306
    %v3313 = vpack.c.b16 %v3309, %v3308
    %v3319 = vsel %vm60, %v3293, 0
    %3321 = vmatprep.subr.bf16.mxu0 0
    %3322 = vmatpush1.bf16.msra.mxu0 %v3310
    %3323 = vmatprep.subr.bf16.mxu0 0
    %3324 = vmatpush1.bf16.msra.mxu0 %v3311
    %3325 = vmatprep.subr.bf16.mxu0 0
    %3326 = vmatpush1.bf16.msra.mxu0 %v3312
    %3327 = vmatprep.subr.bf16.mxu0 0
    %3328 = vmatpush1.bf16.msra.mxu0 %v3313
    %3329 = vmatprep.subr.bf16.mxu0 0
    %3330 = vmatpush1.bf16.msra.mxu0 0
    %3331 = vmatprep.subr.bf16.mxu0 0
    %3332 = vmatpush1.bf16.msra.mxu0 0
    %3333 = vmatprep.subr.bf16.mxu0 0
    %3334 = vmatpush1.bf16.msra.mxu0 0
    %3335 = vmatprep.subr.bf16.mxu0 0
    %3336 = vmatpush1.bf16.msra.mxu0 0
    %3337 = vmatprep.subr.bf16.mxu0 0
    %3338 = vmatpush1.bf16.msra.mxu0 0
    %3339 = vmatprep.subr.bf16.mxu0 0
    %3340 = vmatpush1.bf16.msra.mxu0 0
    %3341 = vmatprep.subr.bf16.mxu0 0
    %3342 = vmatpush1.bf16.msra.mxu0 0
    %3343 = vmatprep.subr.bf16.mxu0 0
    %3344 = vmatpush1.bf16.msra.mxu0 0
    %3345 = vmatprep.subr.bf16.mxu0 0
    %3346 = vmatpush1.bf16.msra.mxu0 0
    %3347 = vmatprep.subr.bf16.mxu0 0
    %3348 = vmatpush1.bf16.msra.mxu0 0
    %3349 = vmatprep.subr.bf16.mxu0 0
    %3350 = vmatpush1.bf16.msra.mxu0 0
    %3351 = vmatprep.subr.bf16.mxu0 0
    %3352 = vmatpush1.bf16.msra.mxu0 0
    %3353 = vmatprep.mubr.bf16.mxu0 0
    %3354 = vmatmul.mubr.bf16.gmra.mrb[0].mxu0 %v3319
    %v3355 = vpop.f32.mrb[0].mxu0
    %v3356 = vadd.f32 0.0, %v3355
    %v3357 = vpop.f32.mrb[0].mxu0
    %v3358 = vpop.f32.mrb[0].mxu0
    %v3359 = vpop.f32.mrb[0].mxu0
    %3360 = vdwg.mxu0
    %v3361 = vadd.f32 %v3275, %v3356
    %s3362 = scalar_lea.vmem %s7, 288
    %v3363 = vld [vmem:[%s3362] sm:$0xf]
    %v3364 = vld [vmem:[%s3362 + $0x4] sm:$0xf]
    %v3365 = vld [vmem:[%s3362 + $0x8] sm:$0xf]
    %v3366 = vld [vmem:[%s3362 + $0xc] sm:$0xf]
    %v3367 = vld [vmem:[%s3362 + $0x10] sm:$0xf]
    %v3368 = vld [vmem:[%s3362 + $0x14] sm:$0xf]
    %v3369 = vld [vmem:[%s3362 + $0x18] sm:$0xf]
    %v3370 = vld [vmem:[%s3362 + $0x1c] sm:$0xf]
    %v3371 = vrot.slane %v3289, 1
    %v3372 = vsel %vm2650, %v3290, %v3371
    %v3373 = vpack.c.b16 %v3372, %v3372
    %v3382 = vunpack.c.l.b16 %v3363
    %v3383 = vunpack.c.l.b16 %v3364
    %v3384 = vunpack.c.l.b16 %v3365
    %v3385 = vunpack.c.l.b16 %v3366
    %v3386 = vunpack.c.l.b16 %v3367
    %v3387 = vunpack.c.l.b16 %v3368
    %v3388 = vunpack.c.l.b16 %v3369
    %v3389 = vunpack.c.l.b16 %v3370
    %v3390 = vpack.c.b16 %v3383, %v3382
    %v3391 = vpack.c.b16 %v3385, %v3384
    %v3392 = vpack.c.b16 %v3387, %v3386
    %v3393 = vpack.c.b16 %v3389, %v3388
    %v3399 = vsel %vm60, %v3373, 0
    %3401 = vmatprep.subr.bf16.mxu0 0
    %3402 = vmatpush1.bf16.msra.mxu0 %v3390
    %3403 = vmatprep.subr.bf16.mxu0 0
    %3404 = vmatpush1.bf16.msra.mxu0 %v3391
    %3405 = vmatprep.subr.bf16.mxu0 0
    %3406 = vmatpush1.bf16.msra.mxu0 %v3392
    %3407 = vmatprep.subr.bf16.mxu0 0
    %3408 = vmatpush1.bf16.msra.mxu0 %v3393
    %3409 = vmatprep.subr.bf16.mxu0 0
    %3410 = vmatpush1.bf16.msra.mxu0 0
    %3411 = vmatprep.subr.bf16.mxu0 0
    %3412 = vmatpush1.bf16.msra.mxu0 0
    %3413 = vmatprep.subr.bf16.mxu0 0
    %3414 = vmatpush1.bf16.msra.mxu0 0
    %3415 = vmatprep.subr.bf16.mxu0 0
    %3416 = vmatpush1.bf16.msra.mxu0 0
    %3417 = vmatprep.subr.bf16.mxu0 0
    %3418 = vmatpush1.bf16.msra.mxu0 0
    %3419 = vmatprep.subr.bf16.mxu0 0
    %3420 = vmatpush1.bf16.msra.mxu0 0
    %3421 = vmatprep.subr.bf16.mxu0 0
    %3422 = vmatpush1.bf16.msra.mxu0 0
    %3423 = vmatprep.subr.bf16.mxu0 0
    %3424 = vmatpush1.bf16.msra.mxu0 0
    %3425 = vmatprep.subr.bf16.mxu0 0
    %3426 = vmatpush1.bf16.msra.mxu0 0
    %3427 = vmatprep.subr.bf16.mxu0 0
    %3428 = vmatpush1.bf16.msra.mxu0 0
    %3429 = vmatprep.subr.bf16.mxu0 0
    %3430 = vmatpush1.bf16.msra.mxu0 0
    %3431 = vmatprep.subr.bf16.mxu0 0
    %3432 = vmatpush1.bf16.msra.mxu0 0
    %3433 = vmatprep.mubr.bf16.mxu0 0
    %3434 = vmatmul.mubr.bf16.gmra.mrb[0].mxu0 %v3399
    %v3435 = vpop.f32.mrb[0].mxu0
    %v3436 = vadd.f32 0.0, %v3435
    %v3437 = vpop.f32.mrb[0].mxu0
    %v3438 = vpop.f32.mrb[0].mxu0
    %v3439 = vpop.f32.mrb[0].mxu0
    %3440 = vdwg.mxu0
    %v3441 = vadd.f32 %v3361, %v3436
    %s3442 = scalar_lea.vmem %s7, 320
    %v3443 = vld [vmem:[%s3442] sm:$0xf]
    %v3444 = vld [vmem:[%s3442 + $0x4] sm:$0xf]
    %v3445 = vld [vmem:[%s3442 + $0x8] sm:$0xf]
    %v3446 = vld [vmem:[%s3442 + $0xc] sm:$0xf]
    %v3447 = vld [vmem:[%s3442 + $0x10] sm:$0xf]
    %v3448 = vld [vmem:[%s3442 + $0x14] sm:$0xf]
    %v3449 = vld [vmem:[%s3442 + $0x18] sm:$0xf]
    %v3450 = vld [vmem:[%s3442 + $0x1c] sm:$0xf]
    %v3451 = vrot.slane %v3289, 2
    %v3452 = vrot.slane %v3290, 1
    %v3453 = vsel %vm2650, %v3452, %v3451
    %v3454 = vpack.c.b16 %v3453, %v3453
    %v3463 = vunpack.c.l.b16 %v3443
    %v3464 = vunpack.c.l.b16 %v3444
    %v3465 = vunpack.c.l.b16 %v3445
    %v3466 = vunpack.c.l.b16 %v3446
    %v3467 = vunpack.c.l.b16 %v3447
    %v3468 = vunpack.c.l.b16 %v3448
    %v3469 = vunpack.c.l.b16 %v3449
    %v3470 = vunpack.c.l.b16 %v3450
    %v3471 = vpack.c.b16 %v3464, %v3463
    %v3472 = vpack.c.b16 %v3466, %v3465
    %v3473 = vpack.c.b16 %v3468, %v3467
    %v3474 = vpack.c.b16 %v3470, %v3469
    %v3480 = vsel %vm60, %v3454, 0
    %3482 = vmatprep.subr.bf16.mxu0 0
    %3483 = vmatpush1.bf16.msra.mxu0 %v3471
    %3484 = vmatprep.subr.bf16.mxu0 0
    %3485 = vmatpush1.bf16.msra.mxu0 %v3472
    %3486 = vmatprep.subr.bf16.mxu0 0
    %3487 = vmatpush1.bf16.msra.mxu0 %v3473
    %3488 = vmatprep.subr.bf16.mxu0 0
    %3489 = vmatpush1.bf16.msra.mxu0 %v3474
    %3490 = vmatprep.subr.bf16.mxu0 0
    %3491 = vmatpush1.bf16.msra.mxu0 0
    %3492 = vmatprep.subr.bf16.mxu0 0
    %3493 = vmatpush1.bf16.msra.mxu0 0
    %3494 = vmatprep.subr.bf16.mxu0 0
    %3495 = vmatpush1.bf16.msra.mxu0 0
    %3496 = vmatprep.subr.bf16.mxu0 0
    %3497 = vmatpush1.bf16.msra.mxu0 0
    %3498 = vmatprep.subr.bf16.mxu0 0
    %3499 = vmatpush1.bf16.msra.mxu0 0
    %3500 = vmatprep.subr.bf16.mxu0 0
    %3501 = vmatpush1.bf16.msra.mxu0 0
    %3502 = vmatprep.subr.bf16.mxu0 0
    %3503 = vmatpush1.bf16.msra.mxu0 0
    %3504 = vmatprep.subr.bf16.mxu0 0
    %3505 = vmatpush1.bf16.msra.mxu0 0
    %3506 = vmatprep.subr.bf16.mxu0 0
    %3507 = vmatpush1.bf16.msra.mxu0 0
    %3508 = vmatprep.subr.bf16.mxu0 0
    %3509 = vmatpush1.bf16.msra.mxu0 0
    %3510 = vmatprep.subr.bf16.mxu0 0
    %3511 = vmatpush1.bf16.msra.mxu0 0
    %3512 = vmatprep.subr.bf16.mxu0 0
    %3513 = vmatpush1.bf16.msra.mxu0 0
    %3514 = vmatprep.mubr.bf16.mxu0 0
    %3515 = vmatmul.mubr.bf16.gmra.mrb[0].mxu0 %v3480
    %v3516 = vpop.f32.mrb[0].mxu0
    %v3517 = vadd.f32 0.0, %v3516
    %v3518 = vpop.f32.mrb[0].mxu0
    %v3519 = vpop.f32.mrb[0].mxu0
    %v3520 = vpop.f32.mrb[0].mxu0
    %3521 = vdwg.mxu0
    %v3522 = vadd.f32 %v3441, %v3517
    %s3523 = scalar_lea.vmem %s7, 352
    %v3524 = vld [vmem:[%s3523] sm:$0xf]
    %v3525 = vld [vmem:[%s3523 + $0x4] sm:$0xf]
    %v3526 = vld [vmem:[%s3523 + $0x8] sm:$0xf]
    %v3527 = vld [vmem:[%s3523 + $0xc] sm:$0xf]
    %v3528 = vld [vmem:[%s3523 + $0x10] sm:$0xf]
    %v3529 = vld [vmem:[%s3523 + $0x14] sm:$0xf]
    %v3530 = vld [vmem:[%s3523 + $0x18] sm:$0xf]
    %v3531 = vld [vmem:[%s3523 + $0x1c] sm:$0xf]
    %v3532 = vrot.slane %v3289, 3
    %v3533 = vrot.slane %v3290, 2
    %v3534 = vsel %vm2650, %v3533, %v3532
    %v3535 = vpack.c.b16 %v3534, %v3534
    %v3544 = vunpack.c.l.b16 %v3524
    %v3545 = vunpack.c.l.b16 %v3525
    %v3546 = vunpack.c.l.b16 %v3526
    %v3547 = vunpack.c.l.b16 %v3527
    %v3548 = vunpack.c.l.b16 %v3528
    %v3549 = vunpack.c.l.b16 %v3529
    %v3550 = vunpack.c.l.b16 %v3530
    %v3551 = vunpack.c.l.b16 %v3531
    %v3552 = vpack.c.b16 %v3545, %v3544
    %v3553 = vpack.c.b16 %v3547, %v3546
    %v3554 = vpack.c.b16 %v3549, %v3548
    %v3555 = vpack.c.b16 %v3551, %v3550
    %v3561 = vsel %vm60, %v3535, 0
    %3563 = vmatprep.subr.bf16.mxu0 0
    %3564 = vmatpush1.bf16.msra.mxu0 %v3552
    %3565 = vmatprep.subr.bf16.mxu0 0
    %3566 = vmatpush1.bf16.msra.mxu0 %v3553
    %3567 = vmatprep.subr.bf16.mxu0 0
    %3568 = vmatpush1.bf16.msra.mxu0 %v3554
    %3569 = vmatprep.subr.bf16.mxu0 0
    %3570 = vmatpush1.bf16.msra.mxu0 %v3555
    %3571 = vmatprep.subr.bf16.mxu0 0
    %3572 = vmatpush1.bf16.msra.mxu0 0
    %3573 = vmatprep.subr.bf16.mxu0 0
    %3574 = vmatpush1.bf16.msra.mxu0 0
    %3575 = vmatprep.subr.bf16.mxu0 0
    %3576 = vmatpush1.bf16.msra.mxu0 0
    %3577 = vmatprep.subr.bf16.mxu0 0
    %3578 = vmatpush1.bf16.msra.mxu0 0
    %3579 = vmatprep.subr.bf16.mxu0 0
    %3580 = vmatpush1.bf16.msra.mxu0 0
    %3581 = vmatprep.subr.bf16.mxu0 0
    %3582 = vmatpush1.bf16.msra.mxu0 0
    %3583 = vmatprep.subr.bf16.mxu0 0
    %3584 = vmatpush1.bf16.msra.mxu0 0
    %3585 = vmatprep.subr.bf16.mxu0 0
    %3586 = vmatpush1.bf16.msra.mxu0 0
    %3587 = vmatprep.subr.bf16.mxu0 0
    %3588 = vmatpush1.bf16.msra.mxu0 0
    %3589 = vmatprep.subr.bf16.mxu0 0
    %3590 = vmatpush1.bf16.msra.mxu0 0
    %3591 = vmatprep.subr.bf16.mxu0 0
    %3592 = vmatpush1.bf16.msra.mxu0 0
    %3593 = vmatprep.subr.bf16.mxu0 0
    %3594 = vmatpush1.bf16.msra.mxu0 0
    %3595 = vmatprep.mubr.bf16.mxu0 0
    %3596 = vmatmul.mubr.bf16.gmra.mrb[0].mxu0 %v3561
    %v3597 = vpop.f32.mrb[0].mxu0
    %v3598 = vadd.f32 0.0, %v3597
    %v3599 = vpop.f32.mrb[0].mxu0
    %v3600 = vpop.f32.mrb[0].mxu0
    %v3601 = vpop.f32.mrb[0].mxu0
    %3602 = vdwg.mxu0
    %v3603 = vadd.f32 %v3522, %v3598
    %s3604 = scalar_lea.vmem %s7, 384
    %v3605 = vld [vmem:[%s3604] sm:$0xf]
    %v3606 = vld [vmem:[%s3604 + $0x4] sm:$0xf]
    %v3607 = vld [vmem:[%s3604 + $0x8] sm:$0xf]
    %v3608 = vld [vmem:[%s3604 + $0xc] sm:$0xf]
    %v3609 = vld [vmem:[%s3604 + $0x10] sm:$0xf]
    %v3610 = vld [vmem:[%s3604 + $0x14] sm:$0xf]
    %v3611 = vld [vmem:[%s3604 + $0x18] sm:$0xf]
    %v3612 = vld [vmem:[%s3604 + $0x1c] sm:$0xf]
    %v3613 = vrot.slane %v3289, 4
    %v3614 = vrot.slane %v3290, 3
    %v3615 = vsel %vm2650, %v3614, %v3613
    %v3616 = vpack.c.b16 %v3615, %v3615
    %v3625 = vunpack.c.l.b16 %v3605
    %v3626 = vunpack.c.l.b16 %v3606
    %v3627 = vunpack.c.l.b16 %v3607
    %v3628 = vunpack.c.l.b16 %v3608
    %v3629 = vunpack.c.l.b16 %v3609
    %v3630 = vunpack.c.l.b16 %v3610
    %v3631 = vunpack.c.l.b16 %v3611
    %v3632 = vunpack.c.l.b16 %v3612
    %v3633 = vpack.c.b16 %v3626, %v3625
    %v3634 = vpack.c.b16 %v3628, %v3627
    %v3635 = vpack.c.b16 %v3630, %v3629
    %v3636 = vpack.c.b16 %v3632, %v3631
    %v3642 = vsel %vm60, %v3616, 0
    %3644 = vmatprep.subr.bf16.mxu0 0
    %3645 = vmatpush1.bf16.msra.mxu0 %v3633
    %3646 = vmatprep.subr.bf16.mxu0 0
    %3647 = vmatpush1.bf16.msra.mxu0 %v3634
    %3648 = vmatprep.subr.bf16.mxu0 0
    %3649 = vmatpush1.bf16.msra.mxu0 %v3635
    %3650 = vmatprep.subr.bf16.mxu0 0
    %3651 = vmatpush1.bf16.msra.mxu0 %v3636
    %3652 = vmatprep.subr.bf16.mxu0 0
    %3653 = vmatpush1.bf16.msra.mxu0 0
    %3654 = vmatprep.subr.bf16.mxu0 0
    %3655 = vmatpush1.bf16.msra.mxu0 0
    %3656 = vmatprep.subr.bf16.mxu0 0
    %3657 = vmatpush1.bf16.msra.mxu0 0
    %3658 = vmatprep.subr.bf16.mxu0 0
    %3659 = vmatpush1.bf16.msra.mxu0 0
    %3660 = vmatprep.subr.bf16.mxu0 0
    %3661 = vmatpush1.bf16.msra.mxu0 0
    %3662 = vmatprep.subr.bf16.mxu0 0
    %3663 = vmatpush1.bf16.msra.mxu0 0
    %3664 = vmatprep.subr.bf16.mxu0 0
    %3665 = vmatpush1.bf16.msra.mxu0 0
    %3666 = vmatprep.subr.bf16.mxu0 0
    %3667 = vmatpush1.bf16.msra.mxu0 0
    %3668 = vmatprep.subr.bf16.mxu0 0
    %3669 = vmatpush1.bf16.msra.mxu0 0
    %3670 = vmatprep.subr.bf16.mxu0 0
    %3671 = vmatpush1.bf16.msra.mxu0 0
    %3672 = vmatprep.subr.bf16.mxu0 0
    %3673 = vmatpush1.bf16.msra.mxu0 0
    %3674 = vmatprep.subr.bf16.mxu0 0
    %3675 = vmatpush1.bf16.msra.mxu0 0
    %3676 = vmatprep.mubr.bf16.mxu0 0
    %3677 = vmatmul.mubr.bf16.gmra.mrb[0].mxu0 %v3642
    %v3678 = vpop.f32.mrb[0].mxu0
    %v3679 = vadd.f32 0.0, %v3678
    %v3680 = vpop.f32.mrb[0].mxu0
    %v3681 = vpop.f32.mrb[0].mxu0
    %v3682 = vpop.f32.mrb[0].mxu0
    %3683 = vdwg.mxu0
    %v3684 = vadd.f32 %v3603, %v3679
    %s3685 = scalar_lea.vmem %s7, 416
    %v3686 = vld [vmem:[%s3685] sm:$0xf]
    %v3687 = vld [vmem:[%s3685 + $0x4] sm:$0xf]
    %v3688 = vld [vmem:[%s3685 + $0x8] sm:$0xf]
    %v3689 = vld [vmem:[%s3685 + $0xc] sm:$0xf]
    %v3690 = vld [vmem:[%s3685 + $0x10] sm:$0xf]
    %v3691 = vld [vmem:[%s3685 + $0x14] sm:$0xf]
    %v3692 = vld [vmem:[%s3685 + $0x18] sm:$0xf]
    %v3693 = vld [vmem:[%s3685 + $0x1c] sm:$0xf]
    %v3694 = vrot.slane %v3289, 5
    %v3695 = vrot.slane %v3290, 4
    %v3696 = vsel %vm2650, %v3695, %v3694
    %v3697 = vpack.c.b16 %v3696, %v3696
    %v3706 = vunpack.c.l.b16 %v3686
    %v3707 = vunpack.c.l.b16 %v3687
    %v3708 = vunpack.c.l.b16 %v3688
    %v3709 = vunpack.c.l.b16 %v3689
    %v3710 = vunpack.c.l.b16 %v3690
    %v3711 = vunpack.c.l.b16 %v3691
    %v3712 = vunpack.c.l.b16 %v3692
    %v3713 = vunpack.c.l.b16 %v3693
    %v3714 = vpack.c.b16 %v3707, %v3706
    %v3715 = vpack.c.b16 %v3709, %v3708
    %v3716 = vpack.c.b16 %v3711, %v3710
    %v3717 = vpack.c.b16 %v3713, %v3712
    %v3723 = vsel %vm60, %v3697, 0
    %3725 = vmatprep.subr.bf16.mxu0 0
    %3726 = vmatpush1.bf16.msra.mxu0 %v3714
    %3727 = vmatprep.subr.bf16.mxu0 0
    %3728 = vmatpush1.bf16.msra.mxu0 %v3715
    %3729 = vmatprep.subr.bf16.mxu0 0
    %3730 = vmatpush1.bf16.msra.mxu0 %v3716
    %3731 = vmatprep.subr.bf16.mxu0 0
    %3732 = vmatpush1.bf16.msra.mxu0 %v3717
    %3733 = vmatprep.subr.bf16.mxu0 0
    %3734 = vmatpush1.bf16.msra.mxu0 0
    %3735 = vmatprep.subr.bf16.mxu0 0
    %3736 = vmatpush1.bf16.msra.mxu0 0
    %3737 = vmatprep.subr.bf16.mxu0 0
    %3738 = vmatpush1.bf16.msra.mxu0 0
    %3739 = vmatprep.subr.bf16.mxu0 0
    %3740 = vmatpush1.bf16.msra.mxu0 0
    %3741 = vmatprep.subr.bf16.mxu0 0
    %3742 = vmatpush1.bf16.msra.mxu0 0
    %3743 = vmatprep.subr.bf16.mxu0 0
    %3744 = vmatpush1.bf16.msra.mxu0 0
    %3745 = vmatprep.subr.bf16.mxu0 0
    %3746 = vmatpush1.bf16.msra.mxu0 0
    %3747 = vmatprep.subr.bf16.mxu0 0
    %3748 = vmatpush1.bf16.msra.mxu0 0
    %3749 = vmatprep.subr.bf16.mxu0 0
    %3750 = vmatpush1.bf16.msra.mxu0 0
    %3751 = vmatprep.subr.bf16.mxu0 0
    %3752 = vmatpush1.bf16.msra.mxu0 0
    %3753 = vmatprep.subr.bf16.mxu0 0
    %3754 = vmatpush1.bf16.msra.mxu0 0
    %3755 = vmatprep.subr.bf16.mxu0 0
    %3756 = vmatpush1.bf16.msra.mxu0 0
    %3757 = vmatprep.mubr.bf16.mxu0 0
    %3758 = vmatmul.mubr.bf16.gmra.mrb[0].mxu0 %v3723
    %v3759 = vpop.f32.mrb[0].mxu0
    %v3760 = vadd.f32 0.0, %v3759
    %v3761 = vpop.f32.mrb[0].mxu0
    %v3762 = vpop.f32.mrb[0].mxu0
    %v3763 = vpop.f32.mrb[0].mxu0
    %3764 = vdwg.mxu0
    %v3765 = vadd.f32 %v3684, %v3760
    %s3766 = scalar_lea.vmem %s7, 448
    %v3767 = vld [vmem:[%s3766] sm:$0xf]
    %v3768 = vld [vmem:[%s3766 + $0x4] sm:$0xf]
    %v3769 = vld [vmem:[%s3766 + $0x8] sm:$0xf]
    %v3770 = vld [vmem:[%s3766 + $0xc] sm:$0xf]
    %v3771 = vld [vmem:[%s3766 + $0x10] sm:$0xf]
    %v3772 = vld [vmem:[%s3766 + $0x14] sm:$0xf]
    %v3773 = vld [vmem:[%s3766 + $0x18] sm:$0xf]
    %v3774 = vld [vmem:[%s3766 + $0x1c] sm:$0xf]
    %v3775 = vrot.slane %v3289, 6
    %v3776 = vrot.slane %v3290, 5
    %v3777 = vsel %vm2650, %v3776, %v3775
    %v3778 = vpack.c.b16 %v3777, %v3777
    %v3787 = vunpack.c.l.b16 %v3767
    %v3788 = vunpack.c.l.b16 %v3768
    %v3789 = vunpack.c.l.b16 %v3769
    %v3790 = vunpack.c.l.b16 %v3770
    %v3791 = vunpack.c.l.b16 %v3771
    %v3792 = vunpack.c.l.b16 %v3772
    %v3793 = vunpack.c.l.b16 %v3773
    %v3794 = vunpack.c.l.b16 %v3774
    %v3795 = vpack.c.b16 %v3788, %v3787
    %v3796 = vpack.c.b16 %v3790, %v3789
    %v3797 = vpack.c.b16 %v3792, %v3791
    %v3798 = vpack.c.b16 %v3794, %v3793
    %v3804 = vsel %vm60, %v3778, 0
    %3806 = vmatprep.subr.bf16.mxu0 0
    %3807 = vmatpush1.bf16.msra.mxu0 %v3795
    %3808 = vmatprep.subr.bf16.mxu0 0
    %3809 = vmatpush1.bf16.msra.mxu0 %v3796
    %3810 = vmatprep.subr.bf16.mxu0 0
    %3811 = vmatpush1.bf16.msra.mxu0 %v3797
    %3812 = vmatprep.subr.bf16.mxu0 0
    %3813 = vmatpush1.bf16.msra.mxu0 %v3798
    %3814 = vmatprep.subr.bf16.mxu0 0
    %3815 = vmatpush1.bf16.msra.mxu0 0
    %3816 = vmatprep.subr.bf16.mxu0 0
    %3817 = vmatpush1.bf16.msra.mxu0 0
    %3818 = vmatprep.subr.bf16.mxu0 0
    %3819 = vmatpush1.bf16.msra.mxu0 0
    %3820 = vmatprep.subr.bf16.mxu0 0
    %3821 = vmatpush1.bf16.msra.mxu0 0
    %3822 = vmatprep.subr.bf16.mxu0 0
    %3823 = vmatpush1.bf16.msra.mxu0 0
    %3824 = vmatprep.subr.bf16.mxu0 0
    %3825 = vmatpush1.bf16.msra.mxu0 0
    %3826 = vmatprep.subr.bf16.mxu0 0
    %3827 = vmatpush1.bf16.msra.mxu0 0
    %3828 = vmatprep.subr.bf16.mxu0 0
    %3829 = vmatpush1.bf16.msra.mxu0 0
    %3830 = vmatprep.subr.bf16.mxu0 0
    %3831 = vmatpush1.bf16.msra.mxu0 0
    %3832 = vmatprep.subr.bf16.mxu0 0
    %3833 = vmatpush1.bf16.msra.mxu0 0
    %3834 = vmatprep.subr.bf16.mxu0 0
    %3835 = vmatpush1.bf16.msra.mxu0 0
    %3836 = vmatprep.subr.bf16.mxu0 0
    %3837 = vmatpush1.bf16.msra.mxu0 0
    %3838 = vmatprep.mubr.bf16.mxu0 0
    %3839 = vmatmul.mubr.bf16.gmra.mrb[0].mxu0 %v3804
    %v3840 = vpop.f32.mrb[0].mxu0
    %v3841 = vadd.f32 0.0, %v3840
    %v3842 = vpop.f32.mrb[0].mxu0
    %v3843 = vpop.f32.mrb[0].mxu0
    %v3844 = vpop.f32.mrb[0].mxu0
    %3845 = vdwg.mxu0
    %v3846 = vadd.f32 %v3765, %v3841
    %s3847 = scalar_lea.vmem %s7, 480
    %v3848 = vld [vmem:[%s3847] sm:$0xf]
    %v3849 = vld [vmem:[%s3847 + $0x4] sm:$0xf]
    %v3850 = vld [vmem:[%s3847 + $0x8] sm:$0xf]
    %v3851 = vld [vmem:[%s3847 + $0xc] sm:$0xf]
    %v3852 = vld [vmem:[%s3847 + $0x10] sm:$0xf]
    %v3853 = vld [vmem:[%s3847 + $0x14] sm:$0xf]
    %v3854 = vld [vmem:[%s3847 + $0x18] sm:$0xf]
    %v3855 = vld [vmem:[%s3847 + $0x1c] sm:$0xf]
    %v3856 = vrot.slane %v3289, 7
    %v3857 = vrot.slane %v3290, 6
    %v3858 = vsel %vm2650, %v3857, %v3856
    %v3859 = vpack.c.b16 %v3858, %v3858
    %v3868 = vunpack.c.l.b16 %v3848
    %v3869 = vunpack.c.l.b16 %v3849
    %v3870 = vunpack.c.l.b16 %v3850
    %v3871 = vunpack.c.l.b16 %v3851
    %v3872 = vunpack.c.l.b16 %v3852
    %v3873 = vunpack.c.l.b16 %v3853
    %v3874 = vunpack.c.l.b16 %v3854
    %v3875 = vunpack.c.l.b16 %v3855
    %v3876 = vpack.c.b16 %v3869, %v3868
    %v3877 = vpack.c.b16 %v3871, %v3870
    %v3878 = vpack.c.b16 %v3873, %v3872
    %v3879 = vpack.c.b16 %v3875, %v3874
    %v3885 = vsel %vm60, %v3859, 0
    %3887 = vmatprep.subr.bf16.mxu0 0
    %3888 = vmatpush1.bf16.msra.mxu0 %v3876
    %3889 = vmatprep.subr.bf16.mxu0 0
    %3890 = vmatpush1.bf16.msra.mxu0 %v3877
    %3891 = vmatprep.subr.bf16.mxu0 0
    %3892 = vmatpush1.bf16.msra.mxu0 %v3878
    %3893 = vmatprep.subr.bf16.mxu0 0
    %3894 = vmatpush1.bf16.msra.mxu0 %v3879
    %3895 = vmatprep.subr.bf16.mxu0 0
    %3896 = vmatpush1.bf16.msra.mxu0 0
    %3897 = vmatprep.subr.bf16.mxu0 0
    %3898 = vmatpush1.bf16.msra.mxu0 0
    %3899 = vmatprep.subr.bf16.mxu0 0
    %3900 = vmatpush1.bf16.msra.mxu0 0
    %3901 = vmatprep.subr.bf16.mxu0 0
    %3902 = vmatpush1.bf16.msra.mxu0 0
    %3903 = vmatprep.subr.bf16.mxu0 0
    %3904 = vmatpush1.bf16.msra.mxu0 0
    %3905 = vmatprep.subr.bf16.mxu0 0
    %3906 = vmatpush1.bf16.msra.mxu0 0
    %3907 = vmatprep.subr.bf16.mxu0 0
    %3908 = vmatpush1.bf16.msra.mxu0 0
    %3909 = vmatprep.subr.bf16.mxu0 0
    %3910 = vmatpush1.bf16.msra.mxu0 0
    %3911 = vmatprep.subr.bf16.mxu0 0
    %3912 = vmatpush1.bf16.msra.mxu0 0
    %3913 = vmatprep.subr.bf16.mxu0 0
    %3914 = vmatpush1.bf16.msra.mxu0 0
    %3915 = vmatprep.subr.bf16.mxu0 0
    %3916 = vmatpush1.bf16.msra.mxu0 0
    %3917 = vmatprep.subr.bf16.mxu0 0
    %3918 = vmatpush1.bf16.msra.mxu0 0
    %3919 = vmatprep.mubr.bf16.mxu0 0
    %3920 = vmatmul.mubr.bf16.gmra.mrb[0].mxu0 %v3885
    %v3921 = vpop.f32.mrb[0].mxu0
    %v3922 = vadd.f32 0.0, %v3921
    %v3923 = vpop.f32.mrb[0].mxu0
    %v3924 = vpop.f32.mrb[0].mxu0
    %v3925 = vpop.f32.mrb[0].mxu0
    %3926 = vdwg.mxu0
    %v3927 = vadd.f32 %v3846, %v3922
    %v3928 = vld [vmem:[%s8] sm:$0x1]
    %v3930 = vlaneseq
    %v3931 = vshrl.u32 %v3930, 7
    %v3932 = vsub.s32 0, %v3931
    %v3933 = vrot.slane %v3928, %v3932
    %v3935 = vadd.f32 %v3927, %v3933
    %v3936 = vmax.f32 %v3935, 0.0
    %v3937 = vpack.c.bf16 %v3936, %v3936
    %v3938 = vld [vmem:[%s9] sm:$0xf]
    %v3939 = vld [vmem:[%s9 + $0x4] sm:$0xf]
    %v3940 = vld [vmem:[%s9 + $0x8] sm:$0xf]
    %v3941 = vld [vmem:[%s9 + $0xc] sm:$0xf]
    %v3942 = vld [vmem:[%s9 + $0x10] sm:$0xf]
    %v3943 = vld [vmem:[%s9 + $0x14] sm:$0xf]
    %v3944 = vld [vmem:[%s9 + $0x18] sm:$0xf]
    %v3945 = vld [vmem:[%s9 + $0x1c] sm:$0xf]
    %v3946 = vld [vmem:[%s9 + $0x20] sm:$0xf]
    %v3947 = vld [vmem:[%s9 + $0x24] sm:$0xf]
    %v3948 = vld [vmem:[%s9 + $0x28] sm:$0xf]
    %v3949 = vld [vmem:[%s9 + $0x2c] sm:$0xf]
    %v3950 = vld [vmem:[%s9 + $0x30] sm:$0xf]
    %v3951 = vld [vmem:[%s9 + $0x34] sm:$0xf]
    %v3952 = vld [vmem:[%s9 + $0x38] sm:$0xf]
    %v3953 = vld [vmem:[%s9 + $0x3c] sm:$0xf]
    %v3954 = vld [vmem:[%s10] sm:$0x1]
    %v3956 = vlaneseq
    %v3957 = vshrl.u32 %v3956, 7
    %v3958 = vsub.s32 0, %v3957
    %v3959 = vrot.slane %v3954, %v3958
    %v3977 = vunpack.c.l.b16 %v3938
    %v3978 = vunpack.c.l.b16 %v3939
    %v3979 = vunpack.c.l.b16 %v3940
    %v3980 = vunpack.c.l.b16 %v3941
    %v3981 = vunpack.c.l.b16 %v3942
    %v3982 = vunpack.c.l.b16 %v3943
    %v3983 = vunpack.c.l.b16 %v3944
    %v3984 = vunpack.c.l.b16 %v3945
    %v3985 = vunpack.c.l.b16 %v3946
    %v3986 = vunpack.c.l.b16 %v3947
    %v3987 = vunpack.c.l.b16 %v3948
    %v3988 = vunpack.c.l.b16 %v3949
    %v3989 = vunpack.c.l.b16 %v3950
    %v3990 = vunpack.c.l.b16 %v3951
    %v3991 = vunpack.c.l.b16 %v3952
    %v3992 = vunpack.c.l.b16 %v3953
    %v3993 = vpack.c.b16 %v3978, %v3977
    %v3994 = vpack.c.b16 %v3980, %v3979
    %v3995 = vpack.c.b16 %v3982, %v3981
    %v3996 = vpack.c.b16 %v3984, %v3983
    %v3997 = vpack.c.b16 %v3986, %v3985
    %v3998 = vpack.c.b16 %v3988, %v3987
    %v3999 = vpack.c.b16 %v3990, %v3989
    %v4000 = vpack.c.b16 %v3992, %v3991
    %4009 = vmatprep.subr.bf16.mxu0 0
    %4010 = vmatpush1.bf16.msra.mxu0 %v3993
    %4011 = vmatprep.subr.bf16.mxu0 0
    %4012 = vmatpush1.bf16.msra.mxu0 %v3994
    %4013 = vmatprep.subr.bf16.mxu0 0
    %4014 = vmatpush1.bf16.msra.mxu0 %v3995
    %4015 = vmatprep.subr.bf16.mxu0 0
    %4016 = vmatpush1.bf16.msra.mxu0 %v3996
    %4017 = vmatprep.subr.bf16.mxu0 0
    %4018 = vmatpush1.bf16.msra.mxu0 %v3997
    %4019 = vmatprep.subr.bf16.mxu0 0
    %4020 = vmatpush1.bf16.msra.mxu0 %v3998
    %4021 = vmatprep.subr.bf16.mxu0 0
    %4022 = vmatpush1.bf16.msra.mxu0 %v3999
    %4023 = vmatprep.subr.bf16.mxu0 0
    %4024 = vmatpush1.bf16.msra.mxu0 %v4000
    %4025 = vmatprep.subr.bf16.mxu0 0
    %4026 = vmatpush1.bf16.msra.mxu0 0
    %4027 = vmatprep.subr.bf16.mxu0 0
    %4028 = vmatpush1.bf16.msra.mxu0 0
    %4029 = vmatprep.subr.bf16.mxu0 0
    %4030 = vmatpush1.bf16.msra.mxu0 0
    %4031 = vmatprep.subr.bf16.mxu0 0
    %4032 = vmatpush1.bf16.msra.mxu0 0
    %4033 = vmatprep.subr.bf16.mxu0 0
    %4034 = vmatpush1.bf16.msra.mxu0 0
    %4035 = vmatprep.subr.bf16.mxu0 0
    %4036 = vmatpush1.bf16.msra.mxu0 0
    %4037 = vmatprep.subr.bf16.mxu0 0
    %4038 = vmatpush1.bf16.msra.mxu0 0
    %4039 = vmatprep.subr.bf16.mxu0 0
    %4040 = vmatpush1.bf16.msra.mxu0 0
    %4041 = vmatprep.mubr.bf16.mxu0 0
    %4042 = vmatmul.mubr.bf16.gmra.mrb[0].mxu0 %v3937
    %v4043 = vpop.f32.mrb[0].mxu0
    %v4044 = vadd.f32 %v3959, %v4043
    %v4045 = vpop.f32.mrb[0].mxu0
    %v4046 = vpop.f32.mrb[0].mxu0
    %v4047 = vpop.f32.mrb[0].mxu0
    %4048 = vdwg.mxu0
    %vm4049 = vcmask 74752
    %4050 = vst.msk [vmem:[#allocation4] sm:$0x3] %vm4049, %v4044
    // Predicated region
    $region46: #{res_cell_forward.1} parent=1 // pred_check
      _
    $region47: #{res_cell_forward.1} parent=1 // pred_check_branch
      %4052 = sbr.rel (0) target = $region49
    $region48: #{res_cell_forward.1} parent=1 // pred_region
      _
    $region49: #{res_cell_forward.1} parent=1 // pred_fallthru
      _
    // Predicated region
    $region50: #{res_cell_forward.1} parent=1 // pred_check
      _
    $region51: #{res_cell_forward.1} parent=1 // pred_check_branch
      %4054 = sbr.rel (0) target = $region53
    $region52: #{res_cell_forward.1} parent=1 // pred_region
      %s4056 = ssub.s32 32, 32
      %4057 = vsyncadd [#allocation5], %s4056
      %s4059 = sshll.u32 [#allocation4], 4
      %s4060 = int_to_ptr.vmem [resolvable:$true] %s4059
      %4062 = dma.vmem_to_hbm [thread:$0]  %s4060, 32, %s12, [#allocation5]
    $region53: #{res_cell_forward.1} parent=1 // pred_fallthru
      _
    // Predicated region
    $region54: #{res_cell_forward.1} parent=1 // pred_check
      _
    $region55: #{res_cell_forward.1} parent=1 // pred_check_branch
      %4064 = sbr.rel (0) target = $region57
    $region56: #{res_cell_forward.1} parent=1 // pred_region
      _
    $region57: #{res_cell_forward.1} parent=1 // pred_fallthru
      _
    // Predicated region
    $region58: #{res_cell_forward.1} parent=1 // pred_check
      _
    $region59: #{res_cell_forward.1} parent=1 // pred_check_branch
      %4066 = sbr.rel (0) target = $region61
    $region60: #{res_cell_forward.1} parent=1 // pred_region
      %4067 = dma.done [#allocation5], 32
    $region61: #{res_cell_forward.1} parent=1 // pred_fallthru
      _
    %4068 = vsyncpa [#allocation5], 1

</llo_original>
